<compile_context>
chip_gen: v6e
topology: v6e:2x2x1
jax: 0.10.0
libtpu: 0.0.40
codegen_flags: <defaults>
</compile_context>

<pallas_src>
import jax
import jax.numpy as jnp
from jax import lax
from jax.experimental import pallas as pl
from jax.experimental.pallas import tpu as pltpu


# ----------------------------------------------------------------------------
# Fused kernel: wavefronted LSTM stack + folded gather + head.
# Gate order is [i, f, o, g] (a column permutation of PyTorch's [i, f, g, o]).
# ----------------------------------------------------------------------------
def _make_fused_rnn_kernel(num_layers, T, H):
    """Builds the fused kernel body (num_layers, T, H are static)."""

    def kernel(*refs):
        # Inputs.
        x_ref, img_ref, q_ref = refs[0], refs[1], refs[2]      # (T,Bb,E) bf16, (Bb,I) f32, (Bb,1) i32
        lw = refs[3:3 + 3 * num_layers]                        # per layer: w_ih_t, w_hh_t, bias
        wc_ref, bc_ref, wfc_ref, bfc_ref = refs[3 + 3 * num_layers:
                                                7 + 3 * num_layers]
        out_ref = refs[7 + 3 * num_layers]                     # (Bb, C) f32
        xg_scr = refs[8 + 3 * num_layers]                      # (T*Bb, 4H) f32 VMEM scratch

        Bb = img_ref.shape[0]
        I = img_ref.shape[1]
        E = x_ref.shape[2]

        q = q_ref[...]                                         # (Bb, 1) int32

        # --- Hoisted layer-0 input projection --------------------------------
        # ONE (T*Bb, E) x (E, 4H) MXU matmul (bias folded in).  The result is
        # parked in VMEM scratch, not carried live through the recurrence.
        # Reshape only merges leading dims; for Bb a multiple of the sublane
        # tile the (sublane, lane) tiling is unchanged (no relayout).
        x_flat = x_ref[...].reshape(T * Bb, E)                 # bf16
        xg_scr[...] = (jnp.dot(x_flat, lw[0][...],
                               preferred_element_type=jnp.float32)
                       + lw[2][...])

        # --- Wavefronted recurrence ------------------------------------------
        # h/c live in vregs (small: (Bb, H) f32 each); loop fully unrolled.
        h = [jnp.zeros((Bb, H), jnp.float32) for _ in range(num_layers)]
        c = [jnp.zeros((Bb, H), jnp.float32) for _ in range(num_layers)]
        # Hidden state selected at timestep t == q_length[b]
        # (torch.gather(out, 1, q_length...) semantics: index, not length-1).
        sel = jnp.zeros((Bb, H), jnp.float32)

        # TODO(synk): if the recurrence still dominates on v5e, stage W_hh in
        # the MXU across steps with pltpu.matmul_push_rhs/acc_lhs/pop.
        for d in range(T + num_layers - 1):
            # Decreasing layer order: layer l must read layer l-1's output
            # from the PREVIOUS diagonal (h_{l-1, t}) before layer l-1
            # overwrites it with h_{l-1, t+1} at this diagonal.
            for l in range(num_layers - 1, -1, -1):
                t = d - l
                if not (0 <= t < T):
                    continue
                rec = jnp.dot(h[l].astype(jnp.bfloat16), lw[3 * l + 1][...],
                              preferred_element_type=jnp.float32)   # (Bb, 4H)
                if l == 0:
                    # Per-step slice load from scratch (bias already folded).
                    gates = xg_scr[pl.ds(t * Bb, Bb), :] + rec
                else:
                    # Per-step input projection of the previous layer's h,
                    # independent of this layer's serial chain.
                    gates = (jnp.dot(h[l - 1].astype(jnp.bfloat16),
                                     lw[3 * l][...],
                                     preferred_element_type=jnp.float32)
                             + rec + lw[3 * l + 2][...])
                # Gate order [i, f, o, g]: one contiguous sigmoid, one tanh.
                # H == 128 -> every slice is on an exact 128-lane boundary.
                sig = jax.nn.sigmoid(gates[:, 0:3 * H])
                i_g = sig[:, 0:H]
                f_g = sig[:, H:2 * H]
                o_g = sig[:, 2 * H:3 * H]
                g_g = jnp.tanh(gates[:, 3 * H:4 * H])
                c[l] = f_g * c[l] + i_g * g_g
                h[l] = o_g * jnp.tanh(c[l])
                if l == num_layers - 1:
                    # Folded gather: keep h at timestep q_length[b].
                    sel = jnp.where(q == t, h[l], sel)

        # --- Head: cat(image, sel) @ Wc + bc -> ReLU -> @ Wfc + bfc ----------
        hid = (jnp.dot(img_ref[...], wc_ref[0:I, :],
                       preferred_element_type=jnp.float32)
               + jnp.dot(sel, wc_ref[I:, :],
                         preferred_element_type=jnp.float32)
               + bc_ref[...])
        hid = jnp.maximum(hid, 0.0)                            # ReLU
        # NOTE: (Bb, C=16) output is lane-sparse (masked stores); fine at
        # C=16, keep the head output lane-dense if num_classes grows.
        out_ref[...] = (jnp.dot(hid, wfc_ref[...],
                                preferred_element_type=jnp.float32)
                        + bfc_ref[...])

    return kernel


def rnn_fused(emb_tbe, image, q_b1, lstm_layers, wc_t, bc, wfc_t, bfc,
              *, batch_blocks=1):
    """Single pallas_call over a batch-block grid (batch_blocks=1 on single-TC
    v5e/v6e; 2 on dual-TC v7x)."""
    T, B, E = emb_tbe.shape
    H = lstm_layers[0]["w_hh_t"].shape[0]
    I = image.shape[1]
    C = wfc_t.shape[1]
    L = len(lstm_layers)
    assert B % batch_blocks == 0
    Bb = B // batch_blocks
    assert Bb == B or Bb % 8 == 0, "batch block must stay sublane-aligned"

    kernel = _make_fused_rnn_kernel(L, T, H)

    def xmap(i):      return (0, i, 0)   # batch-blocked (T, Bb, E)
    def bmap(i):      return (i, 0)      # batch-blocked (Bb, *)
    def replicate(i): return (0, 0)      # weights: same block every step

    in_specs = [
        pl.BlockSpec((T, Bb, E), xmap),
        pl.BlockSpec((Bb, I), bmap),
        pl.BlockSpec((Bb, 1), bmap),
    ]
    operands = [emb_tbe, image, q_b1]
    for lp in lstm_layers:
        for name in ("w_ih_t", "w_hh_t", "bias"):
            w = lp[name]
            in_specs.append(pl.BlockSpec(w.shape, replicate))
            operands.append(w)
    for w in (wc_t, bc, wfc_t, bfc):
        in_specs.append(pl.BlockSpec(w.shape, replicate))
        operands.append(w)

    # VMEM budget per grid step: xg scratch = T*Bb*4H*4 bytes (+ weights),
    # ~0.3 MiB at demo sizes -- far under v7x's 64 MiB / 32 MiB scoped limit.
    return pl.pallas_call(
        kernel,
        out_shape=jax.ShapeDtypeStruct((B, C), jnp.float32),
        grid=(batch_blocks,),
        in_specs=in_specs,
        out_specs=pl.BlockSpec((Bb, C), bmap),
        scratch_shapes=[pltpu.VMEM((T * Bb, 4 * H), jnp.float32)],
        compiler_params=pltpu.CompilerParams(
            # Batch blocks are independent: "parallel" lets v7x use both
            # TensorCores; on v5e/v6e keep batch_blocks=1 (trivial grid).
            dimension_semantics=("parallel",),
        ),
    )(*operands)


# ----------------------------------------------------------------------------
# Parameter init (PyTorch-style ranges) + forward wrapper.
# ----------------------------------------------------------------------------
def init_params(key, vocab_size, embed_size, img_size, hidden_size,
                num_layers, num_classes):
    keys = iter(jax.random.split(key, 3 + 4 * num_layers))

    params = {}
    params["embed"] = jax.random.normal(next(keys), (vocab_size, embed_size),
                                        jnp.float32)

    bound_h = 1.0 / float(hidden_size) ** 0.5
    layers = []
    for l in range(num_layers):
        in_dim = embed_size if l == 0 else hidden_size
        # NOTE: gate columns are stored in [i, f, o, g] order (permutation of
        # PyTorch's [i, f, g, o]); permute accordingly when importing torch
        # weights.
        w_ih_t = jax.random.uniform(next(keys), (in_dim, 4 * hidden_size),
                                    jnp.float32, -bound_h, bound_h)
        w_hh_t = jax.random.uniform(next(keys), (hidden_size, 4 * hidden_size),
                                    jnp.float32, -bound_h, bound_h)
        b_ih = jax.random.uniform(next(keys), (4 * hidden_size,),
                                  jnp.float32, -bound_h, bound_h)
        b_hh = jax.random.uniform(next(keys), (4 * hidden_size,),
                                  jnp.float32, -bound_h, bound_h)
        layers.append({
            # bf16 weight storage for the MXU dots (f32 accumulation
            # in-kernel).  Intentional precision divergence vs torch's f32;
            # keep f32 weights if closer torch parity is required.
            "w_ih_t": w_ih_t.astype(jnp.bfloat16),
            "w_hh_t": w_hh_t.astype(jnp.bfloat16),
            "bias": (b_ih + b_hh).reshape(1, -1),                  # f32
        })
    params["lstm"] = layers

    bound_c = 1.0 / float(hidden_size + img_size) ** 0.5
    params["wc_t"] = jax.random.uniform(
        next(keys), (img_size + hidden_size, hidden_size), jnp.float32,
        -bound_c, bound_c)
    params["bc"] = jnp.zeros((1, hidden_size), jnp.float32)

    bound_f = 1.0 / float(hidden_size) ** 0.5
    params["wfc_t"] = jax.random.uniform(
        next(keys), (hidden_size, num_classes), jnp.float32, -bound_f, bound_f)
    params["bfc"] = jnp.zeros((1, num_classes), jnp.float32)
    return params


def rnn_forward(params, x_tokens, image, q_length, *, batch_blocks=1):
    # Embedding lookup is glue: gather directly time-major (T, B, E) and cast
    # to bf16 in XLA so the kernel does no full-tensor cast/relayout.
    # TODO(synk): the token gather stays in XLA; a DMA-gather kernel is not
    # worth it at these sizes.
    emb = jnp.take(params["embed"], x_tokens.T, axis=0).astype(jnp.bfloat16)
    # NOTE: if q_length falls outside [0, T), sel silently stays zeros
    # (torch.gather would raise instead).
    q_b1 = q_length.reshape(-1, 1).astype(jnp.int32)               # (B, 1)
    return rnn_fused(emb, image, q_b1, params["lstm"], params["wc_t"],
                     params["bc"], params["wfc_t"], params["bfc"],
                     batch_blocks=batch_blocks)


# ----------------------------------------------------------------------------
# Pure-JAX reference (same math as the PyTorch module; mirrors the kernel's
# bf16-operand / f32-accumulate precision policy and gate layout for a tight
# comparison).
# ----------------------------------------------------------------------------
def rnn_reference(params, x_tokens, image, q_length):
    emb = jnp.take(params["embed"], x_tokens.T, axis=0).astype(jnp.bfloat16)
    T, B, _ = emb.shape
    H = params["lstm"][0]["w_hh_t"].shape[0]

    x_seq = emb                                                    # (T, B, in)
    seq = None
    for layer in params["lstm"]:
        w_ih, w_hh, bias = layer["w_ih_t"], layer["w_hh_t"], layer["bias"]

        def step(carry, x_t, w_ih=w_ih, w_hh=w_hh, bias=bias):
            h, c = carry
            g = (jnp.dot(x_t, w_ih, preferred_element_type=jnp.float32)
                 + jnp.dot(h.astype(jnp.bfloat16), w_hh,
                           preferred_element_type=jnp.float32)
                 + bias)
            sig = jax.nn.sigmoid(g[:, 0:3 * H])
            i = sig[:, 0:H]
            f = sig[:, H:2 * H]
            o = sig[:, 2 * H:3 * H]
            gg = jnp.tanh(g[:, 3 * H:4 * H])
            c = f * c + i * gg
            h = o * jnp.tanh(c)
            return (h, c), h

        z = jnp.zeros((B, H), jnp.float32)
        _, seq = lax.scan(step, (z, z), x_seq)                     # (T, B, H)
        x_seq = seq.astype(jnp.bfloat16)

    sel = seq[q_length, jnp.arange(B)]                             # (B, H)
    feat = jnp.concatenate([image, sel], axis=1)
    hid = jnp.maximum(feat @ params["wc_t"] + params["bc"], 0.0)
    return hid @ params["wfc_t"] + params["bfc"]


if __name__ == "__main__":
    # Small shapes consistent with the module (hidden_size = 128 per spec).
    vocab_size, embed_size, img_size = 50, 32, 32
    hidden_size_, num_layers, num_classes = 128, 2, 16
    B, T = 16, 8

    key = jax.random.PRNGKey(0)
    kp, kx, kimg, kq = jax.random.split(key, 4)

    params = init_params(kp, vocab_size, embed_size, img_size,
                         hidden_size_, num_layers, num_classes)
    x_tokens = jax.random.randint(kx, (B, T), 0, vocab_size, jnp.int32)
    image = jax.random.normal(kimg, (B, img_size), jnp.float32)
    q_length = jax.random.randint(kq, (B,), 0, T, jnp.int32)

    # batch_blocks=1: v5e/v6e have a single TensorCore, so splitting the batch
    # only shrinks the matmul M and adds per-step grid overhead.  Pass
    # batch_blocks=2 on v7x so both TensorCores get an independent half.
    out = rnn_forward(params, x_tokens, image, q_length, batch_blocks=1)
    out = jax.block_until_ready(out)
    assert out.shape == (B, num_classes), out.shape

    ref = jax.block_until_ready(
        rnn_reference(params, x_tokens, image, q_length))
    err = float(jnp.max(jnp.abs(out - ref)))
    assert jnp.allclose(out, ref, atol=2e-3, rtol=2e-3), err

    print("KERNEL_OK")
</pallas_src>

<mosaic_0001>
module attributes {stable_mosaic.version = 11 : i64} {
  func.func @kernel(%arg0: i32, %arg1: memref<8x16x32xbf16, #tpu.memory_space<vmem>>, %arg2: memref<16x32xf32, #tpu.memory_space<vmem>>, %arg3: memref<16x1xi32, #tpu.memory_space<vmem>>, %arg4: memref<32x512xbf16, #tpu.memory_space<vmem>>, %arg5: memref<128x512xbf16, #tpu.memory_space<vmem>>, %arg6: memref<1x512xf32, #tpu.memory_space<vmem>>, %arg7: memref<128x512xbf16, #tpu.memory_space<vmem>>, %arg8: memref<128x512xbf16, #tpu.memory_space<vmem>>, %arg9: memref<1x512xf32, #tpu.memory_space<vmem>>, %arg10: memref<160x128xf32, #tpu.memory_space<vmem>>, %arg11: memref<1x128xf32, #tpu.memory_space<vmem>>, %arg12: memref<128x16xf32, #tpu.memory_space<vmem>>, %arg13: memref<1x16xf32, #tpu.memory_space<vmem>>, %arg14: memref<16x16xf32, #tpu.memory_space<vmem>>, %arg15: memref<128x512xf32, #tpu.memory_space<vmem>>) attributes {dimension_semantics = [#tpu.dimension_semantics<parallel>], iteration_bounds = array<i64: 1>, scalar_prefetch = 0 : i64, scratch_operands = 1 : i64, tpu.core_type = #tpu.core_type<tc>, window_params = [{transform_indices = @transform_0, window_bounds = array<i64: 8, 16, 32>}, {transform_indices = @transform_1, window_bounds = array<i64: 16, 32>}, {transform_indices = @transform_2, window_bounds = array<i64: 16, 1>}, {pipeline_mode = #tpu.pipeline_mode<synchronous>, transform_indices = @transform_3, window_bounds = array<i64: 32, 512>}, {pipeline_mode = #tpu.pipeline_mode<synchronous>, transform_indices = @transform_4, window_bounds = array<i64: 128, 512>}, {pipeline_mode = #tpu.pipeline_mode<synchronous>, transform_indices = @transform_5, window_bounds = array<i64: 1, 512>}, {pipeline_mode = #tpu.pipeline_mode<synchronous>, transform_indices = @transform_6, window_bounds = array<i64: 128, 512>}, {pipeline_mode = #tpu.pipeline_mode<synchronous>, transform_indices = @transform_7, window_bounds = array<i64: 128, 512>}, {pipeline_mode = #tpu.pipeline_mode<synchronous>, transform_indices = @transform_8, window_bounds = array<i64: 1, 512>}, {pipeline_mode = #tpu.pipeline_mode<synchronous>, transform_indices = @transform_9, window_bounds = array<i64: 160, 128>}, {pipeline_mode = #tpu.pipeline_mode<synchronous>, transform_indices = @transform_10, window_bounds = array<i64: 1, 128>}, {pipeline_mode = #tpu.pipeline_mode<synchronous>, transform_indices = @transform_11, window_bounds = array<i64: 128, 16>}, {pipeline_mode = #tpu.pipeline_mode<synchronous>, transform_indices = @transform_12, window_bounds = array<i64: 1, 16>}, {transform_indices = @transform_13, window_bounds = array<i64: 16, 16>}]} {
    %c0 = arith.constant 0 : index
    %c0_0 = arith.constant 0 : index
    %0 = vector.load %arg3[%c0, %c0_0] : memref<16x1xi32, #tpu.memory_space<vmem>>, vector<16x1xi32>
    %c0_1 = arith.constant 0 : index
    %c0_2 = arith.constant 0 : index
    %c0_3 = arith.constant 0 : index
    %1 = vector.load %arg1[%c0_1, %c0_2, %c0_3] : memref<8x16x32xbf16, #tpu.memory_space<vmem>>, vector<8x16x32xbf16>
    %2 = vector.shape_cast %1 : vector<8x16x32xbf16> to vector<128x32xbf16>
    %c0_4 = arith.constant 0 : index
    %c0_5 = arith.constant 0 : index
    %3 = vector.load %arg4[%c0_4, %c0_5] : memref<32x512xbf16, #tpu.memory_space<vmem>>, vector<32x512xbf16>
    %cst = arith.constant dense<0.000000e+00> : vector<128x512xf32>
    %4 = tpu.matmul %2, %3, %cst {dimension_numbers = #tpu.dot_dimension_numbers<[1], [0], [0], [1], [0, 0, 1, 1], [], []>} : vector<128x32xbf16>, vector<32x512xbf16>, vector<128x512xf32> -> vector<128x512xf32>
    %c0_6 = arith.constant 0 : index
    %c0_7 = arith.constant 0 : index
    %5 = vector.load %arg6[%c0_6, %c0_7] : memref<1x512xf32, #tpu.memory_space<vmem>>, vector<1x512xf32>
    %6 = vector.broadcast %5 : vector<1x512xf32> to vector<128x512xf32>
    %7 = arith.addf %4, %6 : vector<128x512xf32>
    %c0_8 = arith.constant 0 : index
    %c0_9 = arith.constant 0 : index
    %8 = vector.load %arg15[%c0_8, %c0_9] : memref<128x512xf32, #tpu.memory_space<vmem>>, vector<128x512xf32>
    tpu.vector_store %arg15[%c0_8, %c0_9], %7 {strides = array<i32>} : memref<128x512xf32, #tpu.memory_space<vmem>>, vector<128x512xf32>,
    %cst_10 = arith.constant 0.000000e+00 : f32
    %9 = vector.broadcast %cst_10 : f32 to vector<16x128xf32>
    %cst_11 = arith.constant 0.000000e+00 : f32
    %10 = vector.broadcast %cst_11 : f32 to vector<16x128xf32>
    %cst_12 = arith.constant 0.000000e+00 : f32
    %11 = vector.broadcast %cst_12 : f32 to vector<16x128xf32>
    %cst_13 = arith.constant 0.000000e+00 : f32
    %12 = vector.broadcast %cst_13 : f32 to vector<16x128xf32>
    %cst_14 = arith.constant 0.000000e+00 : f32
    %13 = vector.broadcast %cst_14 : f32 to vector<16x128xf32>
    %14 = arith.truncf %9 : vector<16x128xf32> to vector<16x128xbf16>
    %c0_15 = arith.constant 0 : index
    %c0_16 = arith.constant 0 : index
    %15 = vector.load %arg5[%c0_15, %c0_16] : memref<128x512xbf16, #tpu.memory_space<vmem>>, vector<128x512xbf16>
    %cst_17 = arith.constant dense<0.000000e+00> : vector<16x512xf32>
    %16 = tpu.matmul %14, %15, %cst_17 {dimension_numbers = #tpu.dot_dimension_numbers<[1], [0], [0], [1], [0, 0, 1, 1], [], []>} : vector<16x128xbf16>, vector<128x512xbf16>, vector<16x512xf32> -> vector<16x512xf32>
    %c0_18 = arith.constant 0 : index
    %c0_19 = arith.constant 0 : index
    %17 = vector.load %arg15[%c0_18, %c0_19] : memref<128x512xf32, #tpu.memory_space<vmem>>, vector<16x512xf32>
    %18 = arith.addf %17, %16 : vector<16x512xf32>
    %19 = vector.extract_strided_slice %18 {offsets = [0, 0], sizes = [16, 384], strides = [1, 1]} : vector<16x512xf32> to vector<16x384xf32>
    %20 = arith.negf %19 : vector<16x384xf32>
    %21 = math.exp %20 : vector<16x384xf32>
    %cst_20 = arith.constant 1.000000e+00 : f32
    %22 = vector.broadcast %cst_20 : f32 to vector<16x384xf32>
    %23 = arith.addf %22, %21 : vector<16x384xf32>
    %24 = arith.divf %22, %23 : vector<16x384xf32>
    %25 = vector.extract_strided_slice %24 {offsets = [0, 0], sizes = [16, 128], strides = [1, 1]} : vector<16x384xf32> to vector<16x128xf32>
    %26 = vector.extract_strided_slice %24 {offsets = [0, 128], sizes = [16, 128], strides = [1, 1]} : vector<16x384xf32> to vector<16x128xf32>
    %27 = vector.extract_strided_slice %24 {offsets = [0, 256], sizes = [16, 128], strides = [1, 1]} : vector<16x384xf32> to vector<16x128xf32>
    %28 = vector.extract_strided_slice %18 {offsets = [0, 384], sizes = [16, 128], strides = [1, 1]} : vector<16x512xf32> to vector<16x128xf32>
    %29 = math.tanh %28 : vector<16x128xf32>
    %30 = arith.mulf %26, %11 : vector<16x128xf32>
    %31 = arith.mulf %25, %29 : vector<16x128xf32>
    %32 = arith.addf %30, %31 : vector<16x128xf32>
    %33 = math.tanh %32 : vector<16x128xf32>
    %34 = arith.mulf %27, %33 : vector<16x128xf32>
    %35 = arith.truncf %10 : vector<16x128xf32> to vector<16x128xbf16>
    %c0_21 = arith.constant 0 : index
    %c0_22 = arith.constant 0 : index
    %36 = vector.load %arg8[%c0_21, %c0_22] : memref<128x512xbf16, #tpu.memory_space<vmem>>, vector<128x512xbf16>
    %cst_23 = arith.constant dense<0.000000e+00> : vector<16x512xf32>
    %37 = tpu.matmul %35, %36, %cst_23 {dimension_numbers = #tpu.dot_dimension_numbers<[1], [0], [0], [1], [0, 0, 1, 1], [], []>} : vector<16x128xbf16>, vector<128x512xbf16>, vector<16x512xf32> -> vector<16x512xf32>
    %38 = arith.truncf %34 : vector<16x128xf32> to vector<16x128xbf16>
    %c0_24 = arith.constant 0 : index
    %c0_25 = arith.constant 0 : index
    %39 = vector.load %arg7[%c0_24, %c0_25] : memref<128x512xbf16, #tpu.memory_space<vmem>>, vector<128x512xbf16>
    %cst_26 = arith.constant dense<0.000000e+00> : vector<16x512xf32>
    %40 = tpu.matmul %38, %39, %cst_26 {dimension_numbers = #tpu.dot_dimension_numbers<[1], [0], [0], [1], [0, 0, 1, 1], [], []>} : vector<16x128xbf16>, vector<128x512xbf16>, vector<16x512xf32> -> vector<16x512xf32>
    %41 = arith.addf %40, %37 : vector<16x512xf32>
    %c0_27 = arith.constant 0 : index
    %c0_28 = arith.constant 0 : index
    %42 = vector.load %arg9[%c0_27, %c0_28] : memref<1x512xf32, #tpu.memory_space<vmem>>, vector<1x512xf32>
    %43 = vector.broadcast %42 : vector<1x512xf32> to vector<16x512xf32>
    %44 = arith.addf %41, %43 : vector<16x512xf32>
    %45 = vector.extract_strided_slice %44 {offsets = [0, 0], sizes = [16, 384], strides = [1, 1]} : vector<16x512xf32> to vector<16x384xf32>
    %46 = arith.negf %45 : vector<16x384xf32>
    %47 = math.exp %46 : vector<16x384xf32>
    %cst_29 = arith.constant 1.000000e+00 : f32
    %48 = vector.broadcast %cst_29 : f32 to vector<16x384xf32>
    %49 = arith.addf %48, %47 : vector<16x384xf32>
    %50 = arith.divf %48, %49 : vector<16x384xf32>
    %51 = vector.extract_strided_slice %50 {offsets = [0, 0], sizes = [16, 128], strides = [1, 1]} : vector<16x384xf32> to vector<16x128xf32>
    %52 = vector.extract_strided_slice %50 {offsets = [0, 128], sizes = [16, 128], strides = [1, 1]} : vector<16x384xf32> to vector<16x128xf32>
    %53 = vector.extract_strided_slice %50 {offsets = [0, 256], sizes = [16, 128], strides = [1, 1]} : vector<16x384xf32> to vector<16x128xf32>
    %54 = vector.extract_strided_slice %44 {offsets = [0, 384], sizes = [16, 128], strides = [1, 1]} : vector<16x512xf32> to vector<16x128xf32>
    %55 = math.tanh %54 : vector<16x128xf32>
    %56 = arith.mulf %52, %12 : vector<16x128xf32>
    %57 = arith.mulf %51, %55 : vector<16x128xf32>
    %58 = arith.addf %56, %57 : vector<16x128xf32>
    %59 = math.tanh %58 : vector<16x128xf32>
    %60 = arith.mulf %53, %59 : vector<16x128xf32>
    %c0_i32 = arith.constant 0 : i32
    %61 = vector.broadcast %c0_i32 : i32 to vector<16x1xi32>
    %62 = arith.cmpi eq, %0, %61 : vector<16x1xi32>
    %63 = vector.shape_cast %62 : vector<16x1xi1> to vector<16x1xi1>
    %64 = vector.broadcast %63 : vector<16x1xi1> to vector<16x128xi1>
    %65 = arith.select %64, %60, %13 : vector<16x128xi1>, vector<16x128xf32>
    %66 = arith.truncf %34 : vector<16x128xf32> to vector<16x128xbf16>
    %c0_30 = arith.constant 0 : index
    %c0_31 = arith.constant 0 : index
    %67 = vector.load %arg5[%c0_30, %c0_31] : memref<128x512xbf16, #tpu.memory_space<vmem>>, vector<128x512xbf16>
    %cst_32 = arith.constant dense<0.000000e+00> : vector<16x512xf32>
    %68 = tpu.matmul %66, %67, %cst_32 {dimension_numbers = #tpu.dot_dimension_numbers<[1], [0], [0], [1], [0, 0, 1, 1], [], []>} : vector<16x128xbf16>, vector<128x512xbf16>, vector<16x512xf32> -> vector<16x512xf32>
    %c16 = arith.constant 16 : index
    %c0_33 = arith.constant 0 : index
    %69 = vector.load %arg15[%c16, %c0_33] : memref<128x512xf32, #tpu.memory_space<vmem>>, vector<16x512xf32>
    %70 = arith.addf %69, %68 : vector<16x512xf32>
    %71 = vector.extract_strided_slice %70 {offsets = [0, 0], sizes = [16, 384], strides = [1, 1]} : vector<16x512xf32> to vector<16x384xf32>
    %72 = arith.negf %71 : vector<16x384xf32>
    %73 = math.exp %72 : vector<16x384xf32>
    %cst_34 = arith.constant 1.000000e+00 : f32
    %74 = vector.broadcast %cst_34 : f32 to vector<16x384xf32>
    %75 = arith.addf %74, %73 : vector<16x384xf32>
    %76 = arith.divf %74, %75 : vector<16x384xf32>
    %77 = vector.extract_strided_slice %76 {offsets = [0, 0], sizes = [16, 128], strides = [1, 1]} : vector<16x384xf32> to vector<16x128xf32>
    %78 = vector.extract_strided_slice %76 {offsets = [0, 128], sizes = [16, 128], strides = [1, 1]} : vector<16x384xf32> to vector<16x128xf32>
    %79 = vector.extract_strided_slice %76 {offsets = [0, 256], sizes = [16, 128], strides = [1, 1]} : vector<16x384xf32> to vector<16x128xf32>
    %80 = vector.extract_strided_slice %70 {offsets = [0, 384], sizes = [16, 128], strides = [1, 1]} : vector<16x512xf32> to vector<16x128xf32>
    %81 = math.tanh %80 : vector<16x128xf32>
    %82 = arith.mulf %78, %32 : vector<16x128xf32>
    %83 = arith.mulf %77, %81 : vector<16x128xf32>
    %84 = arith.addf %82, %83 : vector<16x128xf32>
    %85 = math.tanh %84 : vector<16x128xf32>
    %86 = arith.mulf %79, %85 : vector<16x128xf32>
    %87 = arith.truncf %60 : vector<16x128xf32> to vector<16x128xbf16>
    %c0_35 = arith.constant 0 : index
    %c0_36 = arith.constant 0 : index
    %88 = vector.load %arg8[%c0_35, %c0_36] : memref<128x512xbf16, #tpu.memory_space<vmem>>, vector<128x512xbf16>
    %cst_37 = arith.constant dense<0.000000e+00> : vector<16x512xf32>
    %89 = tpu.matmul %87, %88, %cst_37 {dimension_numbers = #tpu.dot_dimension_numbers<[1], [0], [0], [1], [0, 0, 1, 1], [], []>} : vector<16x128xbf16>, vector<128x512xbf16>, vector<16x512xf32> -> vector<16x512xf32>
    %90 = arith.truncf %86 : vector<16x128xf32> to vector<16x128xbf16>
    %c0_38 = arith.constant 0 : index
    %c0_39 = arith.constant 0 : index
    %91 = vector.load %arg7[%c0_38, %c0_39] : memref<128x512xbf16, #tpu.memory_space<vmem>>, vector<128x512xbf16>
    %cst_40 = arith.constant dense<0.000000e+00> : vector<16x512xf32>
    %92 = tpu.matmul %90, %91, %cst_40 {dimension_numbers = #tpu.dot_dimension_numbers<[1], [0], [0], [1], [0, 0, 1, 1], [], []>} : vector<16x128xbf16>, vector<128x512xbf16>, vector<16x512xf32> -> vector<16x512xf32>
    %93 = arith.addf %92, %89 : vector<16x512xf32>
    %c0_41 = arith.constant 0 : index
    %c0_42 = arith.constant 0 : index
    %94 = vector.load %arg9[%c0_41, %c0_42] : memref<1x512xf32, #tpu.memory_space<vmem>>, vector<1x512xf32>
    %95 = vector.broadcast %94 : vector<1x512xf32> to vector<16x512xf32>
    %96 = arith.addf %93, %95 : vector<16x512xf32>
    %97 = vector.extract_strided_slice %96 {offsets = [0, 0], sizes = [16, 384], strides = [1, 1]} : vector<16x512xf32> to vector<16x384xf32>
    %98 = arith.negf %97 : vector<16x384xf32>
    %99 = math.exp %98 : vector<16x384xf32>
    %cst_43 = arith.constant 1.000000e+00 : f32
    %100 = vector.broadcast %cst_43 : f32 to vector<16x384xf32>
    %101 = arith.addf %100, %99 : vector<16x384xf32>
    %102 = arith.divf %100, %101 : vector<16x384xf32>
    %103 = vector.extract_strided_slice %102 {offsets = [0, 0], sizes = [16, 128], strides = [1, 1]} : vector<16x384xf32> to vector<16x128xf32>
    %104 = vector.extract_strided_slice %102 {offsets = [0, 128], sizes = [16, 128], strides = [1, 1]} : vector<16x384xf32> to vector<16x128xf32>
    %105 = vector.extract_strided_slice %102 {offsets = [0, 256], sizes = [16, 128], strides = [1, 1]} : vector<16x384xf32> to vector<16x128xf32>
    %106 = vector.extract_strided_slice %96 {offsets = [0, 384], sizes = [16, 128], strides = [1, 1]} : vector<16x512xf32> to vector<16x128xf32>
    %107 = math.tanh %106 : vector<16x128xf32>
    %108 = arith.mulf %104, %58 : vector<16x128xf32>
    %109 = arith.mulf %103, %107 : vector<16x128xf32>
    %110 = arith.addf %108, %109 : vector<16x128xf32>
    %111 = math.tanh %110 : vector<16x128xf32>
    %112 = arith.mulf %105, %111 : vector<16x128xf32>
    %c1_i32 = arith.constant 1 : i32
    %113 = vector.broadcast %c1_i32 : i32 to vector<16x1xi32>
    %114 = arith.cmpi eq, %0, %113 : vector<16x1xi32>
    %115 = vector.shape_cast %114 : vector<16x1xi1> to vector<16x1xi1>
    %116 = vector.broadcast %115 : vector<16x1xi1> to vector<16x128xi1>
    %117 = arith.select %116, %112, %65 : vector<16x128xi1>, vector<16x128xf32>
    %118 = arith.truncf %86 : vector<16x128xf32> to vector<16x128xbf16>
    %c0_44 = arith.constant 0 : index
    %c0_45 = arith.constant 0 : index
    %119 = vector.load %arg5[%c0_44, %c0_45] : memref<128x512xbf16, #tpu.memory_space<vmem>>, vector<128x512xbf16>
    %cst_46 = arith.constant dense<0.000000e+00> : vector<16x512xf32>
    %120 = tpu.matmul %118, %119, %cst_46 {dimension_numbers = #tpu.dot_dimension_numbers<[1], [0], [0], [1], [0, 0, 1, 1], [], []>} : vector<16x128xbf16>, vector<128x512xbf16>, vector<16x512xf32> -> vector<16x512xf32>
    %c32 = arith.constant 32 : index
    %c0_47 = arith.constant 0 : index
    %121 = vector.load %arg15[%c32, %c0_47] : memref<128x512xf32, #tpu.memory_space<vmem>>, vector<16x512xf32>
    %122 = arith.addf %121, %120 : vector<16x512xf32>
    %123 = vector.extract_strided_slice %122 {offsets = [0, 0], sizes = [16, 384], strides = [1, 1]} : vector<16x512xf32> to vector<16x384xf32>
    %124 = arith.negf %123 : vector<16x384xf32>
    %125 = math.exp %124 : vector<16x384xf32>
    %cst_48 = arith.constant 1.000000e+00 : f32
    %126 = vector.broadcast %cst_48 : f32 to vector<16x384xf32>
    %127 = arith.addf %126, %125 : vector<16x384xf32>
    %128 = arith.divf %126, %127 : vector<16x384xf32>
    %129 = vector.extract_strided_slice %128 {offsets = [0, 0], sizes = [16, 128], strides = [1, 1]} : vector<16x384xf32> to vector<16x128xf32>
    %130 = vector.extract_strided_slice %128 {offsets = [0, 128], sizes = [16, 128], strides = [1, 1]} : vector<16x384xf32> to vector<16x128xf32>
    %131 = vector.extract_strided_slice %128 {offsets = [0, 256], sizes = [16, 128], strides = [1, 1]} : vector<16x384xf32> to vector<16x128xf32>
    %132 = vector.extract_strided_slice %122 {offsets = [0, 384], sizes = [16, 128], strides = [1, 1]} : vector<16x512xf32> to vector<16x128xf32>
    %133 = math.tanh %132 : vector<16x128xf32>
    %134 = arith.mulf %130, %84 : vector<16x128xf32>
    %135 = arith.mulf %129, %133 : vector<16x128xf32>
    %136 = arith.addf %134, %135 : vector<16x128xf32>
    %137 = math.tanh %136 : vector<16x128xf32>
    %138 = arith.mulf %131, %137 : vector<16x128xf32>
    %139 = arith.truncf %112 : vector<16x128xf32> to vector<16x128xbf16>
    %c0_49 = arith.constant 0 : index
    %c0_50 = arith.constant 0 : index
    %140 = vector.load %arg8[%c0_49, %c0_50] : memref<128x512xbf16, #tpu.memory_space<vmem>>, vector<128x512xbf16>
    %cst_51 = arith.constant dense<0.000000e+00> : vector<16x512xf32>
    %141 = tpu.matmul %139, %140, %cst_51 {dimension_numbers = #tpu.dot_dimension_numbers<[1], [0], [0], [1], [0, 0, 1, 1], [], []>} : vector<16x128xbf16>, vector<128x512xbf16>, vector<16x512xf32> -> vector<16x512xf32>
    %142 = arith.truncf %138 : vector<16x128xf32> to vector<16x128xbf16>
    %c0_52 = arith.constant 0 : index
    %c0_53 = arith.constant 0 : index
    %143 = vector.load %arg7[%c0_52, %c0_53] : memref<128x512xbf16, #tpu.memory_space<vmem>>, vector<128x512xbf16>
    %cst_54 = arith.constant dense<0.000000e+00> : vector<16x512xf32>
    %144 = tpu.matmul %142, %143, %cst_54 {dimension_numbers = #tpu.dot_dimension_numbers<[1], [0], [0], [1], [0, 0, 1, 1], [], []>} : vector<16x128xbf16>, vector<128x512xbf16>, vector<16x512xf32> -> vector<16x512xf32>
    %145 = arith.addf %144, %141 : vector<16x512xf32>
    %c0_55 = arith.constant 0 : index
    %c0_56 = arith.constant 0 : index
    %146 = vector.load %arg9[%c0_55, %c0_56] : memref<1x512xf32, #tpu.memory_space<vmem>>, vector<1x512xf32>
    %147 = vector.broadcast %146 : vector<1x512xf32> to vector<16x512xf32>
    %148 = arith.addf %145, %147 : vector<16x512xf32>
    %149 = vector.extract_strided_slice %148 {offsets = [0, 0], sizes = [16, 384], strides = [1, 1]} : vector<16x512xf32> to vector<16x384xf32>
    %150 = arith.negf %149 : vector<16x384xf32>
    %151 = math.exp %150 : vector<16x384xf32>
    %cst_57 = arith.constant 1.000000e+00 : f32
    %152 = vector.broadcast %cst_57 : f32 to vector<16x384xf32>
    %153 = arith.addf %152, %151 : vector<16x384xf32>
    %154 = arith.divf %152, %153 : vector<16x384xf32>
    %155 = vector.extract_strided_slice %154 {offsets = [0, 0], sizes = [16, 128], strides = [1, 1]} : vector<16x384xf32> to vector<16x128xf32>
    %156 = vector.extract_strided_slice %154 {offsets = [0, 128], sizes = [16, 128], strides = [1, 1]} : vector<16x384xf32> to vector<16x128xf32>
    %157 = vector.extract_strided_slice %154 {offsets = [0, 256], sizes = [16, 128], strides = [1, 1]} : vector<16x384xf32> to vector<16x128xf32>
    %158 = vector.extract_strided_slice %148 {offsets = [0, 384], sizes = [16, 128], strides = [1, 1]} : vector<16x512xf32> to vector<16x128xf32>
    %159 = math.tanh %158 : vector<16x128xf32>
    %160 = arith.mulf %156, %110 : vector<16x128xf32>
    %161 = arith.mulf %155, %159 : vector<16x128xf32>
    %162 = arith.addf %160, %161 : vector<16x128xf32>
    %163 = math.tanh %162 : vector<16x128xf32>
    %164 = arith.mulf %157, %163 : vector<16x128xf32>
    %c2_i32 = arith.constant 2 : i32
    %165 = vector.broadcast %c2_i32 : i32 to vector<16x1xi32>
    %166 = arith.cmpi eq, %0, %165 : vector<16x1xi32>
    %167 = vector.shape_cast %166 : vector<16x1xi1> to vector<16x1xi1>
    %168 = vector.broadcast %167 : vector<16x1xi1> to vector<16x128xi1>
    %169 = arith.select %168, %164, %117 : vector<16x128xi1>, vector<16x128xf32>
    %170 = arith.truncf %138 : vector<16x128xf32> to vector<16x128xbf16>
    %c0_58 = arith.constant 0 : index
    %c0_59 = arith.constant 0 : index
    %171 = vector.load %arg5[%c0_58, %c0_59] : memref<128x512xbf16, #tpu.memory_space<vmem>>, vector<128x512xbf16>
    %cst_60 = arith.constant dense<0.000000e+00> : vector<16x512xf32>
    %172 = tpu.matmul %170, %171, %cst_60 {dimension_numbers = #tpu.dot_dimension_numbers<[1], [0], [0], [1], [0, 0, 1, 1], [], []>} : vector<16x128xbf16>, vector<128x512xbf16>, vector<16x512xf32> -> vector<16x512xf32>
    %c48 = arith.constant 48 : index
    %c0_61 = arith.constant 0 : index
    %173 = vector.load %arg15[%c48, %c0_61] : memref<128x512xf32, #tpu.memory_space<vmem>>, vector<16x512xf32>
    %174 = arith.addf %173, %172 : vector<16x512xf32>
    %175 = vector.extract_strided_slice %174 {offsets = [0, 0], sizes = [16, 384], strides = [1, 1]} : vector<16x512xf32> to vector<16x384xf32>
    %176 = arith.negf %175 : vector<16x384xf32>
    %177 = math.exp %176 : vector<16x384xf32>
    %cst_62 = arith.constant 1.000000e+00 : f32
    %178 = vector.broadcast %cst_62 : f32 to vector<16x384xf32>
    %179 = arith.addf %178, %177 : vector<16x384xf32>
    %180 = arith.divf %178, %179 : vector<16x384xf32>
    %181 = vector.extract_strided_slice %180 {offsets = [0, 0], sizes = [16, 128], strides = [1, 1]} : vector<16x384xf32> to vector<16x128xf32>
    %182 = vector.extract_strided_slice %180 {offsets = [0, 128], sizes = [16, 128], strides = [1, 1]} : vector<16x384xf32> to vector<16x128xf32>
    %183 = vector.extract_strided_slice %180 {offsets = [0, 256], sizes = [16, 128], strides = [1, 1]} : vector<16x384xf32> to vector<16x128xf32>
    %184 = vector.extract_strided_slice %174 {offsets = [0, 384], sizes = [16, 128], strides = [1, 1]} : vector<16x512xf32> to vector<16x128xf32>
    %185 = math.tanh %184 : vector<16x128xf32>
    %186 = arith.mulf %182, %136 : vector<16x128xf32>
    %187 = arith.mulf %181, %185 : vector<16x128xf32>
    %188 = arith.addf %186, %187 : vector<16x128xf32>
    %189 = math.tanh %188 : vector<16x128xf32>
    %190 = arith.mulf %183, %189 : vector<16x128xf32>
    %191 = arith.truncf %164 : vector<16x128xf32> to vector<16x128xbf16>
    %c0_63 = arith.constant 0 : index
    %c0_64 = arith.constant 0 : index
    %192 = vector.load %arg8[%c0_63, %c0_64] : memref<128x512xbf16, #tpu.memory_space<vmem>>, vector<128x512xbf16>
    %cst_65 = arith.constant dense<0.000000e+00> : vector<16x512xf32>
    %193 = tpu.matmul %191, %192, %cst_65 {dimension_numbers = #tpu.dot_dimension_numbers<[1], [0], [0], [1], [0, 0, 1, 1], [], []>} : vector<16x128xbf16>, vector<128x512xbf16>, vector<16x512xf32> -> vector<16x512xf32>
    %194 = arith.truncf %190 : vector<16x128xf32> to vector<16x128xbf16>
    %c0_66 = arith.constant 0 : index
    %c0_67 = arith.constant 0 : index
    %195 = vector.load %arg7[%c0_66, %c0_67] : memref<128x512xbf16, #tpu.memory_space<vmem>>, vector<128x512xbf16>
    %cst_68 = arith.constant dense<0.000000e+00> : vector<16x512xf32>
    %196 = tpu.matmul %194, %195, %cst_68 {dimension_numbers = #tpu.dot_dimension_numbers<[1], [0], [0], [1], [0, 0, 1, 1], [], []>} : vector<16x128xbf16>, vector<128x512xbf16>, vector<16x512xf32> -> vector<16x512xf32>
    %197 = arith.addf %196, %193 : vector<16x512xf32>
    %c0_69 = arith.constant 0 : index
    %c0_70 = arith.constant 0 : index
    %198 = vector.load %arg9[%c0_69, %c0_70] : memref<1x512xf32, #tpu.memory_space<vmem>>, vector<1x512xf32>
    %199 = vector.broadcast %198 : vector<1x512xf32> to vector<16x512xf32>
    %200 = arith.addf %197, %199 : vector<16x512xf32>
    %201 = vector.extract_strided_slice %200 {offsets = [0, 0], sizes = [16, 384], strides = [1, 1]} : vector<16x512xf32> to vector<16x384xf32>
    %202 = arith.negf %201 : vector<16x384xf32>
    %203 = math.exp %202 : vector<16x384xf32>
    %cst_71 = arith.constant 1.000000e+00 : f32
    %204 = vector.broadcast %cst_71 : f32 to vector<16x384xf32>
    %205 = arith.addf %204, %203 : vector<16x384xf32>
    %206 = arith.divf %204, %205 : vector<16x384xf32>
    %207 = vector.extract_strided_slice %206 {offsets = [0, 0], sizes = [16, 128], strides = [1, 1]} : vector<16x384xf32> to vector<16x128xf32>
    %208 = vector.extract_strided_slice %206 {offsets = [0, 128], sizes = [16, 128], strides = [1, 1]} : vector<16x384xf32> to vector<16x128xf32>
    %209 = vector.extract_strided_slice %206 {offsets = [0, 256], sizes = [16, 128], strides = [1, 1]} : vector<16x384xf32> to vector<16x128xf32>
    %210 = vector.extract_strided_slice %200 {offsets = [0, 384], sizes = [16, 128], strides = [1, 1]} : vector<16x512xf32> to vector<16x128xf32>
    %211 = math.tanh %210 : vector<16x128xf32>
    %212 = arith.mulf %208, %162 : vector<16x128xf32>
    %213 = arith.mulf %207, %211 : vector<16x128xf32>
    %214 = arith.addf %212, %213 : vector<16x128xf32>
    %215 = math.tanh %214 : vector<16x128xf32>
    %216 = arith.mulf %209, %215 : vector<16x128xf32>
    %c3_i32 = arith.constant 3 : i32
    %217 = vector.broadcast %c3_i32 : i32 to vector<16x1xi32>
    %218 = arith.cmpi eq, %0, %217 : vector<16x1xi32>
    %219 = vector.shape_cast %218 : vector<16x1xi1> to vector<16x1xi1>
    %220 = vector.broadcast %219 : vector<16x1xi1> to vector<16x128xi1>
    %221 = arith.select %220, %216, %169 : vector<16x128xi1>, vector<16x128xf32>
    %222 = arith.truncf %190 : vector<16x128xf32> to vector<16x128xbf16>
    %c0_72 = arith.constant 0 : index
    %c0_73 = arith.constant 0 : index
    %223 = vector.load %arg5[%c0_72, %c0_73] : memref<128x512xbf16, #tpu.memory_space<vmem>>, vector<128x512xbf16>
    %cst_74 = arith.constant dense<0.000000e+00> : vector<16x512xf32>
    %224 = tpu.matmul %222, %223, %cst_74 {dimension_numbers = #tpu.dot_dimension_numbers<[1], [0], [0], [1], [0, 0, 1, 1], [], []>} : vector<16x128xbf16>, vector<128x512xbf16>, vector<16x512xf32> -> vector<16x512xf32>
    %c64 = arith.constant 64 : index
    %c0_75 = arith.constant 0 : index
    %225 = vector.load %arg15[%c64, %c0_75] : memref<128x512xf32, #tpu.memory_space<vmem>>, vector<16x512xf32>
    %226 = arith.addf %225, %224 : vector<16x512xf32>
    %227 = vector.extract_strided_slice %226 {offsets = [0, 0], sizes = [16, 384], strides = [1, 1]} : vector<16x512xf32> to vector<16x384xf32>
    %228 = arith.negf %227 : vector<16x384xf32>
    %229 = math.exp %228 : vector<16x384xf32>
    %cst_76 = arith.constant 1.000000e+00 : f32
    %230 = vector.broadcast %cst_76 : f32 to vector<16x384xf32>
    %231 = arith.addf %230, %229 : vector<16x384xf32>
    %232 = arith.divf %230, %231 : vector<16x384xf32>
    %233 = vector.extract_strided_slice %232 {offsets = [0, 0], sizes = [16, 128], strides = [1, 1]} : vector<16x384xf32> to vector<16x128xf32>
    %234 = vector.extract_strided_slice %232 {offsets = [0, 128], sizes = [16, 128], strides = [1, 1]} : vector<16x384xf32> to vector<16x128xf32>
    %235 = vector.extract_strided_slice %232 {offsets = [0, 256], sizes = [16, 128], strides = [1, 1]} : vector<16x384xf32> to vector<16x128xf32>
    %236 = vector.extract_strided_slice %226 {offsets = [0, 384], sizes = [16, 128], strides = [1, 1]} : vector<16x512xf32> to vector<16x128xf32>
    %237 = math.tanh %236 : vector<16x128xf32>
    %238 = arith.mulf %234, %188 : vector<16x128xf32>
    %239 = arith.mulf %233, %237 : vector<16x128xf32>
    %240 = arith.addf %238, %239 : vector<16x128xf32>
    %241 = math.tanh %240 : vector<16x128xf32>
    %242 = arith.mulf %235, %241 : vector<16x128xf32>
    %243 = arith.truncf %216 : vector<16x128xf32> to vector<16x128xbf16>
    %c0_77 = arith.constant 0 : index
    %c0_78 = arith.constant 0 : index
    %244 = vector.load %arg8[%c0_77, %c0_78] : memref<128x512xbf16, #tpu.memory_space<vmem>>, vector<128x512xbf16>
    %cst_79 = arith.constant dense<0.000000e+00> : vector<16x512xf32>
    %245 = tpu.matmul %243, %244, %cst_79 {dimension_numbers = #tpu.dot_dimension_numbers<[1], [0], [0], [1], [0, 0, 1, 1], [], []>} : vector<16x128xbf16>, vector<128x512xbf16>, vector<16x512xf32> -> vector<16x512xf32>
    %246 = arith.truncf %242 : vector<16x128xf32> to vector<16x128xbf16>
    %c0_80 = arith.constant 0 : index
    %c0_81 = arith.constant 0 : index
    %247 = vector.load %arg7[%c0_80, %c0_81] : memref<128x512xbf16, #tpu.memory_space<vmem>>, vector<128x512xbf16>
    %cst_82 = arith.constant dense<0.000000e+00> : vector<16x512xf32>
    %248 = tpu.matmul %246, %247, %cst_82 {dimension_numbers = #tpu.dot_dimension_numbers<[1], [0], [0], [1], [0, 0, 1, 1], [], []>} : vector<16x128xbf16>, vector<128x512xbf16>, vector<16x512xf32> -> vector<16x512xf32>
    %249 = arith.addf %248, %245 : vector<16x512xf32>
    %c0_83 = arith.constant 0 : index
    %c0_84 = arith.constant 0 : index
    %250 = vector.load %arg9[%c0_83, %c0_84] : memref<1x512xf32, #tpu.memory_space<vmem>>, vector<1x512xf32>
    %251 = vector.broadcast %250 : vector<1x512xf32> to vector<16x512xf32>
    %252 = arith.addf %249, %251 : vector<16x512xf32>
    %253 = vector.extract_strided_slice %252 {offsets = [0, 0], sizes = [16, 384], strides = [1, 1]} : vector<16x512xf32> to vector<16x384xf32>
    %254 = arith.negf %253 : vector<16x384xf32>
    %255 = math.exp %254 : vector<16x384xf32>
    %cst_85 = arith.constant 1.000000e+00 : f32
    %256 = vector.broadcast %cst_85 : f32 to vector<16x384xf32>
    %257 = arith.addf %256, %255 : vector<16x384xf32>
    %258 = arith.divf %256, %257 : vector<16x384xf32>
    %259 = vector.extract_strided_slice %258 {offsets = [0, 0], sizes = [16, 128], strides = [1, 1]} : vector<16x384xf32> to vector<16x128xf32>
    %260 = vector.extract_strided_slice %258 {offsets = [0, 128], sizes = [16, 128], strides = [1, 1]} : vector<16x384xf32> to vector<16x128xf32>
    %261 = vector.extract_strided_slice %258 {offsets = [0, 256], sizes = [16, 128], strides = [1, 1]} : vector<16x384xf32> to vector<16x128xf32>
    %262 = vector.extract_strided_slice %252 {offsets = [0, 384], sizes = [16, 128], strides = [1, 1]} : vector<16x512xf32> to vector<16x128xf32>
    %263 = math.tanh %262 : vector<16x128xf32>
    %264 = arith.mulf %260, %214 : vector<16x128xf32>
    %265 = arith.mulf %259, %263 : vector<16x128xf32>
    %266 = arith.addf %264, %265 : vector<16x128xf32>
    %267 = math.tanh %266 : vector<16x128xf32>
    %268 = arith.mulf %261, %267 : vector<16x128xf32>
    %c4_i32 = arith.constant 4 : i32
    %269 = vector.broadcast %c4_i32 : i32 to vector<16x1xi32>
    %270 = arith.cmpi eq, %0, %269 : vector<16x1xi32>
    %271 = vector.shape_cast %270 : vector<16x1xi1> to vector<16x1xi1>
    %272 = vector.broadcast %271 : vector<16x1xi1> to vector<16x128xi1>
    %273 = arith.select %272, %268, %221 : vector<16x128xi1>, vector<16x128xf32>
    %274 = arith.truncf %242 : vector<16x128xf32> to vector<16x128xbf16>
    %c0_86 = arith.constant 0 : index
    %c0_87 = arith.constant 0 : index
    %275 = vector.load %arg5[%c0_86, %c0_87] : memref<128x512xbf16, #tpu.memory_space<vmem>>, vector<128x512xbf16>
    %cst_88 = arith.constant dense<0.000000e+00> : vector<16x512xf32>
    %276 = tpu.matmul %274, %275, %cst_88 {dimension_numbers = #tpu.dot_dimension_numbers<[1], [0], [0], [1], [0, 0, 1, 1], [], []>} : vector<16x128xbf16>, vector<128x512xbf16>, vector<16x512xf32> -> vector<16x512xf32>
    %c80 = arith.constant 80 : index
    %c0_89 = arith.constant 0 : index
    %277 = vector.load %arg15[%c80, %c0_89] : memref<128x512xf32, #tpu.memory_space<vmem>>, vector<16x512xf32>
    %278 = arith.addf %277, %276 : vector<16x512xf32>
    %279 = vector.extract_strided_slice %278 {offsets = [0, 0], sizes = [16, 384], strides = [1, 1]} : vector<16x512xf32> to vector<16x384xf32>
    %280 = arith.negf %279 : vector<16x384xf32>
    %281 = math.exp %280 : vector<16x384xf32>
    %cst_90 = arith.constant 1.000000e+00 : f32
    %282 = vector.broadcast %cst_90 : f32 to vector<16x384xf32>
    %283 = arith.addf %282, %281 : vector<16x384xf32>
    %284 = arith.divf %282, %283 : vector<16x384xf32>
    %285 = vector.extract_strided_slice %284 {offsets = [0, 0], sizes = [16, 128], strides = [1, 1]} : vector<16x384xf32> to vector<16x128xf32>
    %286 = vector.extract_strided_slice %284 {offsets = [0, 128], sizes = [16, 128], strides = [1, 1]} : vector<16x384xf32> to vector<16x128xf32>
    %287 = vector.extract_strided_slice %284 {offsets = [0, 256], sizes = [16, 128], strides = [1, 1]} : vector<16x384xf32> to vector<16x128xf32>
    %288 = vector.extract_strided_slice %278 {offsets = [0, 384], sizes = [16, 128], strides = [1, 1]} : vector<16x512xf32> to vector<16x128xf32>
    %289 = math.tanh %288 : vector<16x128xf32>
    %290 = arith.mulf %286, %240 : vector<16x128xf32>
    %291 = arith.mulf %285, %289 : vector<16x128xf32>
    %292 = arith.addf %290, %291 : vector<16x128xf32>
    %293 = math.tanh %292 : vector<16x128xf32>
    %294 = arith.mulf %287, %293 : vector<16x128xf32>
    %295 = arith.truncf %268 : vector<16x128xf32> to vector<16x128xbf16>
    %c0_91 = arith.constant 0 : index
    %c0_92 = arith.constant 0 : index
    %296 = vector.load %arg8[%c0_91, %c0_92] : memref<128x512xbf16, #tpu.memory_space<vmem>>, vector<128x512xbf16>
    %cst_93 = arith.constant dense<0.000000e+00> : vector<16x512xf32>
    %297 = tpu.matmul %295, %296, %cst_93 {dimension_numbers = #tpu.dot_dimension_numbers<[1], [0], [0], [1], [0, 0, 1, 1], [], []>} : vector<16x128xbf16>, vector<128x512xbf16>, vector<16x512xf32> -> vector<16x512xf32>
    %298 = arith.truncf %294 : vector<16x128xf32> to vector<16x128xbf16>
    %c0_94 = arith.constant 0 : index
    %c0_95 = arith.constant 0 : index
    %299 = vector.load %arg7[%c0_94, %c0_95] : memref<128x512xbf16, #tpu.memory_space<vmem>>, vector<128x512xbf16>
    %cst_96 = arith.constant dense<0.000000e+00> : vector<16x512xf32>
    %300 = tpu.matmul %298, %299, %cst_96 {dimension_numbers = #tpu.dot_dimension_numbers<[1], [0], [0], [1], [0, 0, 1, 1], [], []>} : vector<16x128xbf16>, vector<128x512xbf16>, vector<16x512xf32> -> vector<16x512xf32>
    %301 = arith.addf %300, %297 : vector<16x512xf32>
    %c0_97 = arith.constant 0 : index
    %c0_98 = arith.constant 0 : index
    %302 = vector.load %arg9[%c0_97, %c0_98] : memref<1x512xf32, #tpu.memory_space<vmem>>, vector<1x512xf32>
    %303 = vector.broadcast %302 : vector<1x512xf32> to vector<16x512xf32>
    %304 = arith.addf %301, %303 : vector<16x512xf32>
    %305 = vector.extract_strided_slice %304 {offsets = [0, 0], sizes = [16, 384], strides = [1, 1]} : vector<16x512xf32> to vector<16x384xf32>
    %306 = arith.negf %305 : vector<16x384xf32>
    %307 = math.exp %306 : vector<16x384xf32>
    %cst_99 = arith.constant 1.000000e+00 : f32
    %308 = vector.broadcast %cst_99 : f32 to vector<16x384xf32>
    %309 = arith.addf %308, %307 : vector<16x384xf32>
    %310 = arith.divf %308, %309 : vector<16x384xf32>
    %311 = vector.extract_strided_slice %310 {offsets = [0, 0], sizes = [16, 128], strides = [1, 1]} : vector<16x384xf32> to vector<16x128xf32>
    %312 = vector.extract_strided_slice %310 {offsets = [0, 128], sizes = [16, 128], strides = [1, 1]} : vector<16x384xf32> to vector<16x128xf32>
    %313 = vector.extract_strided_slice %310 {offsets = [0, 256], sizes = [16, 128], strides = [1, 1]} : vector<16x384xf32> to vector<16x128xf32>
    %314 = vector.extract_strided_slice %304 {offsets = [0, 384], sizes = [16, 128], strides = [1, 1]} : vector<16x512xf32> to vector<16x128xf32>
    %315 = math.tanh %314 : vector<16x128xf32>
    %316 = arith.mulf %312, %266 : vector<16x128xf32>
    %317 = arith.mulf %311, %315 : vector<16x128xf32>
    %318 = arith.addf %316, %317 : vector<16x128xf32>
    %319 = math.tanh %318 : vector<16x128xf32>
    %320 = arith.mulf %313, %319 : vector<16x128xf32>
    %c5_i32 = arith.constant 5 : i32
    %321 = vector.broadcast %c5_i32 : i32 to vector<16x1xi32>
    %322 = arith.cmpi eq, %0, %321 : vector<16x1xi32>
    %323 = vector.shape_cast %322 : vector<16x1xi1> to vector<16x1xi1>
    %324 = vector.broadcast %323 : vector<16x1xi1> to vector<16x128xi1>
    %325 = arith.select %324, %320, %273 : vector<16x128xi1>, vector<16x128xf32>
    %326 = arith.truncf %294 : vector<16x128xf32> to vector<16x128xbf16>
    %c0_100 = arith.constant 0 : index
    %c0_101 = arith.constant 0 : index
    %327 = vector.load %arg5[%c0_100, %c0_101] : memref<128x512xbf16, #tpu.memory_space<vmem>>, vector<128x512xbf16>
    %cst_102 = arith.constant dense<0.000000e+00> : vector<16x512xf32>
    %328 = tpu.matmul %326, %327, %cst_102 {dimension_numbers = #tpu.dot_dimension_numbers<[1], [0], [0], [1], [0, 0, 1, 1], [], []>} : vector<16x128xbf16>, vector<128x512xbf16>, vector<16x512xf32> -> vector<16x512xf32>
    %c96 = arith.constant 96 : index
    %c0_103 = arith.constant 0 : index
    %329 = vector.load %arg15[%c96, %c0_103] : memref<128x512xf32, #tpu.memory_space<vmem>>, vector<16x512xf32>
    %330 = arith.addf %329, %328 : vector<16x512xf32>
    %331 = vector.extract_strided_slice %330 {offsets = [0, 0], sizes = [16, 384], strides = [1, 1]} : vector<16x512xf32> to vector<16x384xf32>
    %332 = arith.negf %331 : vector<16x384xf32>
    %333 = math.exp %332 : vector<16x384xf32>
    %cst_104 = arith.constant 1.000000e+00 : f32
    %334 = vector.broadcast %cst_104 : f32 to vector<16x384xf32>
    %335 = arith.addf %334, %333 : vector<16x384xf32>
    %336 = arith.divf %334, %335 : vector<16x384xf32>
    %337 = vector.extract_strided_slice %336 {offsets = [0, 0], sizes = [16, 128], strides = [1, 1]} : vector<16x384xf32> to vector<16x128xf32>
    %338 = vector.extract_strided_slice %336 {offsets = [0, 128], sizes = [16, 128], strides = [1, 1]} : vector<16x384xf32> to vector<16x128xf32>
    %339 = vector.extract_strided_slice %336 {offsets = [0, 256], sizes = [16, 128], strides = [1, 1]} : vector<16x384xf32> to vector<16x128xf32>
    %340 = vector.extract_strided_slice %330 {offsets = [0, 384], sizes = [16, 128], strides = [1, 1]} : vector<16x512xf32> to vector<16x128xf32>
    %341 = math.tanh %340 : vector<16x128xf32>
    %342 = arith.mulf %338, %292 : vector<16x128xf32>
    %343 = arith.mulf %337, %341 : vector<16x128xf32>
    %344 = arith.addf %342, %343 : vector<16x128xf32>
    %345 = math.tanh %344 : vector<16x128xf32>
    %346 = arith.mulf %339, %345 : vector<16x128xf32>
    %347 = arith.truncf %320 : vector<16x128xf32> to vector<16x128xbf16>
    %c0_105 = arith.constant 0 : index
    %c0_106 = arith.constant 0 : index
    %348 = vector.load %arg8[%c0_105, %c0_106] : memref<128x512xbf16, #tpu.memory_space<vmem>>, vector<128x512xbf16>
    %cst_107 = arith.constant dense<0.000000e+00> : vector<16x512xf32>
    %349 = tpu.matmul %347, %348, %cst_107 {dimension_numbers = #tpu.dot_dimension_numbers<[1], [0], [0], [1], [0, 0, 1, 1], [], []>} : vector<16x128xbf16>, vector<128x512xbf16>, vector<16x512xf32> -> vector<16x512xf32>
    %350 = arith.truncf %346 : vector<16x128xf32> to vector<16x128xbf16>
    %c0_108 = arith.constant 0 : index
    %c0_109 = arith.constant 0 : index
    %351 = vector.load %arg7[%c0_108, %c0_109] : memref<128x512xbf16, #tpu.memory_space<vmem>>, vector<128x512xbf16>
    %cst_110 = arith.constant dense<0.000000e+00> : vector<16x512xf32>
    %352 = tpu.matmul %350, %351, %cst_110 {dimension_numbers = #tpu.dot_dimension_numbers<[1], [0], [0], [1], [0, 0, 1, 1], [], []>} : vector<16x128xbf16>, vector<128x512xbf16>, vector<16x512xf32> -> vector<16x512xf32>
    %353 = arith.addf %352, %349 : vector<16x512xf32>
    %c0_111 = arith.constant 0 : index
    %c0_112 = arith.constant 0 : index
    %354 = vector.load %arg9[%c0_111, %c0_112] : memref<1x512xf32, #tpu.memory_space<vmem>>, vector<1x512xf32>
    %355 = vector.broadcast %354 : vector<1x512xf32> to vector<16x512xf32>
    %356 = arith.addf %353, %355 : vector<16x512xf32>
    %357 = vector.extract_strided_slice %356 {offsets = [0, 0], sizes = [16, 384], strides = [1, 1]} : vector<16x512xf32> to vector<16x384xf32>
    %358 = arith.negf %357 : vector<16x384xf32>
    %359 = math.exp %358 : vector<16x384xf32>
    %cst_113 = arith.constant 1.000000e+00 : f32
    %360 = vector.broadcast %cst_113 : f32 to vector<16x384xf32>
    %361 = arith.addf %360, %359 : vector<16x384xf32>
    %362 = arith.divf %360, %361 : vector<16x384xf32>
    %363 = vector.extract_strided_slice %362 {offsets = [0, 0], sizes = [16, 128], strides = [1, 1]} : vector<16x384xf32> to vector<16x128xf32>
    %364 = vector.extract_strided_slice %362 {offsets = [0, 128], sizes = [16, 128], strides = [1, 1]} : vector<16x384xf32> to vector<16x128xf32>
    %365 = vector.extract_strided_slice %362 {offsets = [0, 256], sizes = [16, 128], strides = [1, 1]} : vector<16x384xf32> to vector<16x128xf32>
    %366 = vector.extract_strided_slice %356 {offsets = [0, 384], sizes = [16, 128], strides = [1, 1]} : vector<16x512xf32> to vector<16x128xf32>
    %367 = math.tanh %366 : vector<16x128xf32>
    %368 = arith.mulf %364, %318 : vector<16x128xf32>
    %369 = arith.mulf %363, %367 : vector<16x128xf32>
    %370 = arith.addf %368, %369 : vector<16x128xf32>
    %371 = math.tanh %370 : vector<16x128xf32>
    %372 = arith.mulf %365, %371 : vector<16x128xf32>
    %c6_i32 = arith.constant 6 : i32
    %373 = vector.broadcast %c6_i32 : i32 to vector<16x1xi32>
    %374 = arith.cmpi eq, %0, %373 : vector<16x1xi32>
    %375 = vector.shape_cast %374 : vector<16x1xi1> to vector<16x1xi1>
    %376 = vector.broadcast %375 : vector<16x1xi1> to vector<16x128xi1>
    %377 = arith.select %376, %372, %325 : vector<16x128xi1>, vector<16x128xf32>
    %378 = arith.truncf %346 : vector<16x128xf32> to vector<16x128xbf16>
    %c0_114 = arith.constant 0 : index
    %c0_115 = arith.constant 0 : index
    %379 = vector.load %arg5[%c0_114, %c0_115] : memref<128x512xbf16, #tpu.memory_space<vmem>>, vector<128x512xbf16>
    %cst_116 = arith.constant dense<0.000000e+00> : vector<16x512xf32>
    %380 = tpu.matmul %378, %379, %cst_116 {dimension_numbers = #tpu.dot_dimension_numbers<[1], [0], [0], [1], [0, 0, 1, 1], [], []>} : vector<16x128xbf16>, vector<128x512xbf16>, vector<16x512xf32> -> vector<16x512xf32>
    %c112 = arith.constant 112 : index
    %c0_117 = arith.constant 0 : index
    %381 = vector.load %arg15[%c112, %c0_117] : memref<128x512xf32, #tpu.memory_space<vmem>>, vector<16x512xf32>
    %382 = arith.addf %381, %380 : vector<16x512xf32>
    %383 = vector.extract_strided_slice %382 {offsets = [0, 0], sizes = [16, 384], strides = [1, 1]} : vector<16x512xf32> to vector<16x384xf32>
    %384 = arith.negf %383 : vector<16x384xf32>
    %385 = math.exp %384 : vector<16x384xf32>
    %cst_118 = arith.constant 1.000000e+00 : f32
    %386 = vector.broadcast %cst_118 : f32 to vector<16x384xf32>
    %387 = arith.addf %386, %385 : vector<16x384xf32>
    %388 = arith.divf %386, %387 : vector<16x384xf32>
    %389 = vector.extract_strided_slice %388 {offsets = [0, 0], sizes = [16, 128], strides = [1, 1]} : vector<16x384xf32> to vector<16x128xf32>
    %390 = vector.extract_strided_slice %388 {offsets = [0, 128], sizes = [16, 128], strides = [1, 1]} : vector<16x384xf32> to vector<16x128xf32>
    %391 = vector.extract_strided_slice %388 {offsets = [0, 256], sizes = [16, 128], strides = [1, 1]} : vector<16x384xf32> to vector<16x128xf32>
    %392 = vector.extract_strided_slice %382 {offsets = [0, 384], sizes = [16, 128], strides = [1, 1]} : vector<16x512xf32> to vector<16x128xf32>
    %393 = math.tanh %392 : vector<16x128xf32>
    %394 = arith.mulf %390, %344 : vector<16x128xf32>
    %395 = arith.mulf %389, %393 : vector<16x128xf32>
    %396 = arith.addf %394, %395 : vector<16x128xf32>
    %397 = math.tanh %396 : vector<16x128xf32>
    %398 = arith.mulf %391, %397 : vector<16x128xf32>
    %399 = arith.truncf %372 : vector<16x128xf32> to vector<16x128xbf16>
    %c0_119 = arith.constant 0 : index
    %c0_120 = arith.constant 0 : index
    %400 = vector.load %arg8[%c0_119, %c0_120] : memref<128x512xbf16, #tpu.memory_space<vmem>>, vector<128x512xbf16>
    %cst_121 = arith.constant dense<0.000000e+00> : vector<16x512xf32>
    %401 = tpu.matmul %399, %400, %cst_121 {dimension_numbers = #tpu.dot_dimension_numbers<[1], [0], [0], [1], [0, 0, 1, 1], [], []>} : vector<16x128xbf16>, vector<128x512xbf16>, vector<16x512xf32> -> vector<16x512xf32>
    %402 = arith.truncf %398 : vector<16x128xf32> to vector<16x128xbf16>
    %c0_122 = arith.constant 0 : index
    %c0_123 = arith.constant 0 : index
    %403 = vector.load %arg7[%c0_122, %c0_123] : memref<128x512xbf16, #tpu.memory_space<vmem>>, vector<128x512xbf16>
    %cst_124 = arith.constant dense<0.000000e+00> : vector<16x512xf32>
    %404 = tpu.matmul %402, %403, %cst_124 {dimension_numbers = #tpu.dot_dimension_numbers<[1], [0], [0], [1], [0, 0, 1, 1], [], []>} : vector<16x128xbf16>, vector<128x512xbf16>, vector<16x512xf32> -> vector<16x512xf32>
    %405 = arith.addf %404, %401 : vector<16x512xf32>
    %c0_125 = arith.constant 0 : index
    %c0_126 = arith.constant 0 : index
    %406 = vector.load %arg9[%c0_125, %c0_126] : memref<1x512xf32, #tpu.memory_space<vmem>>, vector<1x512xf32>
    %407 = vector.broadcast %406 : vector<1x512xf32> to vector<16x512xf32>
    %408 = arith.addf %405, %407 : vector<16x512xf32>
    %409 = vector.extract_strided_slice %408 {offsets = [0, 0], sizes = [16, 384], strides = [1, 1]} : vector<16x512xf32> to vector<16x384xf32>
    %410 = arith.negf %409 : vector<16x384xf32>
    %411 = math.exp %410 : vector<16x384xf32>
    %cst_127 = arith.constant 1.000000e+00 : f32
    %412 = vector.broadcast %cst_127 : f32 to vector<16x384xf32>
    %413 = arith.addf %412, %411 : vector<16x384xf32>
    %414 = arith.divf %412, %413 : vector<16x384xf32>
    %415 = vector.extract_strided_slice %414 {offsets = [0, 0], sizes = [16, 128], strides = [1, 1]} : vector<16x384xf32> to vector<16x128xf32>
    %416 = vector.extract_strided_slice %414 {offsets = [0, 128], sizes = [16, 128], strides = [1, 1]} : vector<16x384xf32> to vector<16x128xf32>
    %417 = vector.extract_strided_slice %414 {offsets = [0, 256], sizes = [16, 128], strides = [1, 1]} : vector<16x384xf32> to vector<16x128xf32>
    %418 = vector.extract_strided_slice %408 {offsets = [0, 384], sizes = [16, 128], strides = [1, 1]} : vector<16x512xf32> to vector<16x128xf32>
    %419 = math.tanh %418 : vector<16x128xf32>
    %420 = arith.mulf %416, %370 : vector<16x128xf32>
    %421 = arith.mulf %415, %419 : vector<16x128xf32>
    %422 = arith.addf %420, %421 : vector<16x128xf32>
    %423 = math.tanh %422 : vector<16x128xf32>
    %424 = arith.mulf %417, %423 : vector<16x128xf32>
    %c7_i32 = arith.constant 7 : i32
    %425 = vector.broadcast %c7_i32 : i32 to vector<16x1xi32>
    %426 = arith.cmpi eq, %0, %425 : vector<16x1xi32>
    %427 = vector.shape_cast %426 : vector<16x1xi1> to vector<16x1xi1>
    %428 = vector.broadcast %427 : vector<16x1xi1> to vector<16x128xi1>
    %429 = arith.select %428, %424, %377 : vector<16x128xi1>, vector<16x128xf32>
    %c0_128 = arith.constant 0 : index
    %c0_129 = arith.constant 0 : index
    %430 = vector.load %arg2[%c0_128, %c0_129] : memref<16x32xf32, #tpu.memory_space<vmem>>, vector<16x32xf32>
    %c0_130 = arith.constant 0 : index
    %c0_131 = arith.constant 0 : index
    %431 = vector.load %arg10[%c0_130, %c0_131] : memref<160x128xf32, #tpu.memory_space<vmem>>, vector<32x128xf32>
    %cst_132 = arith.constant dense<0.000000e+00> : vector<16x128xf32>
    %432 = tpu.matmul %430, %431, %cst_132 {dimension_numbers = #tpu.dot_dimension_numbers<[1], [0], [0], [1], [0, 0, 1, 1], [], []>} : vector<16x32xf32>, vector<32x128xf32>, vector<16x128xf32> -> vector<16x128xf32>
    %c32_133 = arith.constant 32 : index
    %c0_134 = arith.constant 0 : index
    %433 = vector.load %arg10[%c32_133, %c0_134] : memref<160x128xf32, #tpu.memory_space<vmem>>, vector<128x128xf32>
    %cst_135 = arith.constant dense<0.000000e+00> : vector<16x128xf32>
    %434 = tpu.matmul %429, %433, %cst_135 {dimension_numbers = #tpu.dot_dimension_numbers<[1], [0], [0], [1], [0, 0, 1, 1], [], []>} : vector<16x128xf32>, vector<128x128xf32>, vector<16x128xf32> -> vector<16x128xf32>
    %435 = arith.addf %432, %434 : vector<16x128xf32>
    %c0_136 = arith.constant 0 : index
    %c0_137 = arith.constant 0 : index
    %436 = vector.load %arg11[%c0_136, %c0_137] : memref<1x128xf32, #tpu.memory_space<vmem>>, vector<1x128xf32>
    %437 = vector.broadcast %436 : vector<1x128xf32> to vector<16x128xf32>
    %438 = arith.addf %435, %437 : vector<16x128xf32>
    %cst_138 = arith.constant 0.000000e+00 : f32
    %439 = vector.broadcast %cst_138 : f32 to vector<16x128xf32>
    %440 = arith.maximumf %438, %439 : vector<16x128xf32>
    %c0_139 = arith.constant 0 : index
    %c0_140 = arith.constant 0 : index
    %441 = vector.load %arg12[%c0_139, %c0_140] : memref<128x16xf32, #tpu.memory_space<vmem>>, vector<128x16xf32>
    %cst_141 = arith.constant dense<0.000000e+00> : vector<16x16xf32>
    %442 = tpu.matmul %440, %441, %cst_141 {dimension_numbers = #tpu.dot_dimension_numbers<[1], [0], [0], [1], [0, 0, 1, 1], [], []>} : vector<16x128xf32>, vector<128x16xf32>, vector<16x16xf32> -> vector<16x16xf32>
    %c0_142 = arith.constant 0 : index
    %c0_143 = arith.constant 0 : index
    %443 = vector.load %arg13[%c0_142, %c0_143] : memref<1x16xf32, #tpu.memory_space<vmem>>, vector<1x16xf32>
    %444 = vector.broadcast %443 : vector<1x16xf32> to vector<16x16xf32>
    %445 = arith.addf %442, %444 : vector<16x16xf32>
    %c0_144 = arith.constant 0 : index
    %c0_145 = arith.constant 0 : index
    %446 = vector.load %arg14[%c0_144, %c0_145] : memref<16x16xf32, #tpu.memory_space<vmem>>, vector<16x16xf32>
    tpu.vector_store %arg14[%c0_144, %c0_145], %445 {strides = array<i32>} : memref<16x16xf32, #tpu.memory_space<vmem>>, vector<16x16xf32>,
    return
  }
  func.func @transform_0(%arg0: i32) -> (i32, i32, i32) {
    %c0_i32 = arith.constant 0 : i32
    %c0_i32_0 = arith.constant 0 : i32
    %c0_i32_1 = arith.constant 0 : i32
    return %c0_i32, %arg0, %c0_i32_0 : i32, i32, i32
  }
  func.func @transform_1(%arg0: i32) -> (i32, i32) {
    %c0_i32 = arith.constant 0 : i32
    %c0_i32_0 = arith.constant 0 : i32
    return %arg0, %c0_i32 : i32, i32
  }
  func.func @transform_2(%arg0: i32) -> (i32, i32) {
    %c0_i32 = arith.constant 0 : i32
    %c0_i32_0 = arith.constant 0 : i32
    return %arg0, %c0_i32 : i32, i32
  }
  func.func @transform_3(%arg0: i32) -> (i32, i32) {
    %c0_i32 = arith.constant 0 : i32
    %c0_i32_0 = arith.constant 0 : i32
    %c0_i32_1 = arith.constant 0 : i32
    return %c0_i32, %c0_i32_0 : i32, i32
  }
  func.func @transform_4(%arg0: i32) -> (i32, i32) {
    %c0_i32 = arith.constant 0 : i32
    %c0_i32_0 = arith.constant 0 : i32
    %c0_i32_1 = arith.constant 0 : i32
    return %c0_i32, %c0_i32_0 : i32, i32
  }
  func.func @transform_5(%arg0: i32) -> (i32, i32) {
    %c0_i32 = arith.constant 0 : i32
    %c0_i32_0 = arith.constant 0 : i32
    %c0_i32_1 = arith.constant 0 : i32
    return %c0_i32, %c0_i32_0 : i32, i32
  }
  func.func @transform_6(%arg0: i32) -> (i32, i32) {
    %c0_i32 = arith.constant 0 : i32
    %c0_i32_0 = arith.constant 0 : i32
    %c0_i32_1 = arith.constant 0 : i32
    return %c0_i32, %c0_i32_0 : i32, i32
  }
  func.func @transform_7(%arg0: i32) -> (i32, i32) {
    %c0_i32 = arith.constant 0 : i32
    %c0_i32_0 = arith.constant 0 : i32
    %c0_i32_1 = arith.constant 0 : i32
    return %c0_i32, %c0_i32_0 : i32, i32
  }
  func.func @transform_8(%arg0: i32) -> (i32, i32) {
    %c0_i32 = arith.constant 0 : i32
    %c0_i32_0 = arith.constant 0 : i32
    %c0_i32_1 = arith.constant 0 : i32
    return %c0_i32, %c0_i32_0 : i32, i32
  }
  func.func @transform_9(%arg0: i32) -> (i32, i32) {
    %c0_i32 = arith.constant 0 : i32
    %c0_i32_0 = arith.constant 0 : i32
    %c0_i32_1 = arith.constant 0 : i32
    return %c0_i32, %c0_i32_0 : i32, i32
  }
  func.func @transform_10(%arg0: i32) -> (i32, i32) {
    %c0_i32 = arith.constant 0 : i32
    %c0_i32_0 = arith.constant 0 : i32
    %c0_i32_1 = arith.constant 0 : i32
    return %c0_i32, %c0_i32_0 : i32, i32
  }
  func.func @transform_11(%arg0: i32) -> (i32, i32) {
    %c0_i32 = arith.constant 0 : i32
    %c0_i32_0 = arith.constant 0 : i32
    %c0_i32_1 = arith.constant 0 : i32
    return %c0_i32, %c0_i32_0 : i32, i32
  }
  func.func @transform_12(%arg0: i32) -> (i32, i32) {
    %c0_i32 = arith.constant 0 : i32
    %c0_i32_0 = arith.constant 0 : i32
    %c0_i32_1 = arith.constant 0 : i32
    return %c0_i32, %c0_i32_0 : i32, i32
  }
  func.func @transform_13(%arg0: i32) -> (i32, i32) {
    %c0_i32 = arith.constant 0 : i32
    %c0_i32_0 = arith.constant 0 : i32
    return %arg0, %c0_i32 : i32, i32
  }
}

</mosaic_0001>

<llo_original>
// kernel: tpu_custom_call.1
$region0: #{tpu_custom_call.1}
  #allocation0 [shape = 'u32[]', space=smem, size = 0x4, offset = 0x4, fixed_abs, tag = 'smem constant byte address 0x4 - core index']
  #allocation1 [shape = 'u32[144,128]{1,0:T(1,128)}', space=vmem, size = 0x12000, scoped, tag = 'internal scratch']
  #allocation2 [shape = 'f32[128,512]{1,0:T(8,128)}', space=vmem, size = 0x40000, scoped, tag = 'scratch operand']
  %s0 = inlined_call_operand.hbm [shape: bf16[8,16,32], index: 0, kind: input, shape index: {}]
  %s1 = inlined_call_operand.hbm [shape: f32[16,32], index: 1, kind: input, shape index: {}]
  %s2 = inlined_call_operand.vmem [shape: s32[16,1], index: 2, kind: input, shape index: {}]
  %s3 = inlined_call_operand.hbm [shape: bf16[32,512], index: 3, kind: input, shape index: {}]
  %s4 = inlined_call_operand.hbm [shape: bf16[128,512], index: 4, kind: input, shape index: {}]
  %s5 = inlined_call_operand.hbm [shape: f32[1,512], index: 5, kind: input, shape index: {}]
  %s6 = inlined_call_operand.hbm [shape: bf16[128,512], index: 6, kind: input, shape index: {}]
  %s7 = inlined_call_operand.hbm [shape: bf16[128,512], index: 7, kind: input, shape index: {}]
  %s8 = inlined_call_operand.hbm [shape: f32[1,512], index: 8, kind: input, shape index: {}]
  %s9 = inlined_call_operand.vmem [shape: f32[160,128], index: 9, kind: input, shape index: {}]
  %s10 = inlined_call_operand.vmem [shape: f32[1,128], index: 10, kind: input, shape index: {}]
  %s11 = inlined_call_operand.vmem [shape: f32[128,16], index: 11, kind: input, shape index: {}]
  %s12 = inlined_call_operand.vmem [shape: f32[1,16], index: 12, kind: input, shape index: {}]
  %s13 = inlined_call_operand.hbm [shape: f32[16,16], index: 13, kind: output, shape index: {}]
  %s14 = sld [smem:[#allocation0]]
  $region94: #{tpu_custom_call.1} parent=0
    _
  %s16 = ssub.s32 1, %s14
  %s17 = scalar_select 0, %s16, %s14
  $region1: #{tpu_custom_call.1} parent=0
    #allocation3 [shape = 'u8[32768]{0}', space=vmem, size = 0x8000, scoped, tag = 'input window, operand 0, single buffered']
    #allocation4 [shape = 's32[1]{0}', space=sflag, size = 0x4, scoped, tag = 'scoped memory for tpu_custom_call.1']
    #allocation5 [shape = 's32[1]{0}', space=sflag, size = 0x4, scoped, tag = 'scoped memory for tpu_custom_call.1']
    #allocation6 [shape = 'u8[8192]{0}', space=vmem, size = 0x2000, scoped, tag = 'input window, operand 1, single buffered']
    #allocation7 [shape = 's32[1]{0}', space=sflag, size = 0x4, scoped, tag = 'scoped memory for tpu_custom_call.1']
    #allocation8 [shape = 'u8[32768]{0}', space=vmem, size = 0x8000, scoped, tag = 'input window, operand 3, single buffered']
    #allocation9 [shape = 'u8[131072]{0}', space=vmem, size = 0x20000, scoped, tag = 'input window, operand 4, single buffered']
    #allocation10 [shape = 's32[1]{0}', space=sflag, size = 0x4, scoped, tag = 'scoped memory for tpu_custom_call.1']
    #allocation11 [shape = 'u8[2048]{0}', space=vmem, size = 0x800, scoped, tag = 'input window, operand 5, single buffered']
    #allocation12 [shape = 'u8[131072]{0}', space=vmem, size = 0x20000, scoped, tag = 'input window, operand 6, single buffered']
    #allocation13 [shape = 's32[1]{0}', space=sflag, size = 0x4, scoped, tag = 'scoped memory for tpu_custom_call.1']
    #allocation14 [shape = 'u8[131072]{0}', space=vmem, size = 0x20000, scoped, tag = 'input window, operand 7, single buffered']
    #allocation15 [shape = 'u8[2048]{0}', space=vmem, size = 0x800, scoped, tag = 'input window, operand 8, single buffered']
    #allocation16 [shape = 's32[1]{0}', space=sflag, size = 0x4, scoped, tag = 'scoped memory for tpu_custom_call.1']
    #allocation17 [shape = 'u8[8192]{0}', space=vmem, size = 0x2000, scoped, tag = 'output window, operand 0, single buffered']
    %18 = vsyncpa [#allocation4], 0
    %19 = vsyncpa [#allocation7], 0
    %20 = vsyncpa [#allocation10], 0
    %21 = vsyncpa [#allocation13], 0
    %22 = vsyncpa [#allocation16], 0
    %23 = vsyncpa [#allocation5], 0
    // Predicated region
    $region2: #{tpu_custom_call.1} parent=1 // pred_check
      _
    $region3: #{tpu_custom_call.1} parent=1 // pred_check_branch
      %25 = sbr.rel (0) target = $region5
    $region4: #{tpu_custom_call.1} parent=1 // pred_region
      %s27 = ssub.s32 1024, 1024
      %28 = vsyncadd [#allocation4], %s27
      %s29 = sshll.u32 [#allocation3], 4
      %s30 = int_to_ptr.vmem [resolvable:$true] %s29
      %35 = dma.hbm_to_vmem [thread:$0]  %s0, 1024, %s30, [#allocation4], 64, 64, 4
    $region5: #{tpu_custom_call.1} parent=1 // pred_fallthru
      _
    // Predicated region
    $region6: #{tpu_custom_call.1} parent=1 // pred_check
      _
    $region7: #{tpu_custom_call.1} parent=1 // pred_check_branch
      %37 = sbr.rel (0) target = $region9
    $region8: #{tpu_custom_call.1} parent=1 // pred_region
      %s39 = ssub.s32 256, 256
      %40 = vsyncadd [#allocation7], %s39
      %s41 = sshll.u32 [#allocation6], 4
      %s42 = int_to_ptr.vmem [resolvable:$true] %s41
      %47 = dma.hbm_to_vmem [thread:$0]  %s1, 256, %s42, [#allocation7], 128, 128, 8
    $region9: #{tpu_custom_call.1} parent=1 // pred_fallthru
      _
    // Predicated region
    $region10: #{tpu_custom_call.1} parent=1 // pred_check
      _
    $region11: #{tpu_custom_call.1} parent=1 // pred_check_branch
      %49 = sbr.rel (0) target = $region13
    $region12: #{tpu_custom_call.1} parent=1 // pred_region
      _
    $region13: #{tpu_custom_call.1} parent=1 // pred_fallthru
      _
    // Predicated region
    $region14: #{tpu_custom_call.1} parent=1 // pred_check
      _
    $region15: #{tpu_custom_call.1} parent=1 // pred_check_branch
      %51 = sbr.rel (0) target = $region17
    $region16: #{tpu_custom_call.1} parent=1 // pred_region
      %s53 = ssub.s32 1024, 1024
      %54 = vsyncadd [#allocation7], %s53
      %s55 = sshll.u32 [#allocation8], 4
      %s56 = int_to_ptr.vmem [resolvable:$true] %s55
      %61 = dma.hbm_to_vmem [thread:$0]  %s3, 1024, %s56, [#allocation7], 256, 256, 16
    $region17: #{tpu_custom_call.1} parent=1 // pred_fallthru
      _
    // Predicated region
    $region18: #{tpu_custom_call.1} parent=1 // pred_check
      _
    $region19: #{tpu_custom_call.1} parent=1 // pred_check_branch
      %63 = sbr.rel (0) target = $region21
    $region20: #{tpu_custom_call.1} parent=1 // pred_region
      %s65 = ssub.s32 4096, 4096
      %66 = vsyncadd [#allocation10], %s65
      %s67 = sshll.u32 [#allocation9], 4
      %s68 = int_to_ptr.vmem [resolvable:$true] %s67
      %73 = dma.hbm_to_vmem [thread:$0]  %s4, 4096, %s68, [#allocation10], 256, 256, 16
    $region21: #{tpu_custom_call.1} parent=1 // pred_fallthru
      _
    // Predicated region
    $region22: #{tpu_custom_call.1} parent=1 // pred_check
      _
    $region23: #{tpu_custom_call.1} parent=1 // pred_check_branch
      %75 = sbr.rel (0) target = $region25
    $region24: #{tpu_custom_call.1} parent=1 // pred_region
      %s77 = ssub.s32 64, 64
      %78 = vsyncadd [#allocation10], %s77
      %s80 = sshll.u32 [#allocation11], 4
      %s81 = int_to_ptr.vmem [resolvable:$true] %s80
      %83 = dma.hbm_to_vmem [thread:$0]  %s5, 64, %s81, [#allocation10]
    $region25: #{tpu_custom_call.1} parent=1 // pred_fallthru
      _
    // Predicated region
    $region26: #{tpu_custom_call.1} parent=1 // pred_check
      _
    $region27: #{tpu_custom_call.1} parent=1 // pred_check_branch
      %85 = sbr.rel (0) target = $region29
    $region28: #{tpu_custom_call.1} parent=1 // pred_region
      %s87 = ssub.s32 4096, 4096
      %88 = vsyncadd [#allocation13], %s87
      %s89 = sshll.u32 [#allocation12], 4
      %s90 = int_to_ptr.vmem [resolvable:$true] %s89
      %95 = dma.hbm_to_vmem [thread:$0]  %s6, 4096, %s90, [#allocation13], 256, 256, 16
    $region29: #{tpu_custom_call.1} parent=1 // pred_fallthru
      _
    // Predicated region
    $region30: #{tpu_custom_call.1} parent=1 // pred_check
      _
    $region31: #{tpu_custom_call.1} parent=1 // pred_check_branch
      %97 = sbr.rel (0) target = $region33
    $region32: #{tpu_custom_call.1} parent=1 // pred_region
      %s99 = ssub.s32 4096, 4096
      %100 = vsyncadd [#allocation13], %s99
      %s101 = sshll.u32 [#allocation14], 4
      %s102 = int_to_ptr.vmem [resolvable:$true] %s101
      %107 = dma.hbm_to_vmem [thread:$0]  %s7, 4096, %s102, [#allocation13], 256, 256, 16
    $region33: #{tpu_custom_call.1} parent=1 // pred_fallthru
      _
    // Predicated region
    $region34: #{tpu_custom_call.1} parent=1 // pred_check
      _
    $region35: #{tpu_custom_call.1} parent=1 // pred_check_branch
      %109 = sbr.rel (0) target = $region37
    $region36: #{tpu_custom_call.1} parent=1 // pred_region
      %s111 = ssub.s32 64, 64
      %112 = vsyncadd [#allocation16], %s111
      %s114 = sshll.u32 [#allocation15], 4
      %s115 = int_to_ptr.vmem [resolvable:$true] %s114
      %117 = dma.hbm_to_vmem [thread:$0]  %s8, 64, %s115, [#allocation16]
    $region37: #{tpu_custom_call.1} parent=1 // pred_fallthru
      _
    // Predicated region
    $region38: #{tpu_custom_call.1} parent=1 // pred_check
      _
    $region39: #{tpu_custom_call.1} parent=1 // pred_check_branch
      %119 = sbr.rel (0) target = $region41
    $region40: #{tpu_custom_call.1} parent=1 // pred_region
      _
    $region41: #{tpu_custom_call.1} parent=1 // pred_fallthru
      _
    // Predicated region
    $region42: #{tpu_custom_call.1} parent=1 // pred_check
      _
    $region43: #{tpu_custom_call.1} parent=1 // pred_check_branch
      %121 = sbr.rel (0) target = $region45
    $region44: #{tpu_custom_call.1} parent=1 // pred_region
      _
    $region45: #{tpu_custom_call.1} parent=1 // pred_fallthru
      _
    // Predicated region
    $region46: #{tpu_custom_call.1} parent=1 // pred_check
      _
    $region47: #{tpu_custom_call.1} parent=1 // pred_check_branch
      %123 = sbr.rel (0) target = $region49
    $region48: #{tpu_custom_call.1} parent=1 // pred_region
      _
    $region49: #{tpu_custom_call.1} parent=1 // pred_fallthru
      _
    // Predicated region
    $region50: #{tpu_custom_call.1} parent=1 // pred_check
      _
    $region51: #{tpu_custom_call.1} parent=1 // pred_check_branch
      %125 = sbr.rel (0) target = $region53
    $region52: #{tpu_custom_call.1} parent=1 // pred_region
      _
    $region53: #{tpu_custom_call.1} parent=1 // pred_fallthru
      _
    // Predicated region
    $region54: #{tpu_custom_call.1} parent=1 // pred_check
      _
    $region55: #{tpu_custom_call.1} parent=1 // pred_check_branch
      %127 = sbr.rel (0) target = $region57
    $region56: #{tpu_custom_call.1} parent=1 // pred_region
      %128 = dma.done [#allocation4], 1024
    $region57: #{tpu_custom_call.1} parent=1 // pred_fallthru
      _
    // Predicated region
    $region58: #{tpu_custom_call.1} parent=1 // pred_check
      _
    $region59: #{tpu_custom_call.1} parent=1 // pred_check_branch
      %130 = sbr.rel (0) target = $region61
    $region60: #{tpu_custom_call.1} parent=1 // pred_region
      %131 = dma.done [#allocation7], 256
    $region61: #{tpu_custom_call.1} parent=1 // pred_fallthru
      _
    // Predicated region
    $region62: #{tpu_custom_call.1} parent=1 // pred_check
      _
    $region63: #{tpu_custom_call.1} parent=1 // pred_check_branch
      %133 = sbr.rel (0) target = $region65
    $region64: #{tpu_custom_call.1} parent=1 // pred_region
      %134 = dma.done [#allocation7], 1024
    $region65: #{tpu_custom_call.1} parent=1 // pred_fallthru
      _
    // Predicated region
    $region66: #{tpu_custom_call.1} parent=1 // pred_check
      _
    $region67: #{tpu_custom_call.1} parent=1 // pred_check_branch
      %136 = sbr.rel (0) target = $region69
    $region68: #{tpu_custom_call.1} parent=1 // pred_region
      %137 = dma.done [#allocation10], 4096
    $region69: #{tpu_custom_call.1} parent=1 // pred_fallthru
      _
    // Predicated region
    $region70: #{tpu_custom_call.1} parent=1 // pred_check
      _
    $region71: #{tpu_custom_call.1} parent=1 // pred_check_branch
      %139 = sbr.rel (0) target = $region73
    $region72: #{tpu_custom_call.1} parent=1 // pred_region
      %140 = dma.done [#allocation10], 64
    $region73: #{tpu_custom_call.1} parent=1 // pred_fallthru
      _
    // Predicated region
    $region74: #{tpu_custom_call.1} parent=1 // pred_check
      _
    $region75: #{tpu_custom_call.1} parent=1 // pred_check_branch
      %142 = sbr.rel (0) target = $region77
    $region76: #{tpu_custom_call.1} parent=1 // pred_region
      %143 = dma.done [#allocation13], 4096
    $region77: #{tpu_custom_call.1} parent=1 // pred_fallthru
      _
    // Predicated region
    $region78: #{tpu_custom_call.1} parent=1 // pred_check
      _
    $region79: #{tpu_custom_call.1} parent=1 // pred_check_branch
      %145 = sbr.rel (0) target = $region81
    $region80: #{tpu_custom_call.1} parent=1 // pred_region
      %146 = dma.done [#allocation13], 4096
    $region81: #{tpu_custom_call.1} parent=1 // pred_fallthru
      _
    // Predicated region
    $region82: #{tpu_custom_call.1} parent=1 // pred_check
      _
    $region83: #{tpu_custom_call.1} parent=1 // pred_check_branch
      %148 = sbr.rel (0) target = $region85
    $region84: #{tpu_custom_call.1} parent=1 // pred_region
      %149 = dma.done [#allocation16], 64
    $region85: #{tpu_custom_call.1} parent=1 // pred_fallthru
      _
    %v151 = vld [vmem:[%s2] sm:$0xff]
    %v152 = vld [vmem:[%s2 + $0x8] sm:$0xff]
    %v153 = vld [vmem:[#allocation3] sm:$0xf]
    %v154 = vld [vmem:[#allocation3 + $0x4] sm:$0xf]
    %v155 = vld [vmem:[#allocation3 + $0x8] sm:$0xf]
    %v156 = vld [vmem:[#allocation3 + $0xc] sm:$0xf]
    %v157 = vld [vmem:[#allocation3 + $0x10] sm:$0xf]
    %v158 = vld [vmem:[#allocation3 + $0x14] sm:$0xf]
    %v159 = vld [vmem:[#allocation3 + $0x18] sm:$0xf]
    %v160 = vld [vmem:[#allocation3 + $0x1c] sm:$0xf]
    %v161 = vld [vmem:[#allocation3 + $0x20] sm:$0xf]
    %v162 = vld [vmem:[#allocation3 + $0x24] sm:$0xf]
    %v163 = vld [vmem:[#allocation3 + $0x28] sm:$0xf]
    %v164 = vld [vmem:[#allocation3 + $0x2c] sm:$0xf]
    %v165 = vld [vmem:[#allocation3 + $0x30] sm:$0xf]
    %v166 = vld [vmem:[#allocation3 + $0x34] sm:$0xf]
    %v167 = vld [vmem:[#allocation3 + $0x38] sm:$0xf]
    %v168 = vld [vmem:[#allocation3 + $0x3c] sm:$0xf]
    %v169 = vld [vmem:[#allocation8] sm:$0xff]
    %v170 = vld [vmem:[#allocation8 + $0x8] sm:$0xff]
    %v171 = vld [vmem:[#allocation8 + $0x10] sm:$0xff]
    %v172 = vld [vmem:[#allocation8 + $0x18] sm:$0xff]
    %v173 = vld [vmem:[#allocation8 + $0x20] sm:$0xff]
    %v174 = vld [vmem:[#allocation8 + $0x28] sm:$0xff]
    %v175 = vld [vmem:[#allocation8 + $0x30] sm:$0xff]
    %v176 = vld [vmem:[#allocation8 + $0x38] sm:$0xff]
    %v177 = vld [vmem:[#allocation11] sm:$0xf]
    %v179 = vlaneseq
    %v180 = vshrl.u32 %v179, 7
    %v181 = vsub.s32 0, %v180
    %v182 = vrot.slane %v177, %v181
    %v183 = vlaneseq
    %v184 = vshrl.u32 %v183, 7
    %v185 = vsub.s32 1, %v184
    %v186 = vrot.slane %v177, %v185
    %v187 = vlaneseq
    %v188 = vshrl.u32 %v187, 7
    %v189 = vsub.s32 2, %v188
    %v190 = vrot.slane %v177, %v189
    %v191 = vlaneseq
    %v192 = vshrl.u32 %v191, 7
    %v193 = vsub.s32 3, %v192
    %v194 = vrot.slane %v177, %v193
    %v215 = vunpack.c.l.b16 %v153
    %v216 = vunpack.c.l.b16 %v154
    %v217 = vunpack.c.l.b16 %v155
    %v218 = vunpack.c.l.b16 %v156
    %v219 = vunpack.c.l.b16 %v157
    %v220 = vunpack.c.l.b16 %v158
    %v221 = vunpack.c.l.b16 %v159
    %v222 = vunpack.c.l.b16 %v160
    %v223 = vunpack.c.l.b16 %v161
    %v224 = vunpack.c.l.b16 %v162
    %v225 = vunpack.c.l.b16 %v163
    %v226 = vunpack.c.l.b16 %v164
    %v227 = vunpack.c.l.b16 %v165
    %v228 = vunpack.c.l.b16 %v166
    %v229 = vunpack.c.l.b16 %v167
    %v230 = vunpack.c.l.b16 %v168
    %v231 = vpack.c.b16 %v216, %v215
    %v232 = vpack.c.b16 %v218, %v217
    %v233 = vpack.c.b16 %v220, %v219
    %v234 = vpack.c.b16 %v222, %v221
    %v235 = vpack.c.b16 %v224, %v223
    %v236 = vpack.c.b16 %v226, %v225
    %v237 = vpack.c.b16 %v228, %v227
    %v238 = vpack.c.b16 %v230, %v229
    %v247 = vunpack.c.l.b16 %v169
    %v248 = vunpack.c.h.b16 %v169
    %v249 = vunpack.c.l.b16 %v170
    %v250 = vunpack.c.h.b16 %v170
    %v251 = vunpack.c.l.b16 %v171
    %v252 = vunpack.c.h.b16 %v171
    %v253 = vunpack.c.l.b16 %v172
    %v254 = vunpack.c.h.b16 %v172
    %v255 = vunpack.c.l.b16 %v173
    %v256 = vunpack.c.h.b16 %v173
    %v257 = vunpack.c.l.b16 %v174
    %v258 = vunpack.c.h.b16 %v174
    %v259 = vunpack.c.l.b16 %v175
    %v260 = vunpack.c.h.b16 %v175
    %v261 = vunpack.c.l.b16 %v176
    %v262 = vunpack.c.h.b16 %v176
    %v263 = vpack.c.b16 %v251, %v247
    %v264 = vpack.c.b16 %v252, %v248
    %v265 = vpack.c.b16 %v253, %v249
    %v266 = vpack.c.b16 %v254, %v250
    %v267 = vpack.c.b16 %v259, %v255
    %v268 = vpack.c.b16 %v260, %v256
    %v269 = vpack.c.b16 %v261, %v257
    %v270 = vpack.c.b16 %v262, %v258
    %vm279 = vcmask 261120
    %v281 = vsel %vm279, %v231, 0
    %v284 = vsel %vm279, %v232, 0
    %v287 = vsel %vm279, %v233, 0
    %v290 = vsel %vm279, %v234, 0
    %v293 = vsel %vm279, %v235, 0
    %v296 = vsel %vm279, %v236, 0
    %v299 = vsel %vm279, %v237, 0
    %v302 = vsel %vm279, %v238, 0
    %304 = vmatprep.subr.bf16.mxu0 0
    %305 = vmatpush1.bf16.msra.mxu0 0
    %306 = vmatprep.subr.bf16.mxu0 0
    %307 = vmatpush1.bf16.msra.mxu0 0
    %308 = vmatprep.subr.bf16.mxu0 0
    %309 = vmatpush1.bf16.msra.mxu0 0
    %310 = vmatprep.subr.bf16.mxu0 0
    %311 = vmatpush1.bf16.msra.mxu0 0
    %312 = vmatprep.subr.bf16.mxu0 0
    %313 = vmatpush1.bf16.msra.mxu0 0
    %314 = vmatprep.subr.bf16.mxu0 0
    %315 = vmatpush1.bf16.msra.mxu0 0
    %316 = vmatprep.subr.bf16.mxu0 %v268
    %317 = vmatpush1.bf16.msra.mxu0 %v267
    %318 = vmatprep.subr.bf16.mxu0 %v264
    %319 = vmatpush1.bf16.msra.mxu0 %v263
    %320 = vmatprep.subr.bf16.mxu0 0
    %321 = vmatpush2.bf16.msra.mxu0 0
    %322 = vmatprep.subr.bf16.mxu0 0
    %323 = vmatpush2.bf16.msra.mxu0 0
    %324 = vmatprep.subr.bf16.mxu0 0
    %325 = vmatpush2.bf16.msra.mxu0 0
    %326 = vmatprep.subr.bf16.mxu0 0
    %327 = vmatpush2.bf16.msra.mxu0 0
    %328 = vmatprep.subr.bf16.mxu0 0
    %329 = vmatpush2.bf16.msra.mxu0 0
    %330 = vmatprep.subr.bf16.mxu0 0
    %331 = vmatpush2.bf16.msra.mxu0 0
    %332 = vmatprep.subr.bf16.mxu0 0
    %333 = vmatpush2.bf16.msra.mxu0 0
    %334 = vmatprep.subr.bf16.mxu0 0
    %335 = vmatpush2.bf16.msra.mxu0 0
    %336 = vmatprep.mubr.bf16.mxu0 0
    %337 = vmatmul.mubr.bf16.gmra.mxu0 %v281
    %v338 = vpop.f32.mrf.mxu0
    %v339 = vadd.f32 %v182, %v338
    %v340 = vpop.f32.mrf.mxu0
    %v341 = vadd.f32 %v186, %v340
    %v342 = vpop.f32.mrf.mxu0
    %v343 = vadd.f32 %v182, %v342
    %v344 = vpop.f32.mrf.mxu0
    %v345 = vadd.f32 %v186, %v344
    %346 = vmatprep.mubr.bf16.mxu0 0
    %347 = vmatmul.mubr.bf16.gmra.mxu0 %v284
    %v348 = vpop.f32.mrf.mxu0
    %v349 = vadd.f32 %v182, %v348
    %v350 = vpop.f32.mrf.mxu0
    %v351 = vadd.f32 %v186, %v350
    %v352 = vpop.f32.mrf.mxu0
    %v353 = vadd.f32 %v182, %v352
    %v354 = vpop.f32.mrf.mxu0
    %v355 = vadd.f32 %v186, %v354
    %356 = vmatprep.mubr.bf16.mxu0 0
    %357 = vmatmul.mubr.bf16.gmra.mxu0 %v287
    %v358 = vpop.f32.mrf.mxu0
    %v359 = vadd.f32 %v182, %v358
    %v360 = vpop.f32.mrf.mxu0
    %v361 = vadd.f32 %v186, %v360
    %v362 = vpop.f32.mrf.mxu0
    %v363 = vadd.f32 %v182, %v362
    %v364 = vpop.f32.mrf.mxu0
    %v365 = vadd.f32 %v186, %v364
    %366 = vmatprep.mubr.bf16.mxu0 0
    %367 = vmatmul.mubr.bf16.gmra.mxu0 %v290
    %v368 = vpop.f32.mrf.mxu0
    %v369 = vadd.f32 %v182, %v368
    %v370 = vpop.f32.mrf.mxu0
    %v371 = vadd.f32 %v186, %v370
    %v372 = vpop.f32.mrf.mxu0
    %v373 = vadd.f32 %v182, %v372
    %v374 = vpop.f32.mrf.mxu0
    %v375 = vadd.f32 %v186, %v374
    %376 = vmatprep.mubr.bf16.mxu0 0
    %377 = vmatmul.mubr.bf16.gmra.mxu0 %v293
    %v378 = vpop.f32.mrf.mxu0
    %v379 = vadd.f32 %v182, %v378
    %v380 = vpop.f32.mrf.mxu0
    %v381 = vadd.f32 %v186, %v380
    %v382 = vpop.f32.mrf.mxu0
    %v383 = vadd.f32 %v182, %v382
    %v384 = vpop.f32.mrf.mxu0
    %v385 = vadd.f32 %v186, %v384
    %386 = vmatprep.mubr.bf16.mxu0 0
    %387 = vmatmul.mubr.bf16.gmra.mxu0 %v296
    %v388 = vpop.f32.mrf.mxu0
    %v389 = vadd.f32 %v182, %v388
    %v390 = vpop.f32.mrf.mxu0
    %v391 = vadd.f32 %v186, %v390
    %v392 = vpop.f32.mrf.mxu0
    %v393 = vadd.f32 %v182, %v392
    %v394 = vpop.f32.mrf.mxu0
    %v395 = vadd.f32 %v186, %v394
    %396 = vmatprep.mubr.bf16.mxu0 0
    %397 = vmatmul.mubr.bf16.gmra.mxu0 %v299
    %v398 = vpop.f32.mrf.mxu0
    %v399 = vadd.f32 %v182, %v398
    %v400 = vpop.f32.mrf.mxu0
    %v401 = vadd.f32 %v186, %v400
    %v402 = vpop.f32.mrf.mxu0
    %v403 = vadd.f32 %v182, %v402
    %v404 = vpop.f32.mrf.mxu0
    %v405 = vadd.f32 %v186, %v404
    %406 = vmatprep.mubr.bf16.mxu0 0
    %407 = vmatmul.mubr.bf16.gmra.mxu0 %v302
    %v408 = vpop.f32.mrf.mxu0
    %v409 = vadd.f32 %v182, %v408
    %v410 = vpop.f32.mrf.mxu0
    %v411 = vadd.f32 %v186, %v410
    %v412 = vpop.f32.mrf.mxu0
    %v413 = vadd.f32 %v182, %v412
    %v414 = vpop.f32.mrf.mxu0
    %v415 = vadd.f32 %v186, %v414
    %416 = vdwg.mxu0
    %417 = vmatprep.subr.bf16.mxu0 0
    %418 = vmatpush1.bf16.msra.mxu0 0
    %419 = vmatprep.subr.bf16.mxu0 0
    %420 = vmatpush1.bf16.msra.mxu0 0
    %421 = vmatprep.subr.bf16.mxu0 0
    %422 = vmatpush1.bf16.msra.mxu0 0
    %423 = vmatprep.subr.bf16.mxu0 0
    %424 = vmatpush1.bf16.msra.mxu0 0
    %425 = vmatprep.subr.bf16.mxu0 0
    %426 = vmatpush1.bf16.msra.mxu0 0
    %427 = vmatprep.subr.bf16.mxu0 0
    %428 = vmatpush1.bf16.msra.mxu0 0
    %429 = vmatprep.subr.bf16.mxu0 %v270
    %430 = vmatpush1.bf16.msra.mxu0 %v269
    %431 = vmatprep.subr.bf16.mxu0 %v266
    %432 = vmatpush1.bf16.msra.mxu0 %v265
    %433 = vmatprep.subr.bf16.mxu0 0
    %434 = vmatpush2.bf16.msra.mxu0 0
    %435 = vmatprep.subr.bf16.mxu0 0
    %436 = vmatpush2.bf16.msra.mxu0 0
    %437 = vmatprep.subr.bf16.mxu0 0
    %438 = vmatpush2.bf16.msra.mxu0 0
    %439 = vmatprep.subr.bf16.mxu0 0
    %440 = vmatpush2.bf16.msra.mxu0 0
    %441 = vmatprep.subr.bf16.mxu0 0
    %442 = vmatpush2.bf16.msra.mxu0 0
    %443 = vmatprep.subr.bf16.mxu0 0
    %444 = vmatpush2.bf16.msra.mxu0 0
    %445 = vmatprep.subr.bf16.mxu0 0
    %446 = vmatpush2.bf16.msra.mxu0 0
    %447 = vmatprep.subr.bf16.mxu0 0
    %448 = vmatpush2.bf16.msra.mxu0 0
    %449 = vmatprep.mubr.bf16.mxu0 0
    %450 = vmatmul.mubr.bf16.gmra.mxu0 %v281
    %v451 = vpop.f32.mrf.mxu0
    %v452 = vadd.f32 %v190, %v451
    %v453 = vpop.f32.mrf.mxu0
    %v454 = vadd.f32 %v194, %v453
    %v455 = vpop.f32.mrf.mxu0
    %v456 = vadd.f32 %v190, %v455
    %v457 = vpop.f32.mrf.mxu0
    %v458 = vadd.f32 %v194, %v457
    %459 = vmatprep.mubr.bf16.mxu0 0
    %460 = vmatmul.mubr.bf16.gmra.mxu0 %v284
    %v461 = vpop.f32.mrf.mxu0
    %v462 = vadd.f32 %v190, %v461
    %v463 = vpop.f32.mrf.mxu0
    %v464 = vadd.f32 %v194, %v463
    %v465 = vpop.f32.mrf.mxu0
    %v466 = vadd.f32 %v190, %v465
    %v467 = vpop.f32.mrf.mxu0
    %v468 = vadd.f32 %v194, %v467
    %469 = vmatprep.mubr.bf16.mxu0 0
    %470 = vmatmul.mubr.bf16.gmra.mxu0 %v287
    %v471 = vpop.f32.mrf.mxu0
    %v472 = vadd.f32 %v190, %v471
    %v473 = vpop.f32.mrf.mxu0
    %v474 = vadd.f32 %v194, %v473
    %v475 = vpop.f32.mrf.mxu0
    %v476 = vadd.f32 %v190, %v475
    %v477 = vpop.f32.mrf.mxu0
    %v478 = vadd.f32 %v194, %v477
    %479 = vmatprep.mubr.bf16.mxu0 0
    %480 = vmatmul.mubr.bf16.gmra.mxu0 %v290
    %v481 = vpop.f32.mrf.mxu0
    %v482 = vadd.f32 %v190, %v481
    %v483 = vpop.f32.mrf.mxu0
    %v484 = vadd.f32 %v194, %v483
    %v485 = vpop.f32.mrf.mxu0
    %v486 = vadd.f32 %v190, %v485
    %v487 = vpop.f32.mrf.mxu0
    %v488 = vadd.f32 %v194, %v487
    %489 = vmatprep.mubr.bf16.mxu0 0
    %490 = vmatmul.mubr.bf16.gmra.mxu0 %v293
    %v491 = vpop.f32.mrf.mxu0
    %v492 = vadd.f32 %v190, %v491
    %v493 = vpop.f32.mrf.mxu0
    %v494 = vadd.f32 %v194, %v493
    %v495 = vpop.f32.mrf.mxu0
    %v496 = vadd.f32 %v190, %v495
    %v497 = vpop.f32.mrf.mxu0
    %v498 = vadd.f32 %v194, %v497
    %499 = vmatprep.mubr.bf16.mxu0 0
    %500 = vmatmul.mubr.bf16.gmra.mxu0 %v296
    %v501 = vpop.f32.mrf.mxu0
    %v502 = vadd.f32 %v190, %v501
    %v503 = vpop.f32.mrf.mxu0
    %v504 = vadd.f32 %v194, %v503
    %v505 = vpop.f32.mrf.mxu0
    %v506 = vadd.f32 %v190, %v505
    %v507 = vpop.f32.mrf.mxu0
    %v508 = vadd.f32 %v194, %v507
    %509 = vmatprep.mubr.bf16.mxu0 0
    %510 = vmatmul.mubr.bf16.gmra.mxu0 %v299
    %v511 = vpop.f32.mrf.mxu0
    %v512 = vadd.f32 %v190, %v511
    %v513 = vpop.f32.mrf.mxu0
    %v514 = vadd.f32 %v194, %v513
    %v515 = vpop.f32.mrf.mxu0
    %v516 = vadd.f32 %v190, %v515
    %v517 = vpop.f32.mrf.mxu0
    %v518 = vadd.f32 %v194, %v517
    %519 = vmatprep.mubr.bf16.mxu0 0
    %520 = vmatmul.mubr.bf16.gmra.mxu0 %v302
    %v521 = vpop.f32.mrf.mxu0
    %v522 = vadd.f32 %v190, %v521
    %v523 = vpop.f32.mrf.mxu0
    %v524 = vadd.f32 %v194, %v523
    %v525 = vpop.f32.mrf.mxu0
    %v526 = vadd.f32 %v190, %v525
    %v527 = vpop.f32.mrf.mxu0
    %v528 = vadd.f32 %v194, %v527
    %529 = vdwg.mxu0
    %530 = vst [vmem:[#allocation2] sm:$0xff] %v339
    %531 = vst [vmem:[#allocation2 + $0x8] sm:$0xff] %v341
    %532 = vst [vmem:[#allocation2 + $0x10] sm:$0xff] %v452
    %533 = vst [vmem:[#allocation2 + $0x18] sm:$0xff] %v454
    %534 = vst [vmem:[#allocation2 + $0x20] sm:$0xff] %v343
    %535 = vst [vmem:[#allocation2 + $0x28] sm:$0xff] %v345
    %536 = vst [vmem:[#allocation2 + $0x30] sm:$0xff] %v456
    %537 = vst [vmem:[#allocation2 + $0x38] sm:$0xff] %v458
    %538 = vst [vmem:[#allocation2 + $0x40] sm:$0xff] %v349
    %539 = vst [vmem:[#allocation2 + $0x48] sm:$0xff] %v351
    %540 = vst [vmem:[#allocation2 + $0x50] sm:$0xff] %v462
    %541 = vst [vmem:[#allocation2 + $0x58] sm:$0xff] %v464
    %542 = vst [vmem:[#allocation2 + $0x60] sm:$0xff] %v353
    %543 = vst [vmem:[#allocation2 + $0x68] sm:$0xff] %v355
    %544 = vst [vmem:[#allocation2 + $0x70] sm:$0xff] %v466
    %545 = vst [vmem:[#allocation2 + $0x78] sm:$0xff] %v468
    %546 = vst [vmem:[#allocation2 + $0x80] sm:$0xff] %v359
    %547 = vst [vmem:[#allocation2 + $0x88] sm:$0xff] %v361
    %548 = vst [vmem:[#allocation2 + $0x90] sm:$0xff] %v472
    %549 = vst [vmem:[#allocation2 + $0x98] sm:$0xff] %v474
    %550 = vst [vmem:[#allocation2 + $0xa0] sm:$0xff] %v363
    %551 = vst [vmem:[#allocation2 + $0xa8] sm:$0xff] %v365
    %552 = vst [vmem:[#allocation2 + $0xb0] sm:$0xff] %v476
    %553 = vst [vmem:[#allocation2 + $0xb8] sm:$0xff] %v478
    %554 = vst [vmem:[#allocation2 + $0xc0] sm:$0xff] %v369
    %555 = vst [vmem:[#allocation2 + $0xc8] sm:$0xff] %v371
    %556 = vst [vmem:[#allocation2 + $0xd0] sm:$0xff] %v482
    %557 = vst [vmem:[#allocation2 + $0xd8] sm:$0xff] %v484
    %558 = vst [vmem:[#allocation2 + $0xe0] sm:$0xff] %v373
    %559 = vst [vmem:[#allocation2 + $0xe8] sm:$0xff] %v375
    %560 = vst [vmem:[#allocation2 + $0xf0] sm:$0xff] %v486
    %561 = vst [vmem:[#allocation2 + $0xf8] sm:$0xff] %v488
    %562 = vst [vmem:[#allocation2 + $0x100] sm:$0xff] %v379
    %563 = vst [vmem:[#allocation2 + $0x108] sm:$0xff] %v381
    %564 = vst [vmem:[#allocation2 + $0x110] sm:$0xff] %v492
    %565 = vst [vmem:[#allocation2 + $0x118] sm:$0xff] %v494
    %566 = vst [vmem:[#allocation2 + $0x120] sm:$0xff] %v383
    %567 = vst [vmem:[#allocation2 + $0x128] sm:$0xff] %v385
    %568 = vst [vmem:[#allocation2 + $0x130] sm:$0xff] %v496
    %569 = vst [vmem:[#allocation2 + $0x138] sm:$0xff] %v498
    %570 = vst [vmem:[#allocation2 + $0x140] sm:$0xff] %v389
    %571 = vst [vmem:[#allocation2 + $0x148] sm:$0xff] %v391
    %572 = vst [vmem:[#allocation2 + $0x150] sm:$0xff] %v502
    %573 = vst [vmem:[#allocation2 + $0x158] sm:$0xff] %v504
    %574 = vst [vmem:[#allocation2 + $0x160] sm:$0xff] %v393
    %575 = vst [vmem:[#allocation2 + $0x168] sm:$0xff] %v395
    %576 = vst [vmem:[#allocation2 + $0x170] sm:$0xff] %v506
    %577 = vst [vmem:[#allocation2 + $0x178] sm:$0xff] %v508
    %578 = vst [vmem:[#allocation2 + $0x180] sm:$0xff] %v399
    %579 = vst [vmem:[#allocation2 + $0x188] sm:$0xff] %v401
    %580 = vst [vmem:[#allocation2 + $0x190] sm:$0xff] %v512
    %581 = vst [vmem:[#allocation2 + $0x198] sm:$0xff] %v514
    %582 = vst [vmem:[#allocation2 + $0x1a0] sm:$0xff] %v403
    %583 = vst [vmem:[#allocation2 + $0x1a8] sm:$0xff] %v405
    %584 = vst [vmem:[#allocation2 + $0x1b0] sm:$0xff] %v516
    %585 = vst [vmem:[#allocation2 + $0x1b8] sm:$0xff] %v518
    %586 = vst [vmem:[#allocation2 + $0x1c0] sm:$0xff] %v409
    %587 = vst [vmem:[#allocation2 + $0x1c8] sm:$0xff] %v411
    %588 = vst [vmem:[#allocation2 + $0x1d0] sm:$0xff] %v522
    %589 = vst [vmem:[#allocation2 + $0x1d8] sm:$0xff] %v524
    %590 = vst [vmem:[#allocation2 + $0x1e0] sm:$0xff] %v413
    %591 = vst [vmem:[#allocation2 + $0x1e8] sm:$0xff] %v415
    %592 = vst [vmem:[#allocation2 + $0x1f0] sm:$0xff] %v526
    %593 = vst [vmem:[#allocation2 + $0x1f8] sm:$0xff] %v528
    %v594 = vld [vmem:[#allocation9] sm:$0xff]
    %v595 = vld [vmem:[#allocation9 + $0x8] sm:$0xff]
    %v596 = vld [vmem:[#allocation9 + $0x10] sm:$0xff]
    %v597 = vld [vmem:[#allocation9 + $0x18] sm:$0xff]
    %v598 = vld [vmem:[#allocation9 + $0x20] sm:$0xff]
    %v599 = vld [vmem:[#allocation9 + $0x28] sm:$0xff]
    %v600 = vld [vmem:[#allocation9 + $0x30] sm:$0xff]
    %v601 = vld [vmem:[#allocation9 + $0x38] sm:$0xff]
    %v602 = vld [vmem:[#allocation9 + $0x40] sm:$0xff]
    %v603 = vld [vmem:[#allocation9 + $0x48] sm:$0xff]
    %v604 = vld [vmem:[#allocation9 + $0x50] sm:$0xff]
    %v605 = vld [vmem:[#allocation9 + $0x58] sm:$0xff]
    %v606 = vld [vmem:[#allocation9 + $0x60] sm:$0xff]
    %v607 = vld [vmem:[#allocation9 + $0x68] sm:$0xff]
    %v608 = vld [vmem:[#allocation9 + $0x70] sm:$0xff]
    %v609 = vld [vmem:[#allocation9 + $0x78] sm:$0xff]
    %v610 = vld [vmem:[#allocation9 + $0x80] sm:$0xff]
    %v611 = vld [vmem:[#allocation9 + $0x88] sm:$0xff]
    %v612 = vld [vmem:[#allocation9 + $0x90] sm:$0xff]
    %v613 = vld [vmem:[#allocation9 + $0x98] sm:$0xff]
    %v614 = vld [vmem:[#allocation9 + $0xa0] sm:$0xff]
    %v615 = vld [vmem:[#allocation9 + $0xa8] sm:$0xff]
    %v616 = vld [vmem:[#allocation9 + $0xb0] sm:$0xff]
    %v617 = vld [vmem:[#allocation9 + $0xb8] sm:$0xff]
    %v618 = vld [vmem:[#allocation9 + $0xc0] sm:$0xff]
    %v619 = vld [vmem:[#allocation9 + $0xc8] sm:$0xff]
    %v620 = vld [vmem:[#allocation9 + $0xd0] sm:$0xff]
    %v621 = vld [vmem:[#allocation9 + $0xd8] sm:$0xff]
    %v622 = vld [vmem:[#allocation9 + $0xe0] sm:$0xff]
    %v623 = vld [vmem:[#allocation9 + $0xe8] sm:$0xff]
    %v624 = vld [vmem:[#allocation9 + $0xf0] sm:$0xff]
    %v625 = vld [vmem:[#allocation9 + $0xf8] sm:$0xff]
    %v658 = vunpack.c.l.b16 %v594
    %v659 = vunpack.c.h.b16 %v594
    %v660 = vunpack.c.l.b16 %v595
    %v661 = vunpack.c.h.b16 %v595
    %v662 = vunpack.c.l.b16 %v596
    %v663 = vunpack.c.h.b16 %v596
    %v664 = vunpack.c.l.b16 %v597
    %v665 = vunpack.c.h.b16 %v597
    %v666 = vunpack.c.l.b16 %v598
    %v667 = vunpack.c.h.b16 %v598
    %v668 = vunpack.c.l.b16 %v599
    %v669 = vunpack.c.h.b16 %v599
    %v670 = vunpack.c.l.b16 %v600
    %v671 = vunpack.c.h.b16 %v600
    %v672 = vunpack.c.l.b16 %v601
    %v673 = vunpack.c.h.b16 %v601
    %v674 = vunpack.c.l.b16 %v602
    %v675 = vunpack.c.h.b16 %v602
    %v676 = vunpack.c.l.b16 %v603
    %v677 = vunpack.c.h.b16 %v603
    %v678 = vunpack.c.l.b16 %v604
    %v679 = vunpack.c.h.b16 %v604
    %v680 = vunpack.c.l.b16 %v605
    %v681 = vunpack.c.h.b16 %v605
    %v682 = vunpack.c.l.b16 %v606
    %v683 = vunpack.c.h.b16 %v606
    %v684 = vunpack.c.l.b16 %v607
    %v685 = vunpack.c.h.b16 %v607
    %v686 = vunpack.c.l.b16 %v608
    %v687 = vunpack.c.h.b16 %v608
    %v688 = vunpack.c.l.b16 %v609
    %v689 = vunpack.c.h.b16 %v609
    %v690 = vunpack.c.l.b16 %v610
    %v691 = vunpack.c.h.b16 %v610
    %v692 = vunpack.c.l.b16 %v611
    %v693 = vunpack.c.h.b16 %v611
    %v694 = vunpack.c.l.b16 %v612
    %v695 = vunpack.c.h.b16 %v612
    %v696 = vunpack.c.l.b16 %v613
    %v697 = vunpack.c.h.b16 %v613
    %v698 = vunpack.c.l.b16 %v614
    %v699 = vunpack.c.h.b16 %v614
    %v700 = vunpack.c.l.b16 %v615
    %v701 = vunpack.c.h.b16 %v615
    %v702 = vunpack.c.l.b16 %v616
    %v703 = vunpack.c.h.b16 %v616
    %v704 = vunpack.c.l.b16 %v617
    %v705 = vunpack.c.h.b16 %v617
    %v706 = vunpack.c.l.b16 %v618
    %v707 = vunpack.c.h.b16 %v618
    %v708 = vunpack.c.l.b16 %v619
    %v709 = vunpack.c.h.b16 %v619
    %v710 = vunpack.c.l.b16 %v620
    %v711 = vunpack.c.h.b16 %v620
    %v712 = vunpack.c.l.b16 %v621
    %v713 = vunpack.c.h.b16 %v621
    %v714 = vunpack.c.l.b16 %v622
    %v715 = vunpack.c.h.b16 %v622
    %v716 = vunpack.c.l.b16 %v623
    %v717 = vunpack.c.h.b16 %v623
    %v718 = vunpack.c.l.b16 %v624
    %v719 = vunpack.c.h.b16 %v624
    %v720 = vunpack.c.l.b16 %v625
    %v721 = vunpack.c.h.b16 %v625
    %v722 = vpack.c.b16 %v662, %v658
    %v723 = vpack.c.b16 %v663, %v659
    %v724 = vpack.c.b16 %v664, %v660
    %v725 = vpack.c.b16 %v665, %v661
    %v726 = vpack.c.b16 %v670, %v666
    %v727 = vpack.c.b16 %v671, %v667
    %v728 = vpack.c.b16 %v672, %v668
    %v729 = vpack.c.b16 %v673, %v669
    %v730 = vpack.c.b16 %v678, %v674
    %v731 = vpack.c.b16 %v679, %v675
    %v732 = vpack.c.b16 %v680, %v676
    %v733 = vpack.c.b16 %v681, %v677
    %v734 = vpack.c.b16 %v686, %v682
    %v735 = vpack.c.b16 %v687, %v683
    %v736 = vpack.c.b16 %v688, %v684
    %v737 = vpack.c.b16 %v689, %v685
    %v738 = vpack.c.b16 %v694, %v690
    %v739 = vpack.c.b16 %v695, %v691
    %v740 = vpack.c.b16 %v696, %v692
    %v741 = vpack.c.b16 %v697, %v693
    %v742 = vpack.c.b16 %v702, %v698
    %v743 = vpack.c.b16 %v703, %v699
    %v744 = vpack.c.b16 %v704, %v700
    %v745 = vpack.c.b16 %v705, %v701
    %v746 = vpack.c.b16 %v710, %v706
    %v747 = vpack.c.b16 %v711, %v707
    %v748 = vpack.c.b16 %v712, %v708
    %v749 = vpack.c.b16 %v713, %v709
    %v750 = vpack.c.b16 %v718, %v714
    %v751 = vpack.c.b16 %v719, %v715
    %v752 = vpack.c.b16 %v720, %v716
    %v753 = vpack.c.b16 %v721, %v717
    %786 = vmatprep.subr.bf16.mxu0 %v751
    %787 = vmatpush1.bf16.msra.mxu0 %v750
    %788 = vmatprep.subr.bf16.mxu0 %v747
    %789 = vmatpush1.bf16.msra.mxu0 %v746
    %790 = vmatprep.subr.bf16.mxu0 %v743
    %791 = vmatpush1.bf16.msra.mxu0 %v742
    %792 = vmatprep.subr.bf16.mxu0 %v739
    %793 = vmatpush1.bf16.msra.mxu0 %v738
    %794 = vmatprep.subr.bf16.mxu0 %v735
    %795 = vmatpush1.bf16.msra.mxu0 %v734
    %796 = vmatprep.subr.bf16.mxu0 %v731
    %797 = vmatpush1.bf16.msra.mxu0 %v730
    %798 = vmatprep.subr.bf16.mxu0 %v727
    %799 = vmatpush1.bf16.msra.mxu0 %v726
    %800 = vmatprep.subr.bf16.mxu0 %v723
    %801 = vmatpush1.bf16.msra.mxu0 %v722
    %802 = vmatprep.subr.bf16.mxu0 0
    %803 = vmatpush2.bf16.msra.mxu0 0
    %804 = vmatprep.subr.bf16.mxu0 0
    %805 = vmatpush2.bf16.msra.mxu0 0
    %806 = vmatprep.subr.bf16.mxu0 0
    %807 = vmatpush2.bf16.msra.mxu0 0
    %808 = vmatprep.subr.bf16.mxu0 0
    %809 = vmatpush2.bf16.msra.mxu0 0
    %810 = vmatprep.subr.bf16.mxu0 0
    %811 = vmatpush2.bf16.msra.mxu0 0
    %812 = vmatprep.subr.bf16.mxu0 0
    %813 = vmatpush2.bf16.msra.mxu0 0
    %814 = vmatprep.subr.bf16.mxu0 0
    %815 = vmatpush2.bf16.msra.mxu0 0
    %816 = vmatprep.subr.bf16.mxu0 0
    %817 = vmatpush2.bf16.msra.mxu0 0
    %818 = vmatprep.mubr.bf16.mxu0 0
    %819 = vmatmul.mubr.bf16.gmra.mxu0 0
    %v820 = vpop.f32.mrf.mxu0
    %v821 = vadd.f32 0.0, %v820
    %v822 = vpop.f32.mrf.mxu0
    %v823 = vadd.f32 0.0, %v822
    %v824 = vpop.f32.mrf.mxu0
    %v825 = vadd.f32 0.0, %v824
    %v826 = vpop.f32.mrf.mxu0
    %v827 = vadd.f32 0.0, %v826
    %828 = vdwg.mxu0
    %829 = vmatprep.subr.bf16.mxu0 %v753
    %830 = vmatpush1.bf16.msra.mxu0 %v752
    %831 = vmatprep.subr.bf16.mxu0 %v749
    %832 = vmatpush1.bf16.msra.mxu0 %v748
    %833 = vmatprep.subr.bf16.mxu0 %v745
    %834 = vmatpush1.bf16.msra.mxu0 %v744
    %835 = vmatprep.subr.bf16.mxu0 %v741
    %836 = vmatpush1.bf16.msra.mxu0 %v740
    %837 = vmatprep.subr.bf16.mxu0 %v737
    %838 = vmatpush1.bf16.msra.mxu0 %v736
    %839 = vmatprep.subr.bf16.mxu0 %v733
    %840 = vmatpush1.bf16.msra.mxu0 %v732
    %841 = vmatprep.subr.bf16.mxu0 %v729
    %842 = vmatpush1.bf16.msra.mxu0 %v728
    %843 = vmatprep.subr.bf16.mxu0 %v725
    %844 = vmatpush1.bf16.msra.mxu0 %v724
    %845 = vmatprep.subr.bf16.mxu0 0
    %846 = vmatpush2.bf16.msra.mxu0 0
    %847 = vmatprep.subr.bf16.mxu0 0
    %848 = vmatpush2.bf16.msra.mxu0 0
    %849 = vmatprep.subr.bf16.mxu0 0
    %850 = vmatpush2.bf16.msra.mxu0 0
    %851 = vmatprep.subr.bf16.mxu0 0
    %852 = vmatpush2.bf16.msra.mxu0 0
    %853 = vmatprep.subr.bf16.mxu0 0
    %854 = vmatpush2.bf16.msra.mxu0 0
    %855 = vmatprep.subr.bf16.mxu0 0
    %856 = vmatpush2.bf16.msra.mxu0 0
    %857 = vmatprep.subr.bf16.mxu0 0
    %858 = vmatpush2.bf16.msra.mxu0 0
    %859 = vmatprep.subr.bf16.mxu0 0
    %860 = vmatpush2.bf16.msra.mxu0 0
    %861 = vmatprep.mubr.bf16.mxu0 0
    %862 = vmatmul.mubr.bf16.gmra.mxu0 0
    %v863 = vpop.f32.mrf.mxu0
    %v864 = vadd.f32 0.0, %v863
    %v865 = vpop.f32.mrf.mxu0
    %v866 = vadd.f32 0.0, %v865
    %v867 = vpop.f32.mrf.mxu0
    %v868 = vadd.f32 0.0, %v867
    %v869 = vpop.f32.mrf.mxu0
    %v870 = vadd.f32 0.0, %v869
    %871 = vdwg.mxu0
    %v872 = vld [vmem:[#allocation2] sm:$0xff]
    %v873 = vld [vmem:[#allocation2 + $0x8] sm:$0xff]
    %v874 = vld [vmem:[#allocation2 + $0x10] sm:$0xff]
    %v875 = vld [vmem:[#allocation2 + $0x18] sm:$0xff]
    %v876 = vld [vmem:[#allocation2 + $0x20] sm:$0xff]
    %v877 = vld [vmem:[#allocation2 + $0x28] sm:$0xff]
    %v878 = vld [vmem:[#allocation2 + $0x30] sm:$0xff]
    %v879 = vld [vmem:[#allocation2 + $0x38] sm:$0xff]
    %v880 = vadd.f32 %v872, %v821
    %v881 = vadd.f32 %v873, %v823
    %v882 = vadd.f32 %v874, %v864
    %v883 = vadd.f32 %v875, %v866
    %v884 = vadd.f32 %v876, %v825
    %v885 = vadd.f32 %v877, %v827
    %v886 = vadd.f32 %v878, %v868
    %v887 = vadd.f32 %v879, %v870
    %v888 = vxor.u32 %v880, 2147483648
    %v889 = vxor.u32 %v881, 2147483648
    %v890 = vxor.u32 %v882, 2147483648
    %v891 = vxor.u32 %v884, 2147483648
    %v892 = vxor.u32 %v885, 2147483648
    %v893 = vxor.u32 %v886, 2147483648
    %v894 = vmul.f32 %v888, 1.442695
    %v895 = vpow.pop %v894
    %v896 = vmul.f32 %v889, 1.442695
    %v897 = vpow.pop %v896
    %v898 = vmul.f32 %v890, 1.442695
    %v899 = vpow.pop %v898
    %v900 = vmul.f32 %v891, 1.442695
    %v901 = vpow.pop %v900
    %v902 = vmul.f32 %v892, 1.442695
    %v903 = vpow.pop %v902
    %v904 = vmul.f32 %v893, 1.442695
    %v905 = vpow.pop %v904
    %v906 = vadd.f32 %v895, 1.0
    %v907 = vadd.f32 %v897, 1.0
    %v908 = vadd.f32 %v899, 1.0
    %v909 = vadd.f32 %v901, 1.0
    %v910 = vadd.f32 %v903, 1.0
    %v911 = vadd.f32 %v905, 1.0
    %v912 = vrcp.pop %v906
    %v913 = vmul.f32 1.0, %v912
    %v914 = vrcp.pop %v907
    %v915 = vmul.f32 1.0, %v914
    %v916 = vrcp.pop %v908
    %v917 = vmul.f32 1.0, %v916
    %v918 = vrcp.pop %v909
    %v919 = vmul.f32 1.0, %v918
    %v920 = vrcp.pop %v910
    %v921 = vmul.f32 1.0, %v920
    %v922 = vrcp.pop %v911
    %v923 = vmul.f32 1.0, %v922
    %v924 = vtanh.pop %v883
    %v925 = vtanh.pop %v887
    %v926 = vmul.f32 %v915, 0.0
    %v927 = vmul.f32 %v921, 0.0
    %v928 = vmul.f32 %v913, %v924
    %v929 = vmul.f32 %v919, %v925
    %v930 = vadd.f32 %v926, %v928
    %v931 = vadd.f32 %v927, %v929
    %v932 = vtanh.pop %v930
    %v933 = vtanh.pop %v931
    %v934 = vmul.f32 %v917, %v932
    %v935 = vmul.f32 %v923, %v933
    %v936 = vld [vmem:[#allocation14] sm:$0xff]
    %v937 = vld [vmem:[#allocation14 + $0x8] sm:$0xff]
    %v938 = vld [vmem:[#allocation14 + $0x10] sm:$0xff]
    %v939 = vld [vmem:[#allocation14 + $0x18] sm:$0xff]
    %v940 = vld [vmem:[#allocation14 + $0x20] sm:$0xff]
    %v941 = vld [vmem:[#allocation14 + $0x28] sm:$0xff]
    %v942 = vld [vmem:[#allocation14 + $0x30] sm:$0xff]
    %v943 = vld [vmem:[#allocation14 + $0x38] sm:$0xff]
    %v944 = vld [vmem:[#allocation14 + $0x40] sm:$0xff]
    %v945 = vld [vmem:[#allocation14 + $0x48] sm:$0xff]
    %v946 = vld [vmem:[#allocation14 + $0x50] sm:$0xff]
    %v947 = vld [vmem:[#allocation14 + $0x58] sm:$0xff]
    %v948 = vld [vmem:[#allocation14 + $0x60] sm:$0xff]
    %v949 = vld [vmem:[#allocation14 + $0x68] sm:$0xff]
    %v950 = vld [vmem:[#allocation14 + $0x70] sm:$0xff]
    %v951 = vld [vmem:[#allocation14 + $0x78] sm:$0xff]
    %v952 = vld [vmem:[#allocation14 + $0x80] sm:$0xff]
    %v953 = vld [vmem:[#allocation14 + $0x88] sm:$0xff]
    %v954 = vld [vmem:[#allocation14 + $0x90] sm:$0xff]
    %v955 = vld [vmem:[#allocation14 + $0x98] sm:$0xff]
    %v956 = vld [vmem:[#allocation14 + $0xa0] sm:$0xff]
    %v957 = vld [vmem:[#allocation14 + $0xa8] sm:$0xff]
    %v958 = vld [vmem:[#allocation14 + $0xb0] sm:$0xff]
    %v959 = vld [vmem:[#allocation14 + $0xb8] sm:$0xff]
    %v960 = vld [vmem:[#allocation14 + $0xc0] sm:$0xff]
    %v961 = vld [vmem:[#allocation14 + $0xc8] sm:$0xff]
    %v962 = vld [vmem:[#allocation14 + $0xd0] sm:$0xff]
    %v963 = vld [vmem:[#allocation14 + $0xd8] sm:$0xff]
    %v964 = vld [vmem:[#allocation14 + $0xe0] sm:$0xff]
    %v965 = vld [vmem:[#allocation14 + $0xe8] sm:$0xff]
    %v966 = vld [vmem:[#allocation14 + $0xf0] sm:$0xff]
    %v967 = vld [vmem:[#allocation14 + $0xf8] sm:$0xff]
    %v1000 = vunpack.c.l.b16 %v936
    %v1001 = vunpack.c.h.b16 %v936
    %v1002 = vunpack.c.l.b16 %v937
    %v1003 = vunpack.c.h.b16 %v937
    %v1004 = vunpack.c.l.b16 %v938
    %v1005 = vunpack.c.h.b16 %v938
    %v1006 = vunpack.c.l.b16 %v939
    %v1007 = vunpack.c.h.b16 %v939
    %v1008 = vunpack.c.l.b16 %v940
    %v1009 = vunpack.c.h.b16 %v940
    %v1010 = vunpack.c.l.b16 %v941
    %v1011 = vunpack.c.h.b16 %v941
    %v1012 = vunpack.c.l.b16 %v942
    %v1013 = vunpack.c.h.b16 %v942
    %v1014 = vunpack.c.l.b16 %v943
    %v1015 = vunpack.c.h.b16 %v943
    %v1016 = vunpack.c.l.b16 %v944
    %v1017 = vunpack.c.h.b16 %v944
    %v1018 = vunpack.c.l.b16 %v945
    %v1019 = vunpack.c.h.b16 %v945
    %v1020 = vunpack.c.l.b16 %v946
    %v1021 = vunpack.c.h.b16 %v946
    %v1022 = vunpack.c.l.b16 %v947
    %v1023 = vunpack.c.h.b16 %v947
    %v1024 = vunpack.c.l.b16 %v948
    %v1025 = vunpack.c.h.b16 %v948
    %v1026 = vunpack.c.l.b16 %v949
    %v1027 = vunpack.c.h.b16 %v949
    %v1028 = vunpack.c.l.b16 %v950
    %v1029 = vunpack.c.h.b16 %v950
    %v1030 = vunpack.c.l.b16 %v951
    %v1031 = vunpack.c.h.b16 %v951
    %v1032 = vunpack.c.l.b16 %v952
    %v1033 = vunpack.c.h.b16 %v952
    %v1034 = vunpack.c.l.b16 %v953
    %v1035 = vunpack.c.h.b16 %v953
    %v1036 = vunpack.c.l.b16 %v954
    %v1037 = vunpack.c.h.b16 %v954
    %v1038 = vunpack.c.l.b16 %v955
    %v1039 = vunpack.c.h.b16 %v955
    %v1040 = vunpack.c.l.b16 %v956
    %v1041 = vunpack.c.h.b16 %v956
    %v1042 = vunpack.c.l.b16 %v957
    %v1043 = vunpack.c.h.b16 %v957
    %v1044 = vunpack.c.l.b16 %v958
    %v1045 = vunpack.c.h.b16 %v958
    %v1046 = vunpack.c.l.b16 %v959
    %v1047 = vunpack.c.h.b16 %v959
    %v1048 = vunpack.c.l.b16 %v960
    %v1049 = vunpack.c.h.b16 %v960
    %v1050 = vunpack.c.l.b16 %v961
    %v1051 = vunpack.c.h.b16 %v961
    %v1052 = vunpack.c.l.b16 %v962
    %v1053 = vunpack.c.h.b16 %v962
    %v1054 = vunpack.c.l.b16 %v963
    %v1055 = vunpack.c.h.b16 %v963
    %v1056 = vunpack.c.l.b16 %v964
    %v1057 = vunpack.c.h.b16 %v964
    %v1058 = vunpack.c.l.b16 %v965
    %v1059 = vunpack.c.h.b16 %v965
    %v1060 = vunpack.c.l.b16 %v966
    %v1061 = vunpack.c.h.b16 %v966
    %v1062 = vunpack.c.l.b16 %v967
    %v1063 = vunpack.c.h.b16 %v967
    %v1064 = vpack.c.b16 %v1004, %v1000
    %v1065 = vpack.c.b16 %v1005, %v1001
    %v1066 = vpack.c.b16 %v1006, %v1002
    %v1067 = vpack.c.b16 %v1007, %v1003
    %v1068 = vpack.c.b16 %v1012, %v1008
    %v1069 = vpack.c.b16 %v1013, %v1009
    %v1070 = vpack.c.b16 %v1014, %v1010
    %v1071 = vpack.c.b16 %v1015, %v1011
    %v1072 = vpack.c.b16 %v1020, %v1016
    %v1073 = vpack.c.b16 %v1021, %v1017
    %v1074 = vpack.c.b16 %v1022, %v1018
    %v1075 = vpack.c.b16 %v1023, %v1019
    %v1076 = vpack.c.b16 %v1028, %v1024
    %v1077 = vpack.c.b16 %v1029, %v1025
    %v1078 = vpack.c.b16 %v1030, %v1026
    %v1079 = vpack.c.b16 %v1031, %v1027
    %v1080 = vpack.c.b16 %v1036, %v1032
    %v1081 = vpack.c.b16 %v1037, %v1033
    %v1082 = vpack.c.b16 %v1038, %v1034
    %v1083 = vpack.c.b16 %v1039, %v1035
    %v1084 = vpack.c.b16 %v1044, %v1040
    %v1085 = vpack.c.b16 %v1045, %v1041
    %v1086 = vpack.c.b16 %v1046, %v1042
    %v1087 = vpack.c.b16 %v1047, %v1043
    %v1088 = vpack.c.b16 %v1052, %v1048
    %v1089 = vpack.c.b16 %v1053, %v1049
    %v1090 = vpack.c.b16 %v1054, %v1050
    %v1091 = vpack.c.b16 %v1055, %v1051
    %v1092 = vpack.c.b16 %v1060, %v1056
    %v1093 = vpack.c.b16 %v1061, %v1057
    %v1094 = vpack.c.b16 %v1062, %v1058
    %v1095 = vpack.c.b16 %v1063, %v1059
    %1128 = vmatprep.subr.bf16.mxu0 %v1093
    %1129 = vmatpush1.bf16.msra.mxu0 %v1092
    %1130 = vmatprep.subr.bf16.mxu0 %v1089
    %1131 = vmatpush1.bf16.msra.mxu0 %v1088
    %1132 = vmatprep.subr.bf16.mxu0 %v1085
    %1133 = vmatpush1.bf16.msra.mxu0 %v1084
    %1134 = vmatprep.subr.bf16.mxu0 %v1081
    %1135 = vmatpush1.bf16.msra.mxu0 %v1080
    %1136 = vmatprep.subr.bf16.mxu0 %v1077
    %1137 = vmatpush1.bf16.msra.mxu0 %v1076
    %1138 = vmatprep.subr.bf16.mxu0 %v1073
    %1139 = vmatpush1.bf16.msra.mxu0 %v1072
    %1140 = vmatprep.subr.bf16.mxu0 %v1069
    %1141 = vmatpush1.bf16.msra.mxu0 %v1068
    %1142 = vmatprep.subr.bf16.mxu0 %v1065
    %1143 = vmatpush1.bf16.msra.mxu0 %v1064
    %1144 = vmatprep.subr.bf16.mxu0 0
    %1145 = vmatpush2.bf16.msra.mxu0 0
    %1146 = vmatprep.subr.bf16.mxu0 0
    %1147 = vmatpush2.bf16.msra.mxu0 0
    %1148 = vmatprep.subr.bf16.mxu0 0
    %1149 = vmatpush2.bf16.msra.mxu0 0
    %1150 = vmatprep.subr.bf16.mxu0 0
    %1151 = vmatpush2.bf16.msra.mxu0 0
    %1152 = vmatprep.subr.bf16.mxu0 0
    %1153 = vmatpush2.bf16.msra.mxu0 0
    %1154 = vmatprep.subr.bf16.mxu0 0
    %1155 = vmatpush2.bf16.msra.mxu0 0
    %1156 = vmatprep.subr.bf16.mxu0 0
    %1157 = vmatpush2.bf16.msra.mxu0 0
    %1158 = vmatprep.subr.bf16.mxu0 0
    %1159 = vmatpush2.bf16.msra.mxu0 0
    %1160 = vmatprep.mubr.bf16.mxu0 0
    %1161 = vmatmul.mubr.bf16.gmra.mxu0 0
    %v1162 = vpop.f32.mrf.mxu0
    %v1163 = vadd.f32 0.0, %v1162
    %v1164 = vpop.f32.mrf.mxu0
    %v1165 = vadd.f32 0.0, %v1164
    %v1166 = vpop.f32.mrf.mxu0
    %v1167 = vadd.f32 0.0, %v1166
    %v1168 = vpop.f32.mrf.mxu0
    %v1169 = vadd.f32 0.0, %v1168
    %1170 = vdwg.mxu0
    %1171 = vmatprep.subr.bf16.mxu0 %v1095
    %1172 = vmatpush1.bf16.msra.mxu0 %v1094
    %1173 = vmatprep.subr.bf16.mxu0 %v1091
    %1174 = vmatpush1.bf16.msra.mxu0 %v1090
    %1175 = vmatprep.subr.bf16.mxu0 %v1087
    %1176 = vmatpush1.bf16.msra.mxu0 %v1086
    %1177 = vmatprep.subr.bf16.mxu0 %v1083
    %1178 = vmatpush1.bf16.msra.mxu0 %v1082
    %1179 = vmatprep.subr.bf16.mxu0 %v1079
    %1180 = vmatpush1.bf16.msra.mxu0 %v1078
    %1181 = vmatprep.subr.bf16.mxu0 %v1075
    %1182 = vmatpush1.bf16.msra.mxu0 %v1074
    %1183 = vmatprep.subr.bf16.mxu0 %v1071
    %1184 = vmatpush1.bf16.msra.mxu0 %v1070
    %1185 = vmatprep.subr.bf16.mxu0 %v1067
    %1186 = vmatpush1.bf16.msra.mxu0 %v1066
    %1187 = vmatprep.subr.bf16.mxu0 0
    %1188 = vmatpush2.bf16.msra.mxu0 0
    %1189 = vmatprep.subr.bf16.mxu0 0
    %1190 = vmatpush2.bf16.msra.mxu0 0
    %1191 = vmatprep.subr.bf16.mxu0 0
    %1192 = vmatpush2.bf16.msra.mxu0 0
    %1193 = vmatprep.subr.bf16.mxu0 0
    %1194 = vmatpush2.bf16.msra.mxu0 0
    %1195 = vmatprep.subr.bf16.mxu0 0
    %1196 = vmatpush2.bf16.msra.mxu0 0
    %1197 = vmatprep.subr.bf16.mxu0 0
    %1198 = vmatpush2.bf16.msra.mxu0 0
    %1199 = vmatprep.subr.bf16.mxu0 0
    %1200 = vmatpush2.bf16.msra.mxu0 0
    %1201 = vmatprep.subr.bf16.mxu0 0
    %1202 = vmatpush2.bf16.msra.mxu0 0
    %1203 = vmatprep.mubr.bf16.mxu0 0
    %1204 = vmatmul.mubr.bf16.gmra.mxu0 0
    %v1205 = vpop.f32.mrf.mxu0
    %v1206 = vadd.f32 0.0, %v1205
    %v1207 = vpop.f32.mrf.mxu0
    %v1208 = vadd.f32 0.0, %v1207
    %v1209 = vpop.f32.mrf.mxu0
    %v1210 = vadd.f32 0.0, %v1209
    %v1211 = vpop.f32.mrf.mxu0
    %v1212 = vadd.f32 0.0, %v1211
    %1213 = vdwg.mxu0
    %v1214 = vpack.c.bf16 %v935, %v934
    %v1215 = vld [vmem:[#allocation12] sm:$0xff]
    %v1216 = vld [vmem:[#allocation12 + $0x8] sm:$0xff]
    %v1217 = vld [vmem:[#allocation12 + $0x10] sm:$0xff]
    %v1218 = vld [vmem:[#allocation12 + $0x18] sm:$0xff]
    %v1219 = vld [vmem:[#allocation12 + $0x20] sm:$0xff]
    %v1220 = vld [vmem:[#allocation12 + $0x28] sm:$0xff]
    %v1221 = vld [vmem:[#allocation12 + $0x30] sm:$0xff]
    %v1222 = vld [vmem:[#allocation12 + $0x38] sm:$0xff]
    %v1223 = vld [vmem:[#allocation12 + $0x40] sm:$0xff]
    %v1224 = vld [vmem:[#allocation12 + $0x48] sm:$0xff]
    %v1225 = vld [vmem:[#allocation12 + $0x50] sm:$0xff]
    %v1226 = vld [vmem:[#allocation12 + $0x58] sm:$0xff]
    %v1227 = vld [vmem:[#allocation12 + $0x60] sm:$0xff]
    %v1228 = vld [vmem:[#allocation12 + $0x68] sm:$0xff]
    %v1229 = vld [vmem:[#allocation12 + $0x70] sm:$0xff]
    %v1230 = vld [vmem:[#allocation12 + $0x78] sm:$0xff]
    %v1231 = vld [vmem:[#allocation12 + $0x80] sm:$0xff]
    %v1232 = vld [vmem:[#allocation12 + $0x88] sm:$0xff]
    %v1233 = vld [vmem:[#allocation12 + $0x90] sm:$0xff]
    %v1234 = vld [vmem:[#allocation12 + $0x98] sm:$0xff]
    %v1235 = vld [vmem:[#allocation12 + $0xa0] sm:$0xff]
    %v1236 = vld [vmem:[#allocation12 + $0xa8] sm:$0xff]
    %v1237 = vld [vmem:[#allocation12 + $0xb0] sm:$0xff]
    %v1238 = vld [vmem:[#allocation12 + $0xb8] sm:$0xff]
    %v1239 = vld [vmem:[#allocation12 + $0xc0] sm:$0xff]
    %v1240 = vld [vmem:[#allocation12 + $0xc8] sm:$0xff]
    %v1241 = vld [vmem:[#allocation12 + $0xd0] sm:$0xff]
    %v1242 = vld [vmem:[#allocation12 + $0xd8] sm:$0xff]
    %v1243 = vld [vmem:[#allocation12 + $0xe0] sm:$0xff]
    %v1244 = vld [vmem:[#allocation12 + $0xe8] sm:$0xff]
    %v1245 = vld [vmem:[#allocation12 + $0xf0] sm:$0xff]
    %v1246 = vld [vmem:[#allocation12 + $0xf8] sm:$0xff]
    %v1279 = vunpack.c.l.b16 %v1215
    %v1280 = vunpack.c.h.b16 %v1215
    %v1281 = vunpack.c.l.b16 %v1216
    %v1282 = vunpack.c.h.b16 %v1216
    %v1283 = vunpack.c.l.b16 %v1217
    %v1284 = vunpack.c.h.b16 %v1217
    %v1285 = vunpack.c.l.b16 %v1218
    %v1286 = vunpack.c.h.b16 %v1218
    %v1287 = vunpack.c.l.b16 %v1219
    %v1288 = vunpack.c.h.b16 %v1219
    %v1289 = vunpack.c.l.b16 %v1220
    %v1290 = vunpack.c.h.b16 %v1220
    %v1291 = vunpack.c.l.b16 %v1221
    %v1292 = vunpack.c.h.b16 %v1221
    %v1293 = vunpack.c.l.b16 %v1222
    %v1294 = vunpack.c.h.b16 %v1222
    %v1295 = vunpack.c.l.b16 %v1223
    %v1296 = vunpack.c.h.b16 %v1223
    %v1297 = vunpack.c.l.b16 %v1224
    %v1298 = vunpack.c.h.b16 %v1224
    %v1299 = vunpack.c.l.b16 %v1225
    %v1300 = vunpack.c.h.b16 %v1225
    %v1301 = vunpack.c.l.b16 %v1226
    %v1302 = vunpack.c.h.b16 %v1226
    %v1303 = vunpack.c.l.b16 %v1227
    %v1304 = vunpack.c.h.b16 %v1227
    %v1305 = vunpack.c.l.b16 %v1228
    %v1306 = vunpack.c.h.b16 %v1228
    %v1307 = vunpack.c.l.b16 %v1229
    %v1308 = vunpack.c.h.b16 %v1229
    %v1309 = vunpack.c.l.b16 %v1230
    %v1310 = vunpack.c.h.b16 %v1230
    %v1311 = vunpack.c.l.b16 %v1231
    %v1312 = vunpack.c.h.b16 %v1231
    %v1313 = vunpack.c.l.b16 %v1232
    %v1314 = vunpack.c.h.b16 %v1232
    %v1315 = vunpack.c.l.b16 %v1233
    %v1316 = vunpack.c.h.b16 %v1233
    %v1317 = vunpack.c.l.b16 %v1234
    %v1318 = vunpack.c.h.b16 %v1234
    %v1319 = vunpack.c.l.b16 %v1235
    %v1320 = vunpack.c.h.b16 %v1235
    %v1321 = vunpack.c.l.b16 %v1236
    %v1322 = vunpack.c.h.b16 %v1236
    %v1323 = vunpack.c.l.b16 %v1237
    %v1324 = vunpack.c.h.b16 %v1237
    %v1325 = vunpack.c.l.b16 %v1238
    %v1326 = vunpack.c.h.b16 %v1238
    %v1327 = vunpack.c.l.b16 %v1239
    %v1328 = vunpack.c.h.b16 %v1239
    %v1329 = vunpack.c.l.b16 %v1240
    %v1330 = vunpack.c.h.b16 %v1240
    %v1331 = vunpack.c.l.b16 %v1241
    %v1332 = vunpack.c.h.b16 %v1241
    %v1333 = vunpack.c.l.b16 %v1242
    %v1334 = vunpack.c.h.b16 %v1242
    %v1335 = vunpack.c.l.b16 %v1243
    %v1336 = vunpack.c.h.b16 %v1243
    %v1337 = vunpack.c.l.b16 %v1244
    %v1338 = vunpack.c.h.b16 %v1244
    %v1339 = vunpack.c.l.b16 %v1245
    %v1340 = vunpack.c.h.b16 %v1245
    %v1341 = vunpack.c.l.b16 %v1246
    %v1342 = vunpack.c.h.b16 %v1246
    %v1343 = vpack.c.b16 %v1283, %v1279
    %v1344 = vpack.c.b16 %v1284, %v1280
    %v1345 = vpack.c.b16 %v1285, %v1281
    %v1346 = vpack.c.b16 %v1286, %v1282
    %v1347 = vpack.c.b16 %v1291, %v1287
    %v1348 = vpack.c.b16 %v1292, %v1288
    %v1349 = vpack.c.b16 %v1293, %v1289
    %v1350 = vpack.c.b16 %v1294, %v1290
    %v1351 = vpack.c.b16 %v1299, %v1295
    %v1352 = vpack.c.b16 %v1300, %v1296
    %v1353 = vpack.c.b16 %v1301, %v1297
    %v1354 = vpack.c.b16 %v1302, %v1298
    %v1355 = vpack.c.b16 %v1307, %v1303
    %v1356 = vpack.c.b16 %v1308, %v1304
    %v1357 = vpack.c.b16 %v1309, %v1305
    %v1358 = vpack.c.b16 %v1310, %v1306
    %v1359 = vpack.c.b16 %v1315, %v1311
    %v1360 = vpack.c.b16 %v1316, %v1312
    %v1361 = vpack.c.b16 %v1317, %v1313
    %v1362 = vpack.c.b16 %v1318, %v1314
    %v1363 = vpack.c.b16 %v1323, %v1319
    %v1364 = vpack.c.b16 %v1324, %v1320
    %v1365 = vpack.c.b16 %v1325, %v1321
    %v1366 = vpack.c.b16 %v1326, %v1322
    %v1367 = vpack.c.b16 %v1331, %v1327
    %v1368 = vpack.c.b16 %v1332, %v1328
    %v1369 = vpack.c.b16 %v1333, %v1329
    %v1370 = vpack.c.b16 %v1334, %v1330
    %v1371 = vpack.c.b16 %v1339, %v1335
    %v1372 = vpack.c.b16 %v1340, %v1336
    %v1373 = vpack.c.b16 %v1341, %v1337
    %v1374 = vpack.c.b16 %v1342, %v1338
    %1407 = vmatprep.subr.bf16.mxu0 %v1372
    %1408 = vmatpush1.bf16.msra.mxu0 %v1371
    %1409 = vmatprep.subr.bf16.mxu0 %v1368
    %1410 = vmatpush1.bf16.msra.mxu0 %v1367
    %1411 = vmatprep.subr.bf16.mxu0 %v1364
    %1412 = vmatpush1.bf16.msra.mxu0 %v1363
    %1413 = vmatprep.subr.bf16.mxu0 %v1360
    %1414 = vmatpush1.bf16.msra.mxu0 %v1359
    %1415 = vmatprep.subr.bf16.mxu0 %v1356
    %1416 = vmatpush1.bf16.msra.mxu0 %v1355
    %1417 = vmatprep.subr.bf16.mxu0 %v1352
    %1418 = vmatpush1.bf16.msra.mxu0 %v1351
    %1419 = vmatprep.subr.bf16.mxu0 %v1348
    %1420 = vmatpush1.bf16.msra.mxu0 %v1347
    %1421 = vmatprep.subr.bf16.mxu0 %v1344
    %1422 = vmatpush1.bf16.msra.mxu0 %v1343
    %1423 = vmatprep.subr.bf16.mxu0 0
    %1424 = vmatpush2.bf16.msra.mxu0 0
    %1425 = vmatprep.subr.bf16.mxu0 0
    %1426 = vmatpush2.bf16.msra.mxu0 0
    %1427 = vmatprep.subr.bf16.mxu0 0
    %1428 = vmatpush2.bf16.msra.mxu0 0
    %1429 = vmatprep.subr.bf16.mxu0 0
    %1430 = vmatpush2.bf16.msra.mxu0 0
    %1431 = vmatprep.subr.bf16.mxu0 0
    %1432 = vmatpush2.bf16.msra.mxu0 0
    %1433 = vmatprep.subr.bf16.mxu0 0
    %1434 = vmatpush2.bf16.msra.mxu0 0
    %1435 = vmatprep.subr.bf16.mxu0 0
    %1436 = vmatpush2.bf16.msra.mxu0 0
    %1437 = vmatprep.subr.bf16.mxu0 0
    %1438 = vmatpush2.bf16.msra.mxu0 0
    %1439 = vmatprep.mubr.bf16.mxu0 0
    %1440 = vmatmul.mubr.bf16.gmra.mxu0 %v1214
    %v1441 = vpop.f32.mrf.mxu0
    %v1442 = vadd.f32 %v1163, %v1441
    %v1443 = vpop.f32.mrf.mxu0
    %v1444 = vadd.f32 %v1165, %v1443
    %v1445 = vpop.f32.mrf.mxu0
    %v1446 = vadd.f32 %v1167, %v1445
    %v1447 = vpop.f32.mrf.mxu0
    %v1448 = vadd.f32 %v1169, %v1447
    %1449 = vdwg.mxu0
    %1450 = vmatprep.subr.bf16.mxu0 %v1374
    %1451 = vmatpush1.bf16.msra.mxu0 %v1373
    %1452 = vmatprep.subr.bf16.mxu0 %v1370
    %1453 = vmatpush1.bf16.msra.mxu0 %v1369
    %1454 = vmatprep.subr.bf16.mxu0 %v1366
    %1455 = vmatpush1.bf16.msra.mxu0 %v1365
    %1456 = vmatprep.subr.bf16.mxu0 %v1362
    %1457 = vmatpush1.bf16.msra.mxu0 %v1361
    %1458 = vmatprep.subr.bf16.mxu0 %v1358
    %1459 = vmatpush1.bf16.msra.mxu0 %v1357
    %1460 = vmatprep.subr.bf16.mxu0 %v1354
    %1461 = vmatpush1.bf16.msra.mxu0 %v1353
    %1462 = vmatprep.subr.bf16.mxu0 %v1350
    %1463 = vmatpush1.bf16.msra.mxu0 %v1349
    %1464 = vmatprep.subr.bf16.mxu0 %v1346
    %1465 = vmatpush1.bf16.msra.mxu0 %v1345
    %1466 = vmatprep.subr.bf16.mxu0 0
    %1467 = vmatpush2.bf16.msra.mxu0 0
    %1468 = vmatprep.subr.bf16.mxu0 0
    %1469 = vmatpush2.bf16.msra.mxu0 0
    %1470 = vmatprep.subr.bf16.mxu0 0
    %1471 = vmatpush2.bf16.msra.mxu0 0
    %1472 = vmatprep.subr.bf16.mxu0 0
    %1473 = vmatpush2.bf16.msra.mxu0 0
    %1474 = vmatprep.subr.bf16.mxu0 0
    %1475 = vmatpush2.bf16.msra.mxu0 0
    %1476 = vmatprep.subr.bf16.mxu0 0
    %1477 = vmatpush2.bf16.msra.mxu0 0
    %1478 = vmatprep.subr.bf16.mxu0 0
    %1479 = vmatpush2.bf16.msra.mxu0 0
    %1480 = vmatprep.subr.bf16.mxu0 0
    %1481 = vmatpush2.bf16.msra.mxu0 0
    %1482 = vmatprep.mubr.bf16.mxu0 0
    %1483 = vmatmul.mubr.bf16.gmra.mxu0 %v1214
    %v1484 = vpop.f32.mrf.mxu0
    %v1485 = vadd.f32 %v1206, %v1484
    %v1486 = vpop.f32.mrf.mxu0
    %v1487 = vadd.f32 %v1208, %v1486
    %v1488 = vpop.f32.mrf.mxu0
    %v1489 = vadd.f32 %v1210, %v1488
    %v1490 = vpop.f32.mrf.mxu0
    %v1491 = vadd.f32 %v1212, %v1490
    %1492 = vdwg.mxu0
    %v1493 = vld [vmem:[#allocation15] sm:$0xf]
    %v1495 = vlaneseq
    %v1496 = vshrl.u32 %v1495, 7
    %v1497 = vsub.s32 0, %v1496
    %v1498 = vrot.slane %v1493, %v1497
    %v1499 = vlaneseq
    %v1500 = vshrl.u32 %v1499, 7
    %v1501 = vsub.s32 1, %v1500
    %v1502 = vrot.slane %v1493, %v1501
    %v1503 = vlaneseq
    %v1504 = vshrl.u32 %v1503, 7
    %v1505 = vsub.s32 2, %v1504
    %v1506 = vrot.slane %v1493, %v1505
    %v1507 = vlaneseq
    %v1508 = vshrl.u32 %v1507, 7
    %v1509 = vsub.s32 3, %v1508
    %v1510 = vrot.slane %v1493, %v1509
    %v1515 = vadd.f32 %v1442, %v1498
    %v1516 = vadd.f32 %v1444, %v1502
    %v1517 = vadd.f32 %v1485, %v1506
    %v1518 = vadd.f32 %v1487, %v1510
    %v1519 = vadd.f32 %v1446, %v1498
    %v1520 = vadd.f32 %v1448, %v1502
    %v1521 = vadd.f32 %v1489, %v1506
    %v1522 = vadd.f32 %v1491, %v1510
    %v1523 = vxor.u32 %v1515, 2147483648
    %v1524 = vxor.u32 %v1516, 2147483648
    %v1525 = vxor.u32 %v1517, 2147483648
    %v1526 = vxor.u32 %v1519, 2147483648
    %v1527 = vxor.u32 %v1520, 2147483648
    %v1528 = vxor.u32 %v1521, 2147483648
    %v1529 = vmul.f32 %v1523, 1.442695
    %v1530 = vpow.pop %v1529
    %v1531 = vmul.f32 %v1524, 1.442695
    %v1532 = vpow.pop %v1531
    %v1533 = vmul.f32 %v1525, 1.442695
    %v1534 = vpow.pop %v1533
    %v1535 = vmul.f32 %v1526, 1.442695
    %v1536 = vpow.pop %v1535
    %v1537 = vmul.f32 %v1527, 1.442695
    %v1538 = vpow.pop %v1537
    %v1539 = vmul.f32 %v1528, 1.442695
    %v1540 = vpow.pop %v1539
    %v1541 = vadd.f32 %v1530, 1.0
    %v1542 = vadd.f32 %v1532, 1.0
    %v1543 = vadd.f32 %v1534, 1.0
    %v1544 = vadd.f32 %v1536, 1.0
    %v1545 = vadd.f32 %v1538, 1.0
    %v1546 = vadd.f32 %v1540, 1.0
    %v1547 = vrcp.pop %v1541
    %v1548 = vmul.f32 1.0, %v1547
    %v1549 = vrcp.pop %v1542
    %v1550 = vmul.f32 1.0, %v1549
    %v1551 = vrcp.pop %v1543
    %v1552 = vmul.f32 1.0, %v1551
    %v1553 = vrcp.pop %v1544
    %v1554 = vmul.f32 1.0, %v1553
    %v1555 = vrcp.pop %v1545
    %v1556 = vmul.f32 1.0, %v1555
    %v1557 = vrcp.pop %v1546
    %v1558 = vmul.f32 1.0, %v1557
    %v1559 = vtanh.pop %v1518
    %v1560 = vtanh.pop %v1522
    %v1561 = vmul.f32 %v1550, 0.0
    %v1562 = vmul.f32 %v1556, 0.0
    %v1563 = vmul.f32 %v1548, %v1559
    %v1564 = vmul.f32 %v1554, %v1560
    %v1565 = vadd.f32 %v1561, %v1563
    %v1566 = vadd.f32 %v1562, %v1564
    %v1567 = vtanh.pop %v1565
    %v1568 = vtanh.pop %v1566
    %v1569 = vmul.f32 %v1552, %v1567
    %v1570 = vmul.f32 %v1558, %v1568
    %vm1571 = vcmp.eq.s32.totalorder %v151, 0
    %vm1572 = vcmp.eq.s32.totalorder %v152, 0
    %v1573 = vsel %vm1571, 1, 0
    %v1574 = vsel %vm1572, 1, 0
    %1575 = vset.pattern.permute.xlu0 0
    %1576 = vperm.xlu0 %1575, %v1573
    %v1577 = vpop.permute.xlu0 %1576
    %1578 = vset.pattern.permute.xlu0 0
    %1579 = vperm.xlu0 %1578, %v1574
    %v1580 = vpop.permute.xlu0 %1579
    %vm1581 = vcmp.eq.s32.totalorder %v1577, 1
    %vm1582 = vcmp.eq.s32.totalorder %v1580, 1
    %v1583 = vsel %vm1581, %v1569, 0.0
    %v1584 = vsel %vm1582, %v1570, 0.0
    %1585 = vmatprep.subr.bf16.mxu0 %v751
    %1586 = vmatpush1.bf16.msra.mxu0 %v750
    %1587 = vmatprep.subr.bf16.mxu0 %v747
    %1588 = vmatpush1.bf16.msra.mxu0 %v746
    %1589 = vmatprep.subr.bf16.mxu0 %v743
    %1590 = vmatpush1.bf16.msra.mxu0 %v742
    %1591 = vmatprep.subr.bf16.mxu0 %v739
    %1592 = vmatpush1.bf16.msra.mxu0 %v738
    %1593 = vmatprep.subr.bf16.mxu0 %v735
    %1594 = vmatpush1.bf16.msra.mxu0 %v734
    %1595 = vmatprep.subr.bf16.mxu0 %v731
    %1596 = vmatpush1.bf16.msra.mxu0 %v730
    %1597 = vmatprep.subr.bf16.mxu0 %v727
    %1598 = vmatpush1.bf16.msra.mxu0 %v726
    %1599 = vmatprep.subr.bf16.mxu0 %v723
    %1600 = vmatpush1.bf16.msra.mxu0 %v722
    %1601 = vmatprep.subr.bf16.mxu0 0
    %1602 = vmatpush2.bf16.msra.mxu0 0
    %1603 = vmatprep.subr.bf16.mxu0 0
    %1604 = vmatpush2.bf16.msra.mxu0 0
    %1605 = vmatprep.subr.bf16.mxu0 0
    %1606 = vmatpush2.bf16.msra.mxu0 0
    %1607 = vmatprep.subr.bf16.mxu0 0
    %1608 = vmatpush2.bf16.msra.mxu0 0
    %1609 = vmatprep.subr.bf16.mxu0 0
    %1610 = vmatpush2.bf16.msra.mxu0 0
    %1611 = vmatprep.subr.bf16.mxu0 0
    %1612 = vmatpush2.bf16.msra.mxu0 0
    %1613 = vmatprep.subr.bf16.mxu0 0
    %1614 = vmatpush2.bf16.msra.mxu0 0
    %1615 = vmatprep.subr.bf16.mxu0 0
    %1616 = vmatpush2.bf16.msra.mxu0 0
    %1617 = vmatprep.mubr.bf16.mxu0 0
    %1618 = vmatmul.mubr.bf16.gmra.mxu0 %v1214
    %v1619 = vpop.f32.mrf.mxu0
    %v1620 = vadd.f32 0.0, %v1619
    %v1621 = vpop.f32.mrf.mxu0
    %v1622 = vadd.f32 0.0, %v1621
    %v1623 = vpop.f32.mrf.mxu0
    %v1624 = vadd.f32 0.0, %v1623
    %v1625 = vpop.f32.mrf.mxu0
    %v1626 = vadd.f32 0.0, %v1625
    %1627 = vdwg.mxu0
    %1628 = vmatprep.subr.bf16.mxu0 %v753
    %1629 = vmatpush1.bf16.msra.mxu0 %v752
    %1630 = vmatprep.subr.bf16.mxu0 %v749
    %1631 = vmatpush1.bf16.msra.mxu0 %v748
    %1632 = vmatprep.subr.bf16.mxu0 %v745
    %1633 = vmatpush1.bf16.msra.mxu0 %v744
    %1634 = vmatprep.subr.bf16.mxu0 %v741
    %1635 = vmatpush1.bf16.msra.mxu0 %v740
    %1636 = vmatprep.subr.bf16.mxu0 %v737
    %1637 = vmatpush1.bf16.msra.mxu0 %v736
    %1638 = vmatprep.subr.bf16.mxu0 %v733
    %1639 = vmatpush1.bf16.msra.mxu0 %v732
    %1640 = vmatprep.subr.bf16.mxu0 %v729
    %1641 = vmatpush1.bf16.msra.mxu0 %v728
    %1642 = vmatprep.subr.bf16.mxu0 %v725
    %1643 = vmatpush1.bf16.msra.mxu0 %v724
    %1644 = vmatprep.subr.bf16.mxu0 0
    %1645 = vmatpush2.bf16.msra.mxu0 0
    %1646 = vmatprep.subr.bf16.mxu0 0
    %1647 = vmatpush2.bf16.msra.mxu0 0
    %1648 = vmatprep.subr.bf16.mxu0 0
    %1649 = vmatpush2.bf16.msra.mxu0 0
    %1650 = vmatprep.subr.bf16.mxu0 0
    %1651 = vmatpush2.bf16.msra.mxu0 0
    %1652 = vmatprep.subr.bf16.mxu0 0
    %1653 = vmatpush2.bf16.msra.mxu0 0
    %1654 = vmatprep.subr.bf16.mxu0 0
    %1655 = vmatpush2.bf16.msra.mxu0 0
    %1656 = vmatprep.subr.bf16.mxu0 0
    %1657 = vmatpush2.bf16.msra.mxu0 0
    %1658 = vmatprep.subr.bf16.mxu0 0
    %1659 = vmatpush2.bf16.msra.mxu0 0
    %1660 = vmatprep.mubr.bf16.mxu0 0
    %1661 = vmatmul.mubr.bf16.gmra.mxu0 %v1214
    %v1662 = vpop.f32.mrf.mxu0
    %v1663 = vadd.f32 0.0, %v1662
    %v1664 = vpop.f32.mrf.mxu0
    %v1665 = vadd.f32 0.0, %v1664
    %v1666 = vpop.f32.mrf.mxu0
    %v1667 = vadd.f32 0.0, %v1666
    %v1668 = vpop.f32.mrf.mxu0
    %v1669 = vadd.f32 0.0, %v1668
    %1670 = vdwg.mxu0
    %v1671 = vld [vmem:[#allocation2 + $0x40] sm:$0xff]
    %v1672 = vld [vmem:[#allocation2 + $0x48] sm:$0xff]
    %v1673 = vld [vmem:[#allocation2 + $0x50] sm:$0xff]
    %v1674 = vld [vmem:[#allocation2 + $0x58] sm:$0xff]
    %v1675 = vld [vmem:[#allocation2 + $0x60] sm:$0xff]
    %v1676 = vld [vmem:[#allocation2 + $0x68] sm:$0xff]
    %v1677 = vld [vmem:[#allocation2 + $0x70] sm:$0xff]
    %v1678 = vld [vmem:[#allocation2 + $0x78] sm:$0xff]
    %v1679 = vadd.f32 %v1671, %v1620
    %v1680 = vadd.f32 %v1672, %v1622
    %v1681 = vadd.f32 %v1673, %v1663
    %v1682 = vadd.f32 %v1674, %v1665
    %v1683 = vadd.f32 %v1675, %v1624
    %v1684 = vadd.f32 %v1676, %v1626
    %v1685 = vadd.f32 %v1677, %v1667
    %v1686 = vadd.f32 %v1678, %v1669
    %v1687 = vxor.u32 %v1679, 2147483648
    %v1688 = vxor.u32 %v1680, 2147483648
    %v1689 = vxor.u32 %v1681, 2147483648
    %v1690 = vxor.u32 %v1683, 2147483648
    %v1691 = vxor.u32 %v1684, 2147483648
    %v1692 = vxor.u32 %v1685, 2147483648
    %v1693 = vmul.f32 %v1687, 1.442695
    %v1694 = vpow.pop %v1693
    %v1695 = vmul.f32 %v1688, 1.442695
    %v1696 = vpow.pop %v1695
    %v1697 = vmul.f32 %v1689, 1.442695
    %v1698 = vpow.pop %v1697
    %v1699 = vmul.f32 %v1690, 1.442695
    %v1700 = vpow.pop %v1699
    %v1701 = vmul.f32 %v1691, 1.442695
    %v1702 = vpow.pop %v1701
    %v1703 = vmul.f32 %v1692, 1.442695
    %v1704 = vpow.pop %v1703
    %v1705 = vadd.f32 %v1694, 1.0
    %v1706 = vadd.f32 %v1696, 1.0
    %v1707 = vadd.f32 %v1698, 1.0
    %v1708 = vadd.f32 %v1700, 1.0
    %v1709 = vadd.f32 %v1702, 1.0
    %v1710 = vadd.f32 %v1704, 1.0
    %v1711 = vrcp.pop %v1705
    %v1712 = vmul.f32 1.0, %v1711
    %v1713 = vrcp.pop %v1706
    %v1714 = vmul.f32 1.0, %v1713
    %v1715 = vrcp.pop %v1707
    %v1716 = vmul.f32 1.0, %v1715
    %v1717 = vrcp.pop %v1708
    %v1718 = vmul.f32 1.0, %v1717
    %v1719 = vrcp.pop %v1709
    %v1720 = vmul.f32 1.0, %v1719
    %v1721 = vrcp.pop %v1710
    %v1722 = vmul.f32 1.0, %v1721
    %v1723 = vtanh.pop %v1682
    %v1724 = vtanh.pop %v1686
    %v1725 = vmul.f32 %v1714, %v930
    %v1726 = vmul.f32 %v1720, %v931
    %v1727 = vmul.f32 %v1712, %v1723
    %v1728 = vmul.f32 %v1718, %v1724
    %v1729 = vadd.f32 %v1725, %v1727
    %v1730 = vadd.f32 %v1726, %v1728
    %v1731 = vtanh.pop %v1729
    %v1732 = vtanh.pop %v1730
    %v1733 = vmul.f32 %v1716, %v1731
    %v1734 = vmul.f32 %v1722, %v1732
    %v1735 = vpack.c.bf16 %v1570, %v1569
    %1736 = vmatprep.subr.bf16.mxu0 %v1093
    %1737 = vmatpush1.bf16.msra.mxu0 %v1092
    %1738 = vmatprep.subr.bf16.mxu0 %v1089
    %1739 = vmatpush1.bf16.msra.mxu0 %v1088
    %1740 = vmatprep.subr.bf16.mxu0 %v1085
    %1741 = vmatpush1.bf16.msra.mxu0 %v1084
    %1742 = vmatprep.subr.bf16.mxu0 %v1081
    %1743 = vmatpush1.bf16.msra.mxu0 %v1080
    %1744 = vmatprep.subr.bf16.mxu0 %v1077
    %1745 = vmatpush1.bf16.msra.mxu0 %v1076
    %1746 = vmatprep.subr.bf16.mxu0 %v1073
    %1747 = vmatpush1.bf16.msra.mxu0 %v1072
    %1748 = vmatprep.subr.bf16.mxu0 %v1069
    %1749 = vmatpush1.bf16.msra.mxu0 %v1068
    %1750 = vmatprep.subr.bf16.mxu0 %v1065
    %1751 = vmatpush1.bf16.msra.mxu0 %v1064
    %1752 = vmatprep.subr.bf16.mxu0 0
    %1753 = vmatpush2.bf16.msra.mxu0 0
    %1754 = vmatprep.subr.bf16.mxu0 0
    %1755 = vmatpush2.bf16.msra.mxu0 0
    %1756 = vmatprep.subr.bf16.mxu0 0
    %1757 = vmatpush2.bf16.msra.mxu0 0
    %1758 = vmatprep.subr.bf16.mxu0 0
    %1759 = vmatpush2.bf16.msra.mxu0 0
    %1760 = vmatprep.subr.bf16.mxu0 0
    %1761 = vmatpush2.bf16.msra.mxu0 0
    %1762 = vmatprep.subr.bf16.mxu0 0
    %1763 = vmatpush2.bf16.msra.mxu0 0
    %1764 = vmatprep.subr.bf16.mxu0 0
    %1765 = vmatpush2.bf16.msra.mxu0 0
    %1766 = vmatprep.subr.bf16.mxu0 0
    %1767 = vmatpush2.bf16.msra.mxu0 0
    %1768 = vmatprep.mubr.bf16.mxu0 0
    %1769 = vmatmul.mubr.bf16.gmra.mxu0 %v1735
    %v1770 = vpop.f32.mrf.mxu0
    %v1771 = vadd.f32 0.0, %v1770
    %v1772 = vpop.f32.mrf.mxu0
    %v1773 = vadd.f32 0.0, %v1772
    %v1774 = vpop.f32.mrf.mxu0
    %v1775 = vadd.f32 0.0, %v1774
    %v1776 = vpop.f32.mrf.mxu0
    %v1777 = vadd.f32 0.0, %v1776
    %1778 = vdwg.mxu0
    %1779 = vmatprep.subr.bf16.mxu0 %v1095
    %1780 = vmatpush1.bf16.msra.mxu0 %v1094
    %1781 = vmatprep.subr.bf16.mxu0 %v1091
    %1782 = vmatpush1.bf16.msra.mxu0 %v1090
    %1783 = vmatprep.subr.bf16.mxu0 %v1087
    %1784 = vmatpush1.bf16.msra.mxu0 %v1086
    %1785 = vmatprep.subr.bf16.mxu0 %v1083
    %1786 = vmatpush1.bf16.msra.mxu0 %v1082
    %1787 = vmatprep.subr.bf16.mxu0 %v1079
    %1788 = vmatpush1.bf16.msra.mxu0 %v1078
    %1789 = vmatprep.subr.bf16.mxu0 %v1075
    %1790 = vmatpush1.bf16.msra.mxu0 %v1074
    %1791 = vmatprep.subr.bf16.mxu0 %v1071
    %1792 = vmatpush1.bf16.msra.mxu0 %v1070
    %1793 = vmatprep.subr.bf16.mxu0 %v1067
    %1794 = vmatpush1.bf16.msra.mxu0 %v1066
    %1795 = vmatprep.subr.bf16.mxu0 0
    %1796 = vmatpush2.bf16.msra.mxu0 0
    %1797 = vmatprep.subr.bf16.mxu0 0
    %1798 = vmatpush2.bf16.msra.mxu0 0
    %1799 = vmatprep.subr.bf16.mxu0 0
    %1800 = vmatpush2.bf16.msra.mxu0 0
    %1801 = vmatprep.subr.bf16.mxu0 0
    %1802 = vmatpush2.bf16.msra.mxu0 0
    %1803 = vmatprep.subr.bf16.mxu0 0
    %1804 = vmatpush2.bf16.msra.mxu0 0
    %1805 = vmatprep.subr.bf16.mxu0 0
    %1806 = vmatpush2.bf16.msra.mxu0 0
    %1807 = vmatprep.subr.bf16.mxu0 0
    %1808 = vmatpush2.bf16.msra.mxu0 0
    %1809 = vmatprep.subr.bf16.mxu0 0
    %1810 = vmatpush2.bf16.msra.mxu0 0
    %1811 = vmatprep.mubr.bf16.mxu0 0
    %1812 = vmatmul.mubr.bf16.gmra.mxu0 %v1735
    %v1813 = vpop.f32.mrf.mxu0
    %v1814 = vadd.f32 0.0, %v1813
    %v1815 = vpop.f32.mrf.mxu0
    %v1816 = vadd.f32 0.0, %v1815
    %v1817 = vpop.f32.mrf.mxu0
    %v1818 = vadd.f32 0.0, %v1817
    %v1819 = vpop.f32.mrf.mxu0
    %v1820 = vadd.f32 0.0, %v1819
    %1821 = vdwg.mxu0
    %v1822 = vpack.c.bf16 %v1734, %v1733
    %1823 = vmatprep.subr.bf16.mxu0 %v1372
    %1824 = vmatpush1.bf16.msra.mxu0 %v1371
    %1825 = vmatprep.subr.bf16.mxu0 %v1368
    %1826 = vmatpush1.bf16.msra.mxu0 %v1367
    %1827 = vmatprep.subr.bf16.mxu0 %v1364
    %1828 = vmatpush1.bf16.msra.mxu0 %v1363
    %1829 = vmatprep.subr.bf16.mxu0 %v1360
    %1830 = vmatpush1.bf16.msra.mxu0 %v1359
    %1831 = vmatprep.subr.bf16.mxu0 %v1356
    %1832 = vmatpush1.bf16.msra.mxu0 %v1355
    %1833 = vmatprep.subr.bf16.mxu0 %v1352
    %1834 = vmatpush1.bf16.msra.mxu0 %v1351
    %1835 = vmatprep.subr.bf16.mxu0 %v1348
    %1836 = vmatpush1.bf16.msra.mxu0 %v1347
    %1837 = vmatprep.subr.bf16.mxu0 %v1344
    %1838 = vmatpush1.bf16.msra.mxu0 %v1343
    %1839 = vmatprep.subr.bf16.mxu0 0
    %1840 = vmatpush2.bf16.msra.mxu0 0
    %1841 = vmatprep.subr.bf16.mxu0 0
    %1842 = vmatpush2.bf16.msra.mxu0 0
    %1843 = vmatprep.subr.bf16.mxu0 0
    %1844 = vmatpush2.bf16.msra.mxu0 0
    %1845 = vmatprep.subr.bf16.mxu0 0
    %1846 = vmatpush2.bf16.msra.mxu0 0
    %1847 = vmatprep.subr.bf16.mxu0 0
    %1848 = vmatpush2.bf16.msra.mxu0 0
    %1849 = vmatprep.subr.bf16.mxu0 0
    %1850 = vmatpush2.bf16.msra.mxu0 0
    %1851 = vmatprep.subr.bf16.mxu0 0
    %1852 = vmatpush2.bf16.msra.mxu0 0
    %1853 = vmatprep.subr.bf16.mxu0 0
    %1854 = vmatpush2.bf16.msra.mxu0 0
    %1855 = vmatprep.mubr.bf16.mxu0 0
    %1856 = vmatmul.mubr.bf16.gmra.mxu0 %v1822
    %v1857 = vpop.f32.mrf.mxu0
    %v1858 = vadd.f32 %v1771, %v1857
    %v1859 = vpop.f32.mrf.mxu0
    %v1860 = vadd.f32 %v1773, %v1859
    %v1861 = vpop.f32.mrf.mxu0
    %v1862 = vadd.f32 %v1775, %v1861
    %v1863 = vpop.f32.mrf.mxu0
    %v1864 = vadd.f32 %v1777, %v1863
    %1865 = vdwg.mxu0
    %1866 = vmatprep.subr.bf16.mxu0 %v1374
    %1867 = vmatpush1.bf16.msra.mxu0 %v1373
    %1868 = vmatprep.subr.bf16.mxu0 %v1370
    %1869 = vmatpush1.bf16.msra.mxu0 %v1369
    %1870 = vmatprep.subr.bf16.mxu0 %v1366
    %1871 = vmatpush1.bf16.msra.mxu0 %v1365
    %1872 = vmatprep.subr.bf16.mxu0 %v1362
    %1873 = vmatpush1.bf16.msra.mxu0 %v1361
    %1874 = vmatprep.subr.bf16.mxu0 %v1358
    %1875 = vmatpush1.bf16.msra.mxu0 %v1357
    %1876 = vmatprep.subr.bf16.mxu0 %v1354
    %1877 = vmatpush1.bf16.msra.mxu0 %v1353
    %1878 = vmatprep.subr.bf16.mxu0 %v1350
    %1879 = vmatpush1.bf16.msra.mxu0 %v1349
    %1880 = vmatprep.subr.bf16.mxu0 %v1346
    %1881 = vmatpush1.bf16.msra.mxu0 %v1345
    %1882 = vmatprep.subr.bf16.mxu0 0
    %1883 = vmatpush2.bf16.msra.mxu0 0
    %1884 = vmatprep.subr.bf16.mxu0 0
    %1885 = vmatpush2.bf16.msra.mxu0 0
    %1886 = vmatprep.subr.bf16.mxu0 0
    %1887 = vmatpush2.bf16.msra.mxu0 0
    %1888 = vmatprep.subr.bf16.mxu0 0
    %1889 = vmatpush2.bf16.msra.mxu0 0
    %1890 = vmatprep.subr.bf16.mxu0 0
    %1891 = vmatpush2.bf16.msra.mxu0 0
    %1892 = vmatprep.subr.bf16.mxu0 0
    %1893 = vmatpush2.bf16.msra.mxu0 0
    %1894 = vmatprep.subr.bf16.mxu0 0
    %1895 = vmatpush2.bf16.msra.mxu0 0
    %1896 = vmatprep.subr.bf16.mxu0 0
    %1897 = vmatpush2.bf16.msra.mxu0 0
    %1898 = vmatprep.mubr.bf16.mxu0 0
    %1899 = vmatmul.mubr.bf16.gmra.mxu0 %v1822
    %v1900 = vpop.f32.mrf.mxu0
    %v1901 = vadd.f32 %v1814, %v1900
    %v1902 = vpop.f32.mrf.mxu0
    %v1903 = vadd.f32 %v1816, %v1902
    %v1904 = vpop.f32.mrf.mxu0
    %v1905 = vadd.f32 %v1818, %v1904
    %v1906 = vpop.f32.mrf.mxu0
    %v1907 = vadd.f32 %v1820, %v1906
    %1908 = vdwg.mxu0
    %v1909 = vadd.f32 %v1858, %v1498
    %v1910 = vadd.f32 %v1860, %v1502
    %v1911 = vadd.f32 %v1901, %v1506
    %v1912 = vadd.f32 %v1903, %v1510
    %v1913 = vadd.f32 %v1862, %v1498
    %v1914 = vadd.f32 %v1864, %v1502
    %v1915 = vadd.f32 %v1905, %v1506
    %v1916 = vadd.f32 %v1907, %v1510
    %v1917 = vxor.u32 %v1909, 2147483648
    %v1918 = vxor.u32 %v1910, 2147483648
    %v1919 = vxor.u32 %v1911, 2147483648
    %v1920 = vxor.u32 %v1913, 2147483648
    %v1921 = vxor.u32 %v1914, 2147483648
    %v1922 = vxor.u32 %v1915, 2147483648
    %v1923 = vmul.f32 %v1917, 1.442695
    %v1924 = vpow.pop %v1923
    %v1925 = vmul.f32 %v1918, 1.442695
    %v1926 = vpow.pop %v1925
    %v1927 = vmul.f32 %v1919, 1.442695
    %v1928 = vpow.pop %v1927
    %v1929 = vmul.f32 %v1920, 1.442695
    %v1930 = vpow.pop %v1929
    %v1931 = vmul.f32 %v1921, 1.442695
    %v1932 = vpow.pop %v1931
    %v1933 = vmul.f32 %v1922, 1.442695
    %v1934 = vpow.pop %v1933
    %v1935 = vadd.f32 %v1924, 1.0
    %v1936 = vadd.f32 %v1926, 1.0
    %v1937 = vadd.f32 %v1928, 1.0
    %v1938 = vadd.f32 %v1930, 1.0
    %v1939 = vadd.f32 %v1932, 1.0
    %v1940 = vadd.f32 %v1934, 1.0
    %v1941 = vrcp.pop %v1935
    %v1942 = vmul.f32 1.0, %v1941
    %v1943 = vrcp.pop %v1936
    %v1944 = vmul.f32 1.0, %v1943
    %v1945 = vrcp.pop %v1937
    %v1946 = vmul.f32 1.0, %v1945
    %v1947 = vrcp.pop %v1938
    %v1948 = vmul.f32 1.0, %v1947
    %v1949 = vrcp.pop %v1939
    %v1950 = vmul.f32 1.0, %v1949
    %v1951 = vrcp.pop %v1940
    %v1952 = vmul.f32 1.0, %v1951
    %v1953 = vtanh.pop %v1912
    %v1954 = vtanh.pop %v1916
    %v1955 = vmul.f32 %v1944, %v1565
    %v1956 = vmul.f32 %v1950, %v1566
    %v1957 = vmul.f32 %v1942, %v1953
    %v1958 = vmul.f32 %v1948, %v1954
    %v1959 = vadd.f32 %v1955, %v1957
    %v1960 = vadd.f32 %v1956, %v1958
    %v1961 = vtanh.pop %v1959
    %v1962 = vtanh.pop %v1960
    %v1963 = vmul.f32 %v1946, %v1961
    %v1964 = vmul.f32 %v1952, %v1962
    %vm1965 = vcmp.eq.s32.totalorder %v151, 1
    %vm1966 = vcmp.eq.s32.totalorder %v152, 1
    %v1967 = vsel %vm1965, 1, 0
    %v1968 = vsel %vm1966, 1, 0
    %1969 = vset.pattern.permute.xlu0 0
    %1970 = vperm.xlu0 %1969, %v1967
    %v1971 = vpop.permute.xlu0 %1970
    %1972 = vset.pattern.permute.xlu0 0
    %1973 = vperm.xlu0 %1972, %v1968
    %v1974 = vpop.permute.xlu0 %1973
    %vm1975 = vcmp.eq.s32.totalorder %v1971, 1
    %vm1976 = vcmp.eq.s32.totalorder %v1974, 1
    %v1977 = vsel %vm1975, %v1963, %v1583
    %v1978 = vsel %vm1976, %v1964, %v1584
    %1979 = vmatprep.subr.bf16.mxu0 %v751
    %1980 = vmatpush1.bf16.msra.mxu0 %v750
    %1981 = vmatprep.subr.bf16.mxu0 %v747
    %1982 = vmatpush1.bf16.msra.mxu0 %v746
    %1983 = vmatprep.subr.bf16.mxu0 %v743
    %1984 = vmatpush1.bf16.msra.mxu0 %v742
    %1985 = vmatprep.subr.bf16.mxu0 %v739
    %1986 = vmatpush1.bf16.msra.mxu0 %v738
    %1987 = vmatprep.subr.bf16.mxu0 %v735
    %1988 = vmatpush1.bf16.msra.mxu0 %v734
    %1989 = vmatprep.subr.bf16.mxu0 %v731
    %1990 = vmatpush1.bf16.msra.mxu0 %v730
    %1991 = vmatprep.subr.bf16.mxu0 %v727
    %1992 = vmatpush1.bf16.msra.mxu0 %v726
    %1993 = vmatprep.subr.bf16.mxu0 %v723
    %1994 = vmatpush1.bf16.msra.mxu0 %v722
    %1995 = vmatprep.subr.bf16.mxu0 0
    %1996 = vmatpush2.bf16.msra.mxu0 0
    %1997 = vmatprep.subr.bf16.mxu0 0
    %1998 = vmatpush2.bf16.msra.mxu0 0
    %1999 = vmatprep.subr.bf16.mxu0 0
    %2000 = vmatpush2.bf16.msra.mxu0 0
    %2001 = vmatprep.subr.bf16.mxu0 0
    %2002 = vmatpush2.bf16.msra.mxu0 0
    %2003 = vmatprep.subr.bf16.mxu0 0
    %2004 = vmatpush2.bf16.msra.mxu0 0
    %2005 = vmatprep.subr.bf16.mxu0 0
    %2006 = vmatpush2.bf16.msra.mxu0 0
    %2007 = vmatprep.subr.bf16.mxu0 0
    %2008 = vmatpush2.bf16.msra.mxu0 0
    %2009 = vmatprep.subr.bf16.mxu0 0
    %2010 = vmatpush2.bf16.msra.mxu0 0
    %2011 = vmatprep.mubr.bf16.mxu0 0
    %2012 = vmatmul.mubr.bf16.gmra.mxu0 %v1822
    %v2013 = vpop.f32.mrf.mxu0
    %v2014 = vadd.f32 0.0, %v2013
    %v2015 = vpop.f32.mrf.mxu0
    %v2016 = vadd.f32 0.0, %v2015
    %v2017 = vpop.f32.mrf.mxu0
    %v2018 = vadd.f32 0.0, %v2017
    %v2019 = vpop.f32.mrf.mxu0
    %v2020 = vadd.f32 0.0, %v2019
    %2021 = vdwg.mxu0
    %2022 = vmatprep.subr.bf16.mxu0 %v753
    %2023 = vmatpush1.bf16.msra.mxu0 %v752
    %2024 = vmatprep.subr.bf16.mxu0 %v749
    %2025 = vmatpush1.bf16.msra.mxu0 %v748
    %2026 = vmatprep.subr.bf16.mxu0 %v745
    %2027 = vmatpush1.bf16.msra.mxu0 %v744
    %2028 = vmatprep.subr.bf16.mxu0 %v741
    %2029 = vmatpush1.bf16.msra.mxu0 %v740
    %2030 = vmatprep.subr.bf16.mxu0 %v737
    %2031 = vmatpush1.bf16.msra.mxu0 %v736
    %2032 = vmatprep.subr.bf16.mxu0 %v733
    %2033 = vmatpush1.bf16.msra.mxu0 %v732
    %2034 = vmatprep.subr.bf16.mxu0 %v729
    %2035 = vmatpush1.bf16.msra.mxu0 %v728
    %2036 = vmatprep.subr.bf16.mxu0 %v725
    %2037 = vmatpush1.bf16.msra.mxu0 %v724
    %2038 = vmatprep.subr.bf16.mxu0 0
    %2039 = vmatpush2.bf16.msra.mxu0 0
    %2040 = vmatprep.subr.bf16.mxu0 0
    %2041 = vmatpush2.bf16.msra.mxu0 0
    %2042 = vmatprep.subr.bf16.mxu0 0
    %2043 = vmatpush2.bf16.msra.mxu0 0
    %2044 = vmatprep.subr.bf16.mxu0 0
    %2045 = vmatpush2.bf16.msra.mxu0 0
    %2046 = vmatprep.subr.bf16.mxu0 0
    %2047 = vmatpush2.bf16.msra.mxu0 0
    %2048 = vmatprep.subr.bf16.mxu0 0
    %2049 = vmatpush2.bf16.msra.mxu0 0
    %2050 = vmatprep.subr.bf16.mxu0 0
    %2051 = vmatpush2.bf16.msra.mxu0 0
    %2052 = vmatprep.subr.bf16.mxu0 0
    %2053 = vmatpush2.bf16.msra.mxu0 0
    %2054 = vmatprep.mubr.bf16.mxu0 0
    %2055 = vmatmul.mubr.bf16.gmra.mxu0 %v1822
    %v2056 = vpop.f32.mrf.mxu0
    %v2057 = vadd.f32 0.0, %v2056
    %v2058 = vpop.f32.mrf.mxu0
    %v2059 = vadd.f32 0.0, %v2058
    %v2060 = vpop.f32.mrf.mxu0
    %v2061 = vadd.f32 0.0, %v2060
    %v2062 = vpop.f32.mrf.mxu0
    %v2063 = vadd.f32 0.0, %v2062
    %2064 = vdwg.mxu0
    %v2065 = vld [vmem:[#allocation2 + $0x80] sm:$0xff]
    %v2066 = vld [vmem:[#allocation2 + $0x88] sm:$0xff]
    %v2067 = vld [vmem:[#allocation2 + $0x90] sm:$0xff]
    %v2068 = vld [vmem:[#allocation2 + $0x98] sm:$0xff]
    %v2069 = vld [vmem:[#allocation2 + $0xa0] sm:$0xff]
    %v2070 = vld [vmem:[#allocation2 + $0xa8] sm:$0xff]
    %v2071 = vld [vmem:[#allocation2 + $0xb0] sm:$0xff]
    %v2072 = vld [vmem:[#allocation2 + $0xb8] sm:$0xff]
    %v2073 = vadd.f32 %v2065, %v2014
    %v2074 = vadd.f32 %v2066, %v2016
    %v2075 = vadd.f32 %v2067, %v2057
    %v2076 = vadd.f32 %v2068, %v2059
    %v2077 = vadd.f32 %v2069, %v2018
    %v2078 = vadd.f32 %v2070, %v2020
    %v2079 = vadd.f32 %v2071, %v2061
    %v2080 = vadd.f32 %v2072, %v2063
    %v2081 = vxor.u32 %v2073, 2147483648
    %v2082 = vxor.u32 %v2074, 2147483648
    %v2083 = vxor.u32 %v2075, 2147483648
    %v2084 = vxor.u32 %v2077, 2147483648
    %v2085 = vxor.u32 %v2078, 2147483648
    %v2086 = vxor.u32 %v2079, 2147483648
    %v2087 = vmul.f32 %v2081, 1.442695
    %v2088 = vpow.pop %v2087
    %v2089 = vmul.f32 %v2082, 1.442695
    %v2090 = vpow.pop %v2089
    %v2091 = vmul.f32 %v2083, 1.442695
    %v2092 = vpow.pop %v2091
    %v2093 = vmul.f32 %v2084, 1.442695
    %v2094 = vpow.pop %v2093
    %v2095 = vmul.f32 %v2085, 1.442695
    %v2096 = vpow.pop %v2095
    %v2097 = vmul.f32 %v2086, 1.442695
    %v2098 = vpow.pop %v2097
    %v2099 = vadd.f32 %v2088, 1.0
    %v2100 = vadd.f32 %v2090, 1.0
    %v2101 = vadd.f32 %v2092, 1.0
    %v2102 = vadd.f32 %v2094, 1.0
    %v2103 = vadd.f32 %v2096, 1.0
    %v2104 = vadd.f32 %v2098, 1.0
    %v2105 = vrcp.pop %v2099
    %v2106 = vmul.f32 1.0, %v2105
    %v2107 = vrcp.pop %v2100
    %v2108 = vmul.f32 1.0, %v2107
    %v2109 = vrcp.pop %v2101
    %v2110 = vmul.f32 1.0, %v2109
    %v2111 = vrcp.pop %v2102
    %v2112 = vmul.f32 1.0, %v2111
    %v2113 = vrcp.pop %v2103
    %v2114 = vmul.f32 1.0, %v2113
    %v2115 = vrcp.pop %v2104
    %v2116 = vmul.f32 1.0, %v2115
    %v2117 = vtanh.pop %v2076
    %v2118 = vtanh.pop %v2080
    %v2119 = vmul.f32 %v2108, %v1729
    %v2120 = vmul.f32 %v2114, %v1730
    %v2121 = vmul.f32 %v2106, %v2117
    %v2122 = vmul.f32 %v2112, %v2118
    %v2123 = vadd.f32 %v2119, %v2121
    %v2124 = vadd.f32 %v2120, %v2122
    %v2125 = vtanh.pop %v2123
    %v2126 = vtanh.pop %v2124
    %v2127 = vmul.f32 %v2110, %v2125
    %v2128 = vmul.f32 %v2116, %v2126
    %v2129 = vpack.c.bf16 %v1964, %v1963
    %2130 = vmatprep.subr.bf16.mxu0 %v1093
    %2131 = vmatpush1.bf16.msra.mxu0 %v1092
    %2132 = vmatprep.subr.bf16.mxu0 %v1089
    %2133 = vmatpush1.bf16.msra.mxu0 %v1088
    %2134 = vmatprep.subr.bf16.mxu0 %v1085
    %2135 = vmatpush1.bf16.msra.mxu0 %v1084
    %2136 = vmatprep.subr.bf16.mxu0 %v1081
    %2137 = vmatpush1.bf16.msra.mxu0 %v1080
    %2138 = vmatprep.subr.bf16.mxu0 %v1077
    %2139 = vmatpush1.bf16.msra.mxu0 %v1076
    %2140 = vmatprep.subr.bf16.mxu0 %v1073
    %2141 = vmatpush1.bf16.msra.mxu0 %v1072
    %2142 = vmatprep.subr.bf16.mxu0 %v1069
    %2143 = vmatpush1.bf16.msra.mxu0 %v1068
    %2144 = vmatprep.subr.bf16.mxu0 %v1065
    %2145 = vmatpush1.bf16.msra.mxu0 %v1064
    %2146 = vmatprep.subr.bf16.mxu0 0
    %2147 = vmatpush2.bf16.msra.mxu0 0
    %2148 = vmatprep.subr.bf16.mxu0 0
    %2149 = vmatpush2.bf16.msra.mxu0 0
    %2150 = vmatprep.subr.bf16.mxu0 0
    %2151 = vmatpush2.bf16.msra.mxu0 0
    %2152 = vmatprep.subr.bf16.mxu0 0
    %2153 = vmatpush2.bf16.msra.mxu0 0
    %2154 = vmatprep.subr.bf16.mxu0 0
    %2155 = vmatpush2.bf16.msra.mxu0 0
    %2156 = vmatprep.subr.bf16.mxu0 0
    %2157 = vmatpush2.bf16.msra.mxu0 0
    %2158 = vmatprep.subr.bf16.mxu0 0
    %2159 = vmatpush2.bf16.msra.mxu0 0
    %2160 = vmatprep.subr.bf16.mxu0 0
    %2161 = vmatpush2.bf16.msra.mxu0 0
    %2162 = vmatprep.mubr.bf16.mxu0 0
    %2163 = vmatmul.mubr.bf16.gmra.mxu0 %v2129
    %v2164 = vpop.f32.mrf.mxu0
    %v2165 = vadd.f32 0.0, %v2164
    %v2166 = vpop.f32.mrf.mxu0
    %v2167 = vadd.f32 0.0, %v2166
    %v2168 = vpop.f32.mrf.mxu0
    %v2169 = vadd.f32 0.0, %v2168
    %v2170 = vpop.f32.mrf.mxu0
    %v2171 = vadd.f32 0.0, %v2170
    %2172 = vdwg.mxu0
    %2173 = vmatprep.subr.bf16.mxu0 %v1095
    %2174 = vmatpush1.bf16.msra.mxu0 %v1094
    %2175 = vmatprep.subr.bf16.mxu0 %v1091
    %2176 = vmatpush1.bf16.msra.mxu0 %v1090
    %2177 = vmatprep.subr.bf16.mxu0 %v1087
    %2178 = vmatpush1.bf16.msra.mxu0 %v1086
    %2179 = vmatprep.subr.bf16.mxu0 %v1083
    %2180 = vmatpush1.bf16.msra.mxu0 %v1082
    %2181 = vmatprep.subr.bf16.mxu0 %v1079
    %2182 = vmatpush1.bf16.msra.mxu0 %v1078
    %2183 = vmatprep.subr.bf16.mxu0 %v1075
    %2184 = vmatpush1.bf16.msra.mxu0 %v1074
    %2185 = vmatprep.subr.bf16.mxu0 %v1071
    %2186 = vmatpush1.bf16.msra.mxu0 %v1070
    %2187 = vmatprep.subr.bf16.mxu0 %v1067
    %2188 = vmatpush1.bf16.msra.mxu0 %v1066
    %2189 = vmatprep.subr.bf16.mxu0 0
    %2190 = vmatpush2.bf16.msra.mxu0 0
    %2191 = vmatprep.subr.bf16.mxu0 0
    %2192 = vmatpush2.bf16.msra.mxu0 0
    %2193 = vmatprep.subr.bf16.mxu0 0
    %2194 = vmatpush2.bf16.msra.mxu0 0
    %2195 = vmatprep.subr.bf16.mxu0 0
    %2196 = vmatpush2.bf16.msra.mxu0 0
    %2197 = vmatprep.subr.bf16.mxu0 0
    %2198 = vmatpush2.bf16.msra.mxu0 0
    %2199 = vmatprep.subr.bf16.mxu0 0
    %2200 = vmatpush2.bf16.msra.mxu0 0
    %2201 = vmatprep.subr.bf16.mxu0 0
    %2202 = vmatpush2.bf16.msra.mxu0 0
    %2203 = vmatprep.subr.bf16.mxu0 0
    %2204 = vmatpush2.bf16.msra.mxu0 0
    %2205 = vmatprep.mubr.bf16.mxu0 0
    %2206 = vmatmul.mubr.bf16.gmra.mxu0 %v2129
    %v2207 = vpop.f32.mrf.mxu0
    %v2208 = vadd.f32 0.0, %v2207
    %v2209 = vpop.f32.mrf.mxu0
    %v2210 = vadd.f32 0.0, %v2209
    %v2211 = vpop.f32.mrf.mxu0
    %v2212 = vadd.f32 0.0, %v2211
    %v2213 = vpop.f32.mrf.mxu0
    %v2214 = vadd.f32 0.0, %v2213
    %2215 = vdwg.mxu0
    %v2216 = vpack.c.bf16 %v2128, %v2127
    %2217 = vmatprep.subr.bf16.mxu0 %v1372
    %2218 = vmatpush1.bf16.msra.mxu0 %v1371
    %2219 = vmatprep.subr.bf16.mxu0 %v1368
    %2220 = vmatpush1.bf16.msra.mxu0 %v1367
    %2221 = vmatprep.subr.bf16.mxu0 %v1364
    %2222 = vmatpush1.bf16.msra.mxu0 %v1363
    %2223 = vmatprep.subr.bf16.mxu0 %v1360
    %2224 = vmatpush1.bf16.msra.mxu0 %v1359
    %2225 = vmatprep.subr.bf16.mxu0 %v1356
    %2226 = vmatpush1.bf16.msra.mxu0 %v1355
    %2227 = vmatprep.subr.bf16.mxu0 %v1352
    %2228 = vmatpush1.bf16.msra.mxu0 %v1351
    %2229 = vmatprep.subr.bf16.mxu0 %v1348
    %2230 = vmatpush1.bf16.msra.mxu0 %v1347
    %2231 = vmatprep.subr.bf16.mxu0 %v1344
    %2232 = vmatpush1.bf16.msra.mxu0 %v1343
    %2233 = vmatprep.subr.bf16.mxu0 0
    %2234 = vmatpush2.bf16.msra.mxu0 0
    %2235 = vmatprep.subr.bf16.mxu0 0
    %2236 = vmatpush2.bf16.msra.mxu0 0
    %2237 = vmatprep.subr.bf16.mxu0 0
    %2238 = vmatpush2.bf16.msra.mxu0 0
    %2239 = vmatprep.subr.bf16.mxu0 0
    %2240 = vmatpush2.bf16.msra.mxu0 0
    %2241 = vmatprep.subr.bf16.mxu0 0
    %2242 = vmatpush2.bf16.msra.mxu0 0
    %2243 = vmatprep.subr.bf16.mxu0 0
    %2244 = vmatpush2.bf16.msra.mxu0 0
    %2245 = vmatprep.subr.bf16.mxu0 0
    %2246 = vmatpush2.bf16.msra.mxu0 0
    %2247 = vmatprep.subr.bf16.mxu0 0
    %2248 = vmatpush2.bf16.msra.mxu0 0
    %2249 = vmatprep.mubr.bf16.mxu0 0
    %2250 = vmatmul.mubr.bf16.gmra.mxu0 %v2216
    %v2251 = vpop.f32.mrf.mxu0
    %v2252 = vadd.f32 %v2165, %v2251
    %v2253 = vpop.f32.mrf.mxu0
    %v2254 = vadd.f32 %v2167, %v2253
    %v2255 = vpop.f32.mrf.mxu0
    %v2256 = vadd.f32 %v2169, %v2255
    %v2257 = vpop.f32.mrf.mxu0
    %v2258 = vadd.f32 %v2171, %v2257
    %2259 = vdwg.mxu0
    %2260 = vmatprep.subr.bf16.mxu0 %v1374
    %2261 = vmatpush1.bf16.msra.mxu0 %v1373
    %2262 = vmatprep.subr.bf16.mxu0 %v1370
    %2263 = vmatpush1.bf16.msra.mxu0 %v1369
    %2264 = vmatprep.subr.bf16.mxu0 %v1366
    %2265 = vmatpush1.bf16.msra.mxu0 %v1365
    %2266 = vmatprep.subr.bf16.mxu0 %v1362
    %2267 = vmatpush1.bf16.msra.mxu0 %v1361
    %2268 = vmatprep.subr.bf16.mxu0 %v1358
    %2269 = vmatpush1.bf16.msra.mxu0 %v1357
    %2270 = vmatprep.subr.bf16.mxu0 %v1354
    %2271 = vmatpush1.bf16.msra.mxu0 %v1353
    %2272 = vmatprep.subr.bf16.mxu0 %v1350
    %2273 = vmatpush1.bf16.msra.mxu0 %v1349
    %2274 = vmatprep.subr.bf16.mxu0 %v1346
    %2275 = vmatpush1.bf16.msra.mxu0 %v1345
    %2276 = vmatprep.subr.bf16.mxu0 0
    %2277 = vmatpush2.bf16.msra.mxu0 0
    %2278 = vmatprep.subr.bf16.mxu0 0
    %2279 = vmatpush2.bf16.msra.mxu0 0
    %2280 = vmatprep.subr.bf16.mxu0 0
    %2281 = vmatpush2.bf16.msra.mxu0 0
    %2282 = vmatprep.subr.bf16.mxu0 0
    %2283 = vmatpush2.bf16.msra.mxu0 0
    %2284 = vmatprep.subr.bf16.mxu0 0
    %2285 = vmatpush2.bf16.msra.mxu0 0
    %2286 = vmatprep.subr.bf16.mxu0 0
    %2287 = vmatpush2.bf16.msra.mxu0 0
    %2288 = vmatprep.subr.bf16.mxu0 0
    %2289 = vmatpush2.bf16.msra.mxu0 0
    %2290 = vmatprep.subr.bf16.mxu0 0
    %2291 = vmatpush2.bf16.msra.mxu0 0
    %2292 = vmatprep.mubr.bf16.mxu0 0
    %2293 = vmatmul.mubr.bf16.gmra.mxu0 %v2216
    %v2294 = vpop.f32.mrf.mxu0
    %v2295 = vadd.f32 %v2208, %v2294
    %v2296 = vpop.f32.mrf.mxu0
    %v2297 = vadd.f32 %v2210, %v2296
    %v2298 = vpop.f32.mrf.mxu0
    %v2299 = vadd.f32 %v2212, %v2298
    %v2300 = vpop.f32.mrf.mxu0
    %v2301 = vadd.f32 %v2214, %v2300
    %2302 = vdwg.mxu0
    %v2303 = vadd.f32 %v2252, %v1498
    %v2304 = vadd.f32 %v2254, %v1502
    %v2305 = vadd.f32 %v2295, %v1506
    %v2306 = vadd.f32 %v2297, %v1510
    %v2307 = vadd.f32 %v2256, %v1498
    %v2308 = vadd.f32 %v2258, %v1502
    %v2309 = vadd.f32 %v2299, %v1506
    %v2310 = vadd.f32 %v2301, %v1510
    %v2311 = vxor.u32 %v2303, 2147483648
    %v2312 = vxor.u32 %v2304, 2147483648
    %v2313 = vxor.u32 %v2305, 2147483648
    %v2314 = vxor.u32 %v2307, 2147483648
    %v2315 = vxor.u32 %v2308, 2147483648
    %v2316 = vxor.u32 %v2309, 2147483648
    %v2317 = vmul.f32 %v2311, 1.442695
    %v2318 = vpow.pop %v2317
    %v2319 = vmul.f32 %v2312, 1.442695
    %v2320 = vpow.pop %v2319
    %v2321 = vmul.f32 %v2313, 1.442695
    %v2322 = vpow.pop %v2321
    %v2323 = vmul.f32 %v2314, 1.442695
    %v2324 = vpow.pop %v2323
    %v2325 = vmul.f32 %v2315, 1.442695
    %v2326 = vpow.pop %v2325
    %v2327 = vmul.f32 %v2316, 1.442695
    %v2328 = vpow.pop %v2327
    %v2329 = vadd.f32 %v2318, 1.0
    %v2330 = vadd.f32 %v2320, 1.0
    %v2331 = vadd.f32 %v2322, 1.0
    %v2332 = vadd.f32 %v2324, 1.0
    %v2333 = vadd.f32 %v2326, 1.0
    %v2334 = vadd.f32 %v2328, 1.0
    %v2335 = vrcp.pop %v2329
    %v2336 = vmul.f32 1.0, %v2335
    %v2337 = vrcp.pop %v2330
    %v2338 = vmul.f32 1.0, %v2337
    %v2339 = vrcp.pop %v2331
    %v2340 = vmul.f32 1.0, %v2339
    %v2341 = vrcp.pop %v2332
    %v2342 = vmul.f32 1.0, %v2341
    %v2343 = vrcp.pop %v2333
    %v2344 = vmul.f32 1.0, %v2343
    %v2345 = vrcp.pop %v2334
    %v2346 = vmul.f32 1.0, %v2345
    %v2347 = vtanh.pop %v2306
    %v2348 = vtanh.pop %v2310
    %v2349 = vmul.f32 %v2338, %v1959
    %v2350 = vmul.f32 %v2344, %v1960
    %v2351 = vmul.f32 %v2336, %v2347
    %v2352 = vmul.f32 %v2342, %v2348
    %v2353 = vadd.f32 %v2349, %v2351
    %v2354 = vadd.f32 %v2350, %v2352
    %v2355 = vtanh.pop %v2353
    %v2356 = vtanh.pop %v2354
    %v2357 = vmul.f32 %v2340, %v2355
    %v2358 = vmul.f32 %v2346, %v2356
    %vm2359 = vcmp.eq.s32.totalorder %v151, 2
    %vm2360 = vcmp.eq.s32.totalorder %v152, 2
    %v2361 = vsel %vm2359, 1, 0
    %v2362 = vsel %vm2360, 1, 0
    %2363 = vset.pattern.permute.xlu0 0
    %2364 = vperm.xlu0 %2363, %v2361
    %v2365 = vpop.permute.xlu0 %2364
    %2366 = vset.pattern.permute.xlu0 0
    %2367 = vperm.xlu0 %2366, %v2362
    %v2368 = vpop.permute.xlu0 %2367
    %vm2369 = vcmp.eq.s32.totalorder %v2365, 1
    %vm2370 = vcmp.eq.s32.totalorder %v2368, 1
    %v2371 = vsel %vm2369, %v2357, %v1977
    %v2372 = vsel %vm2370, %v2358, %v1978
    %2373 = vmatprep.subr.bf16.mxu0 %v751
    %2374 = vmatpush1.bf16.msra.mxu0 %v750
    %2375 = vmatprep.subr.bf16.mxu0 %v747
    %2376 = vmatpush1.bf16.msra.mxu0 %v746
    %2377 = vmatprep.subr.bf16.mxu0 %v743
    %2378 = vmatpush1.bf16.msra.mxu0 %v742
    %2379 = vmatprep.subr.bf16.mxu0 %v739
    %2380 = vmatpush1.bf16.msra.mxu0 %v738
    %2381 = vmatprep.subr.bf16.mxu0 %v735
    %2382 = vmatpush1.bf16.msra.mxu0 %v734
    %2383 = vmatprep.subr.bf16.mxu0 %v731
    %2384 = vmatpush1.bf16.msra.mxu0 %v730
    %2385 = vmatprep.subr.bf16.mxu0 %v727
    %2386 = vmatpush1.bf16.msra.mxu0 %v726
    %2387 = vmatprep.subr.bf16.mxu0 %v723
    %2388 = vmatpush1.bf16.msra.mxu0 %v722
    %2389 = vmatprep.subr.bf16.mxu0 0
    %2390 = vmatpush2.bf16.msra.mxu0 0
    %2391 = vmatprep.subr.bf16.mxu0 0
    %2392 = vmatpush2.bf16.msra.mxu0 0
    %2393 = vmatprep.subr.bf16.mxu0 0
    %2394 = vmatpush2.bf16.msra.mxu0 0
    %2395 = vmatprep.subr.bf16.mxu0 0
    %2396 = vmatpush2.bf16.msra.mxu0 0
    %2397 = vmatprep.subr.bf16.mxu0 0
    %2398 = vmatpush2.bf16.msra.mxu0 0
    %2399 = vmatprep.subr.bf16.mxu0 0
    %2400 = vmatpush2.bf16.msra.mxu0 0
    %2401 = vmatprep.subr.bf16.mxu0 0
    %2402 = vmatpush2.bf16.msra.mxu0 0
    %2403 = vmatprep.subr.bf16.mxu0 0
    %2404 = vmatpush2.bf16.msra.mxu0 0
    %2405 = vmatprep.mubr.bf16.mxu0 0
    %2406 = vmatmul.mubr.bf16.gmra.mxu0 %v2216
    %v2407 = vpop.f32.mrf.mxu0
    %v2408 = vadd.f32 0.0, %v2407
    %v2409 = vpop.f32.mrf.mxu0
    %v2410 = vadd.f32 0.0, %v2409
    %v2411 = vpop.f32.mrf.mxu0
    %v2412 = vadd.f32 0.0, %v2411
    %v2413 = vpop.f32.mrf.mxu0
    %v2414 = vadd.f32 0.0, %v2413
    %2415 = vdwg.mxu0
    %2416 = vmatprep.subr.bf16.mxu0 %v753
    %2417 = vmatpush1.bf16.msra.mxu0 %v752
    %2418 = vmatprep.subr.bf16.mxu0 %v749
    %2419 = vmatpush1.bf16.msra.mxu0 %v748
    %2420 = vmatprep.subr.bf16.mxu0 %v745
    %2421 = vmatpush1.bf16.msra.mxu0 %v744
    %2422 = vmatprep.subr.bf16.mxu0 %v741
    %2423 = vmatpush1.bf16.msra.mxu0 %v740
    %2424 = vmatprep.subr.bf16.mxu0 %v737
    %2425 = vmatpush1.bf16.msra.mxu0 %v736
    %2426 = vmatprep.subr.bf16.mxu0 %v733
    %2427 = vmatpush1.bf16.msra.mxu0 %v732
    %2428 = vmatprep.subr.bf16.mxu0 %v729
    %2429 = vmatpush1.bf16.msra.mxu0 %v728
    %2430 = vmatprep.subr.bf16.mxu0 %v725
    %2431 = vmatpush1.bf16.msra.mxu0 %v724
    %2432 = vmatprep.subr.bf16.mxu0 0
    %2433 = vmatpush2.bf16.msra.mxu0 0
    %2434 = vmatprep.subr.bf16.mxu0 0
    %2435 = vmatpush2.bf16.msra.mxu0 0
    %2436 = vmatprep.subr.bf16.mxu0 0
    %2437 = vmatpush2.bf16.msra.mxu0 0
    %2438 = vmatprep.subr.bf16.mxu0 0
    %2439 = vmatpush2.bf16.msra.mxu0 0
    %2440 = vmatprep.subr.bf16.mxu0 0
    %2441 = vmatpush2.bf16.msra.mxu0 0
    %2442 = vmatprep.subr.bf16.mxu0 0
    %2443 = vmatpush2.bf16.msra.mxu0 0
    %2444 = vmatprep.subr.bf16.mxu0 0
    %2445 = vmatpush2.bf16.msra.mxu0 0
    %2446 = vmatprep.subr.bf16.mxu0 0
    %2447 = vmatpush2.bf16.msra.mxu0 0
    %2448 = vmatprep.mubr.bf16.mxu0 0
    %2449 = vmatmul.mubr.bf16.gmra.mxu0 %v2216
    %v2450 = vpop.f32.mrf.mxu0
    %v2451 = vadd.f32 0.0, %v2450
    %v2452 = vpop.f32.mrf.mxu0
    %v2453 = vadd.f32 0.0, %v2452
    %v2454 = vpop.f32.mrf.mxu0
    %v2455 = vadd.f32 0.0, %v2454
    %v2456 = vpop.f32.mrf.mxu0
    %v2457 = vadd.f32 0.0, %v2456
    %2458 = vdwg.mxu0
    %v2459 = vld [vmem:[#allocation2 + $0xc0] sm:$0xff]
    %v2460 = vld [vmem:[#allocation2 + $0xc8] sm:$0xff]
    %v2461 = vld [vmem:[#allocation2 + $0xd0] sm:$0xff]
    %v2462 = vld [vmem:[#allocation2 + $0xd8] sm:$0xff]
    %v2463 = vld [vmem:[#allocation2 + $0xe0] sm:$0xff]
    %v2464 = vld [vmem:[#allocation2 + $0xe8] sm:$0xff]
    %v2465 = vld [vmem:[#allocation2 + $0xf0] sm:$0xff]
    %v2466 = vld [vmem:[#allocation2 + $0xf8] sm:$0xff]
    %v2467 = vadd.f32 %v2459, %v2408
    %v2468 = vadd.f32 %v2460, %v2410
    %v2469 = vadd.f32 %v2461, %v2451
    %v2470 = vadd.f32 %v2462, %v2453
    %v2471 = vadd.f32 %v2463, %v2412
    %v2472 = vadd.f32 %v2464, %v2414
    %v2473 = vadd.f32 %v2465, %v2455
    %v2474 = vadd.f32 %v2466, %v2457
    %v2475 = vxor.u32 %v2467, 2147483648
    %v2476 = vxor.u32 %v2468, 2147483648
    %v2477 = vxor.u32 %v2469, 2147483648
    %v2478 = vxor.u32 %v2471, 2147483648
    %v2479 = vxor.u32 %v2472, 2147483648
    %v2480 = vxor.u32 %v2473, 2147483648
    %v2481 = vmul.f32 %v2475, 1.442695
    %v2482 = vpow.pop %v2481
    %v2483 = vmul.f32 %v2476, 1.442695
    %v2484 = vpow.pop %v2483
    %v2485 = vmul.f32 %v2477, 1.442695
    %v2486 = vpow.pop %v2485
    %v2487 = vmul.f32 %v2478, 1.442695
    %v2488 = vpow.pop %v2487
    %v2489 = vmul.f32 %v2479, 1.442695
    %v2490 = vpow.pop %v2489
    %v2491 = vmul.f32 %v2480, 1.442695
    %v2492 = vpow.pop %v2491
    %v2493 = vadd.f32 %v2482, 1.0
    %v2494 = vadd.f32 %v2484, 1.0
    %v2495 = vadd.f32 %v2486, 1.0
    %v2496 = vadd.f32 %v2488, 1.0
    %v2497 = vadd.f32 %v2490, 1.0
    %v2498 = vadd.f32 %v2492, 1.0
    %v2499 = vrcp.pop %v2493
    %v2500 = vmul.f32 1.0, %v2499
    %v2501 = vrcp.pop %v2494
    %v2502 = vmul.f32 1.0, %v2501
    %v2503 = vrcp.pop %v2495
    %v2504 = vmul.f32 1.0, %v2503
    %v2505 = vrcp.pop %v2496
    %v2506 = vmul.f32 1.0, %v2505
    %v2507 = vrcp.pop %v2497
    %v2508 = vmul.f32 1.0, %v2507
    %v2509 = vrcp.pop %v2498
    %v2510 = vmul.f32 1.0, %v2509
    %v2511 = vtanh.pop %v2470
    %v2512 = vtanh.pop %v2474
    %v2513 = vmul.f32 %v2502, %v2123
    %v2514 = vmul.f32 %v2508, %v2124
    %v2515 = vmul.f32 %v2500, %v2511
    %v2516 = vmul.f32 %v2506, %v2512
    %v2517 = vadd.f32 %v2513, %v2515
    %v2518 = vadd.f32 %v2514, %v2516
    %v2519 = vtanh.pop %v2517
    %v2520 = vtanh.pop %v2518
    %v2521 = vmul.f32 %v2504, %v2519
    %v2522 = vmul.f32 %v2510, %v2520
    %v2523 = vpack.c.bf16 %v2358, %v2357
    %2524 = vmatprep.subr.bf16.mxu0 %v1093
    %2525 = vmatpush1.bf16.msra.mxu0 %v1092
    %2526 = vmatprep.subr.bf16.mxu0 %v1089
    %2527 = vmatpush1.bf16.msra.mxu0 %v1088
    %2528 = vmatprep.subr.bf16.mxu0 %v1085
    %2529 = vmatpush1.bf16.msra.mxu0 %v1084
    %2530 = vmatprep.subr.bf16.mxu0 %v1081
    %2531 = vmatpush1.bf16.msra.mxu0 %v1080
    %2532 = vmatprep.subr.bf16.mxu0 %v1077
    %2533 = vmatpush1.bf16.msra.mxu0 %v1076
    %2534 = vmatprep.subr.bf16.mxu0 %v1073
    %2535 = vmatpush1.bf16.msra.mxu0 %v1072
    %2536 = vmatprep.subr.bf16.mxu0 %v1069
    %2537 = vmatpush1.bf16.msra.mxu0 %v1068
    %2538 = vmatprep.subr.bf16.mxu0 %v1065
    %2539 = vmatpush1.bf16.msra.mxu0 %v1064
    %2540 = vmatprep.subr.bf16.mxu0 0
    %2541 = vmatpush2.bf16.msra.mxu0 0
    %2542 = vmatprep.subr.bf16.mxu0 0
    %2543 = vmatpush2.bf16.msra.mxu0 0
    %2544 = vmatprep.subr.bf16.mxu0 0
    %2545 = vmatpush2.bf16.msra.mxu0 0
    %2546 = vmatprep.subr.bf16.mxu0 0
    %2547 = vmatpush2.bf16.msra.mxu0 0
    %2548 = vmatprep.subr.bf16.mxu0 0
    %2549 = vmatpush2.bf16.msra.mxu0 0
    %2550 = vmatprep.subr.bf16.mxu0 0
    %2551 = vmatpush2.bf16.msra.mxu0 0
    %2552 = vmatprep.subr.bf16.mxu0 0
    %2553 = vmatpush2.bf16.msra.mxu0 0
    %2554 = vmatprep.subr.bf16.mxu0 0
    %2555 = vmatpush2.bf16.msra.mxu0 0
    %2556 = vmatprep.mubr.bf16.mxu0 0
    %2557 = vmatmul.mubr.bf16.gmra.mxu0 %v2523
    %v2558 = vpop.f32.mrf.mxu0
    %v2559 = vadd.f32 0.0, %v2558
    %v2560 = vpop.f32.mrf.mxu0
    %v2561 = vadd.f32 0.0, %v2560
    %v2562 = vpop.f32.mrf.mxu0
    %v2563 = vadd.f32 0.0, %v2562
    %v2564 = vpop.f32.mrf.mxu0
    %v2565 = vadd.f32 0.0, %v2564
    %2566 = vdwg.mxu0
    %2567 = vmatprep.subr.bf16.mxu0 %v1095
    %2568 = vmatpush1.bf16.msra.mxu0 %v1094
    %2569 = vmatprep.subr.bf16.mxu0 %v1091
    %2570 = vmatpush1.bf16.msra.mxu0 %v1090
    %2571 = vmatprep.subr.bf16.mxu0 %v1087
    %2572 = vmatpush1.bf16.msra.mxu0 %v1086
    %2573 = vmatprep.subr.bf16.mxu0 %v1083
    %2574 = vmatpush1.bf16.msra.mxu0 %v1082
    %2575 = vmatprep.subr.bf16.mxu0 %v1079
    %2576 = vmatpush1.bf16.msra.mxu0 %v1078
    %2577 = vmatprep.subr.bf16.mxu0 %v1075
    %2578 = vmatpush1.bf16.msra.mxu0 %v1074
    %2579 = vmatprep.subr.bf16.mxu0 %v1071
    %2580 = vmatpush1.bf16.msra.mxu0 %v1070
    %2581 = vmatprep.subr.bf16.mxu0 %v1067
    %2582 = vmatpush1.bf16.msra.mxu0 %v1066
    %2583 = vmatprep.subr.bf16.mxu0 0
    %2584 = vmatpush2.bf16.msra.mxu0 0
    %2585 = vmatprep.subr.bf16.mxu0 0
    %2586 = vmatpush2.bf16.msra.mxu0 0
    %2587 = vmatprep.subr.bf16.mxu0 0
    %2588 = vmatpush2.bf16.msra.mxu0 0
    %2589 = vmatprep.subr.bf16.mxu0 0
    %2590 = vmatpush2.bf16.msra.mxu0 0
    %2591 = vmatprep.subr.bf16.mxu0 0
    %2592 = vmatpush2.bf16.msra.mxu0 0
    %2593 = vmatprep.subr.bf16.mxu0 0
    %2594 = vmatpush2.bf16.msra.mxu0 0
    %2595 = vmatprep.subr.bf16.mxu0 0
    %2596 = vmatpush2.bf16.msra.mxu0 0
    %2597 = vmatprep.subr.bf16.mxu0 0
    %2598 = vmatpush2.bf16.msra.mxu0 0
    %2599 = vmatprep.mubr.bf16.mxu0 0
    %2600 = vmatmul.mubr.bf16.gmra.mxu0 %v2523
    %v2601 = vpop.f32.mrf.mxu0
    %v2602 = vadd.f32 0.0, %v2601
    %v2603 = vpop.f32.mrf.mxu0
    %v2604 = vadd.f32 0.0, %v2603
    %v2605 = vpop.f32.mrf.mxu0
    %v2606 = vadd.f32 0.0, %v2605
    %v2607 = vpop.f32.mrf.mxu0
    %v2608 = vadd.f32 0.0, %v2607
    %2609 = vdwg.mxu0
    %v2610 = vpack.c.bf16 %v2522, %v2521
    %2611 = vmatprep.subr.bf16.mxu0 %v1372
    %2612 = vmatpush1.bf16.msra.mxu0 %v1371
    %2613 = vmatprep.subr.bf16.mxu0 %v1368
    %2614 = vmatpush1.bf16.msra.mxu0 %v1367
    %2615 = vmatprep.subr.bf16.mxu0 %v1364
    %2616 = vmatpush1.bf16.msra.mxu0 %v1363
    %2617 = vmatprep.subr.bf16.mxu0 %v1360
    %2618 = vmatpush1.bf16.msra.mxu0 %v1359
    %2619 = vmatprep.subr.bf16.mxu0 %v1356
    %2620 = vmatpush1.bf16.msra.mxu0 %v1355
    %2621 = vmatprep.subr.bf16.mxu0 %v1352
    %2622 = vmatpush1.bf16.msra.mxu0 %v1351
    %2623 = vmatprep.subr.bf16.mxu0 %v1348
    %2624 = vmatpush1.bf16.msra.mxu0 %v1347
    %2625 = vmatprep.subr.bf16.mxu0 %v1344
    %2626 = vmatpush1.bf16.msra.mxu0 %v1343
    %2627 = vmatprep.subr.bf16.mxu0 0
    %2628 = vmatpush2.bf16.msra.mxu0 0
    %2629 = vmatprep.subr.bf16.mxu0 0
    %2630 = vmatpush2.bf16.msra.mxu0 0
    %2631 = vmatprep.subr.bf16.mxu0 0
    %2632 = vmatpush2.bf16.msra.mxu0 0
    %2633 = vmatprep.subr.bf16.mxu0 0
    %2634 = vmatpush2.bf16.msra.mxu0 0
    %2635 = vmatprep.subr.bf16.mxu0 0
    %2636 = vmatpush2.bf16.msra.mxu0 0
    %2637 = vmatprep.subr.bf16.mxu0 0
    %2638 = vmatpush2.bf16.msra.mxu0 0
    %2639 = vmatprep.subr.bf16.mxu0 0
    %2640 = vmatpush2.bf16.msra.mxu0 0
    %2641 = vmatprep.subr.bf16.mxu0 0
    %2642 = vmatpush2.bf16.msra.mxu0 0
    %2643 = vmatprep.mubr.bf16.mxu0 0
    %2644 = vmatmul.mubr.bf16.gmra.mxu0 %v2610
    %v2645 = vpop.f32.mrf.mxu0
    %v2646 = vadd.f32 %v2559, %v2645
    %v2647 = vpop.f32.mrf.mxu0
    %v2648 = vadd.f32 %v2561, %v2647
    %v2649 = vpop.f32.mrf.mxu0
    %v2650 = vadd.f32 %v2563, %v2649
    %v2651 = vpop.f32.mrf.mxu0
    %v2652 = vadd.f32 %v2565, %v2651
    %2653 = vdwg.mxu0
    %2654 = vmatprep.subr.bf16.mxu0 %v1374
    %2655 = vmatpush1.bf16.msra.mxu0 %v1373
    %2656 = vmatprep.subr.bf16.mxu0 %v1370
    %2657 = vmatpush1.bf16.msra.mxu0 %v1369
    %2658 = vmatprep.subr.bf16.mxu0 %v1366
    %2659 = vmatpush1.bf16.msra.mxu0 %v1365
    %2660 = vmatprep.subr.bf16.mxu0 %v1362
    %2661 = vmatpush1.bf16.msra.mxu0 %v1361
    %2662 = vmatprep.subr.bf16.mxu0 %v1358
    %2663 = vmatpush1.bf16.msra.mxu0 %v1357
    %2664 = vmatprep.subr.bf16.mxu0 %v1354
    %2665 = vmatpush1.bf16.msra.mxu0 %v1353
    %2666 = vmatprep.subr.bf16.mxu0 %v1350
    %2667 = vmatpush1.bf16.msra.mxu0 %v1349
    %2668 = vmatprep.subr.bf16.mxu0 %v1346
    %2669 = vmatpush1.bf16.msra.mxu0 %v1345
    %2670 = vmatprep.subr.bf16.mxu0 0
    %2671 = vmatpush2.bf16.msra.mxu0 0
    %2672 = vmatprep.subr.bf16.mxu0 0
    %2673 = vmatpush2.bf16.msra.mxu0 0
    %2674 = vmatprep.subr.bf16.mxu0 0
    %2675 = vmatpush2.bf16.msra.mxu0 0
    %2676 = vmatprep.subr.bf16.mxu0 0
    %2677 = vmatpush2.bf16.msra.mxu0 0
    %2678 = vmatprep.subr.bf16.mxu0 0
    %2679 = vmatpush2.bf16.msra.mxu0 0
    %2680 = vmatprep.subr.bf16.mxu0 0
    %2681 = vmatpush2.bf16.msra.mxu0 0
    %2682 = vmatprep.subr.bf16.mxu0 0
    %2683 = vmatpush2.bf16.msra.mxu0 0
    %2684 = vmatprep.subr.bf16.mxu0 0
    %2685 = vmatpush2.bf16.msra.mxu0 0
    %2686 = vmatprep.mubr.bf16.mxu0 0
    %2687 = vmatmul.mubr.bf16.gmra.mxu0 %v2610
    %v2688 = vpop.f32.mrf.mxu0
    %v2689 = vadd.f32 %v2602, %v2688
    %v2690 = vpop.f32.mrf.mxu0
    %v2691 = vadd.f32 %v2604, %v2690
    %v2692 = vpop.f32.mrf.mxu0
    %v2693 = vadd.f32 %v2606, %v2692
    %v2694 = vpop.f32.mrf.mxu0
    %v2695 = vadd.f32 %v2608, %v2694
    %2696 = vdwg.mxu0
    %v2697 = vadd.f32 %v2646, %v1498
    %v2698 = vadd.f32 %v2648, %v1502
    %v2699 = vadd.f32 %v2689, %v1506
    %v2700 = vadd.f32 %v2691, %v1510
    %v2701 = vadd.f32 %v2650, %v1498
    %v2702 = vadd.f32 %v2652, %v1502
    %v2703 = vadd.f32 %v2693, %v1506
    %v2704 = vadd.f32 %v2695, %v1510
    %v2705 = vxor.u32 %v2697, 2147483648
    %v2706 = vxor.u32 %v2698, 2147483648
    %v2707 = vxor.u32 %v2699, 2147483648
    %v2708 = vxor.u32 %v2701, 2147483648
    %v2709 = vxor.u32 %v2702, 2147483648
    %v2710 = vxor.u32 %v2703, 2147483648
    %v2711 = vmul.f32 %v2705, 1.442695
    %v2712 = vpow.pop %v2711
    %v2713 = vmul.f32 %v2706, 1.442695
    %v2714 = vpow.pop %v2713
    %v2715 = vmul.f32 %v2707, 1.442695
    %v2716 = vpow.pop %v2715
    %v2717 = vmul.f32 %v2708, 1.442695
    %v2718 = vpow.pop %v2717
    %v2719 = vmul.f32 %v2709, 1.442695
    %v2720 = vpow.pop %v2719
    %v2721 = vmul.f32 %v2710, 1.442695
    %v2722 = vpow.pop %v2721
    %v2723 = vadd.f32 %v2712, 1.0
    %v2724 = vadd.f32 %v2714, 1.0
    %v2725 = vadd.f32 %v2716, 1.0
    %v2726 = vadd.f32 %v2718, 1.0
    %v2727 = vadd.f32 %v2720, 1.0
    %v2728 = vadd.f32 %v2722, 1.0
    %v2729 = vrcp.pop %v2723
    %v2730 = vmul.f32 1.0, %v2729
    %v2731 = vrcp.pop %v2724
    %v2732 = vmul.f32 1.0, %v2731
    %v2733 = vrcp.pop %v2725
    %v2734 = vmul.f32 1.0, %v2733
    %v2735 = vrcp.pop %v2726
    %v2736 = vmul.f32 1.0, %v2735
    %v2737 = vrcp.pop %v2727
    %v2738 = vmul.f32 1.0, %v2737
    %v2739 = vrcp.pop %v2728
    %v2740 = vmul.f32 1.0, %v2739
    %v2741 = vtanh.pop %v2700
    %v2742 = vtanh.pop %v2704
    %v2743 = vmul.f32 %v2732, %v2353
    %v2744 = vmul.f32 %v2738, %v2354
    %v2745 = vmul.f32 %v2730, %v2741
    %v2746 = vmul.f32 %v2736, %v2742
    %v2747 = vadd.f32 %v2743, %v2745
    %v2748 = vadd.f32 %v2744, %v2746
    %v2749 = vtanh.pop %v2747
    %v2750 = vtanh.pop %v2748
    %v2751 = vmul.f32 %v2734, %v2749
    %v2752 = vmul.f32 %v2740, %v2750
    %vm2753 = vcmp.eq.s32.totalorder %v151, 3
    %vm2754 = vcmp.eq.s32.totalorder %v152, 3
    %v2755 = vsel %vm2753, 1, 0
    %v2756 = vsel %vm2754, 1, 0
    %2757 = vset.pattern.permute.xlu0 0
    %2758 = vperm.xlu0 %2757, %v2755
    %v2759 = vpop.permute.xlu0 %2758
    %2760 = vset.pattern.permute.xlu0 0
    %2761 = vperm.xlu0 %2760, %v2756
    %v2762 = vpop.permute.xlu0 %2761
    %vm2763 = vcmp.eq.s32.totalorder %v2759, 1
    %vm2764 = vcmp.eq.s32.totalorder %v2762, 1
    %v2765 = vsel %vm2763, %v2751, %v2371
    %v2766 = vsel %vm2764, %v2752, %v2372
    %2767 = vmatprep.subr.bf16.mxu0 %v751
    %2768 = vmatpush1.bf16.msra.mxu0 %v750
    %2769 = vmatprep.subr.bf16.mxu0 %v747
    %2770 = vmatpush1.bf16.msra.mxu0 %v746
    %2771 = vmatprep.subr.bf16.mxu0 %v743
    %2772 = vmatpush1.bf16.msra.mxu0 %v742
    %2773 = vmatprep.subr.bf16.mxu0 %v739
    %2774 = vmatpush1.bf16.msra.mxu0 %v738
    %2775 = vmatprep.subr.bf16.mxu0 %v735
    %2776 = vmatpush1.bf16.msra.mxu0 %v734
    %2777 = vmatprep.subr.bf16.mxu0 %v731
    %2778 = vmatpush1.bf16.msra.mxu0 %v730
    %2779 = vmatprep.subr.bf16.mxu0 %v727
    %2780 = vmatpush1.bf16.msra.mxu0 %v726
    %2781 = vmatprep.subr.bf16.mxu0 %v723
    %2782 = vmatpush1.bf16.msra.mxu0 %v722
    %2783 = vmatprep.subr.bf16.mxu0 0
    %2784 = vmatpush2.bf16.msra.mxu0 0
    %2785 = vmatprep.subr.bf16.mxu0 0
    %2786 = vmatpush2.bf16.msra.mxu0 0
    %2787 = vmatprep.subr.bf16.mxu0 0
    %2788 = vmatpush2.bf16.msra.mxu0 0
    %2789 = vmatprep.subr.bf16.mxu0 0
    %2790 = vmatpush2.bf16.msra.mxu0 0
    %2791 = vmatprep.subr.bf16.mxu0 0
    %2792 = vmatpush2.bf16.msra.mxu0 0
    %2793 = vmatprep.subr.bf16.mxu0 0
    %2794 = vmatpush2.bf16.msra.mxu0 0
    %2795 = vmatprep.subr.bf16.mxu0 0
    %2796 = vmatpush2.bf16.msra.mxu0 0
    %2797 = vmatprep.subr.bf16.mxu0 0
    %2798 = vmatpush2.bf16.msra.mxu0 0
    %2799 = vmatprep.mubr.bf16.mxu0 0
    %2800 = vmatmul.mubr.bf16.gmra.mxu0 %v2610
    %v2801 = vpop.f32.mrf.mxu0
    %v2802 = vadd.f32 0.0, %v2801
    %v2803 = vpop.f32.mrf.mxu0
    %v2804 = vadd.f32 0.0, %v2803
    %v2805 = vpop.f32.mrf.mxu0
    %v2806 = vadd.f32 0.0, %v2805
    %v2807 = vpop.f32.mrf.mxu0
    %v2808 = vadd.f32 0.0, %v2807
    %2809 = vdwg.mxu0
    %2810 = vmatprep.subr.bf16.mxu0 %v753
    %2811 = vmatpush1.bf16.msra.mxu0 %v752
    %2812 = vmatprep.subr.bf16.mxu0 %v749
    %2813 = vmatpush1.bf16.msra.mxu0 %v748
    %2814 = vmatprep.subr.bf16.mxu0 %v745
    %2815 = vmatpush1.bf16.msra.mxu0 %v744
    %2816 = vmatprep.subr.bf16.mxu0 %v741
    %2817 = vmatpush1.bf16.msra.mxu0 %v740
    %2818 = vmatprep.subr.bf16.mxu0 %v737
    %2819 = vmatpush1.bf16.msra.mxu0 %v736
    %2820 = vmatprep.subr.bf16.mxu0 %v733
    %2821 = vmatpush1.bf16.msra.mxu0 %v732
    %2822 = vmatprep.subr.bf16.mxu0 %v729
    %2823 = vmatpush1.bf16.msra.mxu0 %v728
    %2824 = vmatprep.subr.bf16.mxu0 %v725
    %2825 = vmatpush1.bf16.msra.mxu0 %v724
    %2826 = vmatprep.subr.bf16.mxu0 0
    %2827 = vmatpush2.bf16.msra.mxu0 0
    %2828 = vmatprep.subr.bf16.mxu0 0
    %2829 = vmatpush2.bf16.msra.mxu0 0
    %2830 = vmatprep.subr.bf16.mxu0 0
    %2831 = vmatpush2.bf16.msra.mxu0 0
    %2832 = vmatprep.subr.bf16.mxu0 0
    %2833 = vmatpush2.bf16.msra.mxu0 0
    %2834 = vmatprep.subr.bf16.mxu0 0
    %2835 = vmatpush2.bf16.msra.mxu0 0
    %2836 = vmatprep.subr.bf16.mxu0 0
    %2837 = vmatpush2.bf16.msra.mxu0 0
    %2838 = vmatprep.subr.bf16.mxu0 0
    %2839 = vmatpush2.bf16.msra.mxu0 0
    %2840 = vmatprep.subr.bf16.mxu0 0
    %2841 = vmatpush2.bf16.msra.mxu0 0
    %2842 = vmatprep.mubr.bf16.mxu0 0
    %2843 = vmatmul.mubr.bf16.gmra.mxu0 %v2610
    %v2844 = vpop.f32.mrf.mxu0
    %v2845 = vadd.f32 0.0, %v2844
    %v2846 = vpop.f32.mrf.mxu0
    %v2847 = vadd.f32 0.0, %v2846
    %v2848 = vpop.f32.mrf.mxu0
    %v2849 = vadd.f32 0.0, %v2848
    %v2850 = vpop.f32.mrf.mxu0
    %v2851 = vadd.f32 0.0, %v2850
    %2852 = vdwg.mxu0
    %v2853 = vld [vmem:[#allocation2 + $0x100] sm:$0xff]
    %v2854 = vld [vmem:[#allocation2 + $0x108] sm:$0xff]
    %v2855 = vld [vmem:[#allocation2 + $0x110] sm:$0xff]
    %v2856 = vld [vmem:[#allocation2 + $0x118] sm:$0xff]
    %v2857 = vld [vmem:[#allocation2 + $0x120] sm:$0xff]
    %v2858 = vld [vmem:[#allocation2 + $0x128] sm:$0xff]
    %v2859 = vld [vmem:[#allocation2 + $0x130] sm:$0xff]
    %v2860 = vld [vmem:[#allocation2 + $0x138] sm:$0xff]
    %v2861 = vadd.f32 %v2853, %v2802
    %v2862 = vadd.f32 %v2854, %v2804
    %v2863 = vadd.f32 %v2855, %v2845
    %v2864 = vadd.f32 %v2856, %v2847
    %v2865 = vadd.f32 %v2857, %v2806
    %v2866 = vadd.f32 %v2858, %v2808
    %v2867 = vadd.f32 %v2859, %v2849
    %v2868 = vadd.f32 %v2860, %v2851
    %v2869 = vxor.u32 %v2861, 2147483648
    %v2870 = vxor.u32 %v2862, 2147483648
    %v2871 = vxor.u32 %v2863, 2147483648
    %v2872 = vxor.u32 %v2865, 2147483648
    %v2873 = vxor.u32 %v2866, 2147483648
    %v2874 = vxor.u32 %v2867, 2147483648
    %v2875 = vmul.f32 %v2869, 1.442695
    %v2876 = vpow.pop %v2875
    %v2877 = vmul.f32 %v2870, 1.442695
    %v2878 = vpow.pop %v2877
    %v2879 = vmul.f32 %v2871, 1.442695
    %v2880 = vpow.pop %v2879
    %v2881 = vmul.f32 %v2872, 1.442695
    %v2882 = vpow.pop %v2881
    %v2883 = vmul.f32 %v2873, 1.442695
    %v2884 = vpow.pop %v2883
    %v2885 = vmul.f32 %v2874, 1.442695
    %v2886 = vpow.pop %v2885
    %v2887 = vadd.f32 %v2876, 1.0
    %v2888 = vadd.f32 %v2878, 1.0
    %v2889 = vadd.f32 %v2880, 1.0
    %v2890 = vadd.f32 %v2882, 1.0
    %v2891 = vadd.f32 %v2884, 1.0
    %v2892 = vadd.f32 %v2886, 1.0
    %v2893 = vrcp.pop %v2887
    %v2894 = vmul.f32 1.0, %v2893
    %v2895 = vrcp.pop %v2888
    %v2896 = vmul.f32 1.0, %v2895
    %v2897 = vrcp.pop %v2889
    %v2898 = vmul.f32 1.0, %v2897
    %v2899 = vrcp.pop %v2890
    %v2900 = vmul.f32 1.0, %v2899
    %v2901 = vrcp.pop %v2891
    %v2902 = vmul.f32 1.0, %v2901
    %v2903 = vrcp.pop %v2892
    %v2904 = vmul.f32 1.0, %v2903
    %v2905 = vtanh.pop %v2864
    %v2906 = vtanh.pop %v2868
    %v2907 = vmul.f32 %v2896, %v2517
    %v2908 = vmul.f32 %v2902, %v2518
    %v2909 = vmul.f32 %v2894, %v2905
    %v2910 = vmul.f32 %v2900, %v2906
    %v2911 = vadd.f32 %v2907, %v2909
    %v2912 = vadd.f32 %v2908, %v2910
    %v2913 = vtanh.pop %v2911
    %v2914 = vtanh.pop %v2912
    %v2915 = vmul.f32 %v2898, %v2913
    %v2916 = vmul.f32 %v2904, %v2914
    %v2917 = vpack.c.bf16 %v2752, %v2751
    %2918 = vmatprep.subr.bf16.mxu0 %v1093
    %2919 = vmatpush1.bf16.msra.mxu0 %v1092
    %2920 = vmatprep.subr.bf16.mxu0 %v1089
    %2921 = vmatpush1.bf16.msra.mxu0 %v1088
    %2922 = vmatprep.subr.bf16.mxu0 %v1085
    %2923 = vmatpush1.bf16.msra.mxu0 %v1084
    %2924 = vmatprep.subr.bf16.mxu0 %v1081
    %2925 = vmatpush1.bf16.msra.mxu0 %v1080
    %2926 = vmatprep.subr.bf16.mxu0 %v1077
    %2927 = vmatpush1.bf16.msra.mxu0 %v1076
    %2928 = vmatprep.subr.bf16.mxu0 %v1073
    %2929 = vmatpush1.bf16.msra.mxu0 %v1072
    %2930 = vmatprep.subr.bf16.mxu0 %v1069
    %2931 = vmatpush1.bf16.msra.mxu0 %v1068
    %2932 = vmatprep.subr.bf16.mxu0 %v1065
    %2933 = vmatpush1.bf16.msra.mxu0 %v1064
    %2934 = vmatprep.subr.bf16.mxu0 0
    %2935 = vmatpush2.bf16.msra.mxu0 0
    %2936 = vmatprep.subr.bf16.mxu0 0
    %2937 = vmatpush2.bf16.msra.mxu0 0
    %2938 = vmatprep.subr.bf16.mxu0 0
    %2939 = vmatpush2.bf16.msra.mxu0 0
    %2940 = vmatprep.subr.bf16.mxu0 0
    %2941 = vmatpush2.bf16.msra.mxu0 0
    %2942 = vmatprep.subr.bf16.mxu0 0
    %2943 = vmatpush2.bf16.msra.mxu0 0
    %2944 = vmatprep.subr.bf16.mxu0 0
    %2945 = vmatpush2.bf16.msra.mxu0 0
    %2946 = vmatprep.subr.bf16.mxu0 0
    %2947 = vmatpush2.bf16.msra.mxu0 0
    %2948 = vmatprep.subr.bf16.mxu0 0
    %2949 = vmatpush2.bf16.msra.mxu0 0
    %2950 = vmatprep.mubr.bf16.mxu0 0
    %2951 = vmatmul.mubr.bf16.gmra.mxu0 %v2917
    %v2952 = vpop.f32.mrf.mxu0
    %v2953 = vadd.f32 0.0, %v2952
    %v2954 = vpop.f32.mrf.mxu0
    %v2955 = vadd.f32 0.0, %v2954
    %v2956 = vpop.f32.mrf.mxu0
    %v2957 = vadd.f32 0.0, %v2956
    %v2958 = vpop.f32.mrf.mxu0
    %v2959 = vadd.f32 0.0, %v2958
    %2960 = vdwg.mxu0
    %2961 = vmatprep.subr.bf16.mxu0 %v1095
    %2962 = vmatpush1.bf16.msra.mxu0 %v1094
    %2963 = vmatprep.subr.bf16.mxu0 %v1091
    %2964 = vmatpush1.bf16.msra.mxu0 %v1090
    %2965 = vmatprep.subr.bf16.mxu0 %v1087
    %2966 = vmatpush1.bf16.msra.mxu0 %v1086
    %2967 = vmatprep.subr.bf16.mxu0 %v1083
    %2968 = vmatpush1.bf16.msra.mxu0 %v1082
    %2969 = vmatprep.subr.bf16.mxu0 %v1079
    %2970 = vmatpush1.bf16.msra.mxu0 %v1078
    %2971 = vmatprep.subr.bf16.mxu0 %v1075
    %2972 = vmatpush1.bf16.msra.mxu0 %v1074
    %2973 = vmatprep.subr.bf16.mxu0 %v1071
    %2974 = vmatpush1.bf16.msra.mxu0 %v1070
    %2975 = vmatprep.subr.bf16.mxu0 %v1067
    %2976 = vmatpush1.bf16.msra.mxu0 %v1066
    %2977 = vmatprep.subr.bf16.mxu0 0
    %2978 = vmatpush2.bf16.msra.mxu0 0
    %2979 = vmatprep.subr.bf16.mxu0 0
    %2980 = vmatpush2.bf16.msra.mxu0 0
    %2981 = vmatprep.subr.bf16.mxu0 0
    %2982 = vmatpush2.bf16.msra.mxu0 0
    %2983 = vmatprep.subr.bf16.mxu0 0
    %2984 = vmatpush2.bf16.msra.mxu0 0
    %2985 = vmatprep.subr.bf16.mxu0 0
    %2986 = vmatpush2.bf16.msra.mxu0 0
    %2987 = vmatprep.subr.bf16.mxu0 0
    %2988 = vmatpush2.bf16.msra.mxu0 0
    %2989 = vmatprep.subr.bf16.mxu0 0
    %2990 = vmatpush2.bf16.msra.mxu0 0
    %2991 = vmatprep.subr.bf16.mxu0 0
    %2992 = vmatpush2.bf16.msra.mxu0 0
    %2993 = vmatprep.mubr.bf16.mxu0 0
    %2994 = vmatmul.mubr.bf16.gmra.mxu0 %v2917
    %v2995 = vpop.f32.mrf.mxu0
    %v2996 = vadd.f32 0.0, %v2995
    %v2997 = vpop.f32.mrf.mxu0
    %v2998 = vadd.f32 0.0, %v2997
    %v2999 = vpop.f32.mrf.mxu0
    %v3000 = vadd.f32 0.0, %v2999
    %v3001 = vpop.f32.mrf.mxu0
    %v3002 = vadd.f32 0.0, %v3001
    %3003 = vdwg.mxu0
    %v3004 = vpack.c.bf16 %v2916, %v2915
    %3005 = vmatprep.subr.bf16.mxu0 %v1372
    %3006 = vmatpush1.bf16.msra.mxu0 %v1371
    %3007 = vmatprep.subr.bf16.mxu0 %v1368
    %3008 = vmatpush1.bf16.msra.mxu0 %v1367
    %3009 = vmatprep.subr.bf16.mxu0 %v1364
    %3010 = vmatpush1.bf16.msra.mxu0 %v1363
    %3011 = vmatprep.subr.bf16.mxu0 %v1360
    %3012 = vmatpush1.bf16.msra.mxu0 %v1359
    %3013 = vmatprep.subr.bf16.mxu0 %v1356
    %3014 = vmatpush1.bf16.msra.mxu0 %v1355
    %3015 = vmatprep.subr.bf16.mxu0 %v1352
    %3016 = vmatpush1.bf16.msra.mxu0 %v1351
    %3017 = vmatprep.subr.bf16.mxu0 %v1348
    %3018 = vmatpush1.bf16.msra.mxu0 %v1347
    %3019 = vmatprep.subr.bf16.mxu0 %v1344
    %3020 = vmatpush1.bf16.msra.mxu0 %v1343
    %3021 = vmatprep.subr.bf16.mxu0 0
    %3022 = vmatpush2.bf16.msra.mxu0 0
    %3023 = vmatprep.subr.bf16.mxu0 0
    %3024 = vmatpush2.bf16.msra.mxu0 0
    %3025 = vmatprep.subr.bf16.mxu0 0
    %3026 = vmatpush2.bf16.msra.mxu0 0
    %3027 = vmatprep.subr.bf16.mxu0 0
    %3028 = vmatpush2.bf16.msra.mxu0 0
    %3029 = vmatprep.subr.bf16.mxu0 0
    %3030 = vmatpush2.bf16.msra.mxu0 0
    %3031 = vmatprep.subr.bf16.mxu0 0
    %3032 = vmatpush2.bf16.msra.mxu0 0
    %3033 = vmatprep.subr.bf16.mxu0 0
    %3034 = vmatpush2.bf16.msra.mxu0 0
    %3035 = vmatprep.subr.bf16.mxu0 0
    %3036 = vmatpush2.bf16.msra.mxu0 0
    %3037 = vmatprep.mubr.bf16.mxu0 0
    %3038 = vmatmul.mubr.bf16.gmra.mxu0 %v3004
    %v3039 = vpop.f32.mrf.mxu0
    %v3040 = vadd.f32 %v2953, %v3039
    %v3041 = vpop.f32.mrf.mxu0
    %v3042 = vadd.f32 %v2955, %v3041
    %v3043 = vpop.f32.mrf.mxu0
    %v3044 = vadd.f32 %v2957, %v3043
    %v3045 = vpop.f32.mrf.mxu0
    %v3046 = vadd.f32 %v2959, %v3045
    %3047 = vdwg.mxu0
    %3048 = vmatprep.subr.bf16.mxu0 %v1374
    %3049 = vmatpush1.bf16.msra.mxu0 %v1373
    %3050 = vmatprep.subr.bf16.mxu0 %v1370
    %3051 = vmatpush1.bf16.msra.mxu0 %v1369
    %3052 = vmatprep.subr.bf16.mxu0 %v1366
    %3053 = vmatpush1.bf16.msra.mxu0 %v1365
    %3054 = vmatprep.subr.bf16.mxu0 %v1362
    %3055 = vmatpush1.bf16.msra.mxu0 %v1361
    %3056 = vmatprep.subr.bf16.mxu0 %v1358
    %3057 = vmatpush1.bf16.msra.mxu0 %v1357
    %3058 = vmatprep.subr.bf16.mxu0 %v1354
    %3059 = vmatpush1.bf16.msra.mxu0 %v1353
    %3060 = vmatprep.subr.bf16.mxu0 %v1350
    %3061 = vmatpush1.bf16.msra.mxu0 %v1349
    %3062 = vmatprep.subr.bf16.mxu0 %v1346
    %3063 = vmatpush1.bf16.msra.mxu0 %v1345
    %3064 = vmatprep.subr.bf16.mxu0 0
    %3065 = vmatpush2.bf16.msra.mxu0 0
    %3066 = vmatprep.subr.bf16.mxu0 0
    %3067 = vmatpush2.bf16.msra.mxu0 0
    %3068 = vmatprep.subr.bf16.mxu0 0
    %3069 = vmatpush2.bf16.msra.mxu0 0
    %3070 = vmatprep.subr.bf16.mxu0 0
    %3071 = vmatpush2.bf16.msra.mxu0 0
    %3072 = vmatprep.subr.bf16.mxu0 0
    %3073 = vmatpush2.bf16.msra.mxu0 0
    %3074 = vmatprep.subr.bf16.mxu0 0
    %3075 = vmatpush2.bf16.msra.mxu0 0
    %3076 = vmatprep.subr.bf16.mxu0 0
    %3077 = vmatpush2.bf16.msra.mxu0 0
    %3078 = vmatprep.subr.bf16.mxu0 0
    %3079 = vmatpush2.bf16.msra.mxu0 0
    %3080 = vmatprep.mubr.bf16.mxu0 0
    %3081 = vmatmul.mubr.bf16.gmra.mxu0 %v3004
    %v3082 = vpop.f32.mrf.mxu0
    %v3083 = vadd.f32 %v2996, %v3082
    %v3084 = vpop.f32.mrf.mxu0
    %v3085 = vadd.f32 %v2998, %v3084
    %v3086 = vpop.f32.mrf.mxu0
    %v3087 = vadd.f32 %v3000, %v3086
    %v3088 = vpop.f32.mrf.mxu0
    %v3089 = vadd.f32 %v3002, %v3088
    %3090 = vdwg.mxu0
    %v3091 = vadd.f32 %v3040, %v1498
    %v3092 = vadd.f32 %v3042, %v1502
    %v3093 = vadd.f32 %v3083, %v1506
    %v3094 = vadd.f32 %v3085, %v1510
    %v3095 = vadd.f32 %v3044, %v1498
    %v3096 = vadd.f32 %v3046, %v1502
    %v3097 = vadd.f32 %v3087, %v1506
    %v3098 = vadd.f32 %v3089, %v1510
    %v3099 = vxor.u32 %v3091, 2147483648
    %v3100 = vxor.u32 %v3092, 2147483648
    %v3101 = vxor.u32 %v3093, 2147483648
    %v3102 = vxor.u32 %v3095, 2147483648
    %v3103 = vxor.u32 %v3096, 2147483648
    %v3104 = vxor.u32 %v3097, 2147483648
    %v3105 = vmul.f32 %v3099, 1.442695
    %v3106 = vpow.pop %v3105
    %v3107 = vmul.f32 %v3100, 1.442695
    %v3108 = vpow.pop %v3107
    %v3109 = vmul.f32 %v3101, 1.442695
    %v3110 = vpow.pop %v3109
    %v3111 = vmul.f32 %v3102, 1.442695
    %v3112 = vpow.pop %v3111
    %v3113 = vmul.f32 %v3103, 1.442695
    %v3114 = vpow.pop %v3113
    %v3115 = vmul.f32 %v3104, 1.442695
    %v3116 = vpow.pop %v3115
    %v3117 = vadd.f32 %v3106, 1.0
    %v3118 = vadd.f32 %v3108, 1.0
    %v3119 = vadd.f32 %v3110, 1.0
    %v3120 = vadd.f32 %v3112, 1.0
    %v3121 = vadd.f32 %v3114, 1.0
    %v3122 = vadd.f32 %v3116, 1.0
    %v3123 = vrcp.pop %v3117
    %v3124 = vmul.f32 1.0, %v3123
    %v3125 = vrcp.pop %v3118
    %v3126 = vmul.f32 1.0, %v3125
    %v3127 = vrcp.pop %v3119
    %v3128 = vmul.f32 1.0, %v3127
    %v3129 = vrcp.pop %v3120
    %v3130 = vmul.f32 1.0, %v3129
    %v3131 = vrcp.pop %v3121
    %v3132 = vmul.f32 1.0, %v3131
    %v3133 = vrcp.pop %v3122
    %v3134 = vmul.f32 1.0, %v3133
    %v3135 = vtanh.pop %v3094
    %v3136 = vtanh.pop %v3098
    %v3137 = vmul.f32 %v3126, %v2747
    %v3138 = vmul.f32 %v3132, %v2748
    %v3139 = vmul.f32 %v3124, %v3135
    %v3140 = vmul.f32 %v3130, %v3136
    %v3141 = vadd.f32 %v3137, %v3139
    %v3142 = vadd.f32 %v3138, %v3140
    %v3143 = vtanh.pop %v3141
    %v3144 = vtanh.pop %v3142
    %v3145 = vmul.f32 %v3128, %v3143
    %v3146 = vmul.f32 %v3134, %v3144
    %vm3147 = vcmp.eq.s32.totalorder %v151, 4
    %vm3148 = vcmp.eq.s32.totalorder %v152, 4
    %v3149 = vsel %vm3147, 1, 0
    %v3150 = vsel %vm3148, 1, 0
    %3151 = vset.pattern.permute.xlu0 0
    %3152 = vperm.xlu0 %3151, %v3149
    %v3153 = vpop.permute.xlu0 %3152
    %3154 = vset.pattern.permute.xlu0 0
    %3155 = vperm.xlu0 %3154, %v3150
    %v3156 = vpop.permute.xlu0 %3155
    %vm3157 = vcmp.eq.s32.totalorder %v3153, 1
    %vm3158 = vcmp.eq.s32.totalorder %v3156, 1
    %v3159 = vsel %vm3157, %v3145, %v2765
    %v3160 = vsel %vm3158, %v3146, %v2766
    %3161 = vmatprep.subr.bf16.mxu0 %v751
    %3162 = vmatpush1.bf16.msra.mxu0 %v750
    %3163 = vmatprep.subr.bf16.mxu0 %v747
    %3164 = vmatpush1.bf16.msra.mxu0 %v746
    %3165 = vmatprep.subr.bf16.mxu0 %v743
    %3166 = vmatpush1.bf16.msra.mxu0 %v742
    %3167 = vmatprep.subr.bf16.mxu0 %v739
    %3168 = vmatpush1.bf16.msra.mxu0 %v738
    %3169 = vmatprep.subr.bf16.mxu0 %v735
    %3170 = vmatpush1.bf16.msra.mxu0 %v734
    %3171 = vmatprep.subr.bf16.mxu0 %v731
    %3172 = vmatpush1.bf16.msra.mxu0 %v730
    %3173 = vmatprep.subr.bf16.mxu0 %v727
    %3174 = vmatpush1.bf16.msra.mxu0 %v726
    %3175 = vmatprep.subr.bf16.mxu0 %v723
    %3176 = vmatpush1.bf16.msra.mxu0 %v722
    %3177 = vmatprep.subr.bf16.mxu0 0
    %3178 = vmatpush2.bf16.msra.mxu0 0
    %3179 = vmatprep.subr.bf16.mxu0 0
    %3180 = vmatpush2.bf16.msra.mxu0 0
    %3181 = vmatprep.subr.bf16.mxu0 0
    %3182 = vmatpush2.bf16.msra.mxu0 0
    %3183 = vmatprep.subr.bf16.mxu0 0
    %3184 = vmatpush2.bf16.msra.mxu0 0
    %3185 = vmatprep.subr.bf16.mxu0 0
    %3186 = vmatpush2.bf16.msra.mxu0 0
    %3187 = vmatprep.subr.bf16.mxu0 0
    %3188 = vmatpush2.bf16.msra.mxu0 0
    %3189 = vmatprep.subr.bf16.mxu0 0
    %3190 = vmatpush2.bf16.msra.mxu0 0
    %3191 = vmatprep.subr.bf16.mxu0 0
    %3192 = vmatpush2.bf16.msra.mxu0 0
    %3193 = vmatprep.mubr.bf16.mxu0 0
    %3194 = vmatmul.mubr.bf16.gmra.mxu0 %v3004
    %v3195 = vpop.f32.mrf.mxu0
    %v3196 = vadd.f32 0.0, %v3195
    %v3197 = vpop.f32.mrf.mxu0
    %v3198 = vadd.f32 0.0, %v3197
    %v3199 = vpop.f32.mrf.mxu0
    %v3200 = vadd.f32 0.0, %v3199
    %v3201 = vpop.f32.mrf.mxu0
    %v3202 = vadd.f32 0.0, %v3201
    %3203 = vdwg.mxu0
    %3204 = vmatprep.subr.bf16.mxu0 %v753
    %3205 = vmatpush1.bf16.msra.mxu0 %v752
    %3206 = vmatprep.subr.bf16.mxu0 %v749
    %3207 = vmatpush1.bf16.msra.mxu0 %v748
    %3208 = vmatprep.subr.bf16.mxu0 %v745
    %3209 = vmatpush1.bf16.msra.mxu0 %v744
    %3210 = vmatprep.subr.bf16.mxu0 %v741
    %3211 = vmatpush1.bf16.msra.mxu0 %v740
    %3212 = vmatprep.subr.bf16.mxu0 %v737
    %3213 = vmatpush1.bf16.msra.mxu0 %v736
    %3214 = vmatprep.subr.bf16.mxu0 %v733
    %3215 = vmatpush1.bf16.msra.mxu0 %v732
    %3216 = vmatprep.subr.bf16.mxu0 %v729
    %3217 = vmatpush1.bf16.msra.mxu0 %v728
    %3218 = vmatprep.subr.bf16.mxu0 %v725
    %3219 = vmatpush1.bf16.msra.mxu0 %v724
    %3220 = vmatprep.subr.bf16.mxu0 0
    %3221 = vmatpush2.bf16.msra.mxu0 0
    %3222 = vmatprep.subr.bf16.mxu0 0
    %3223 = vmatpush2.bf16.msra.mxu0 0
    %3224 = vmatprep.subr.bf16.mxu0 0
    %3225 = vmatpush2.bf16.msra.mxu0 0
    %3226 = vmatprep.subr.bf16.mxu0 0
    %3227 = vmatpush2.bf16.msra.mxu0 0
    %3228 = vmatprep.subr.bf16.mxu0 0
    %3229 = vmatpush2.bf16.msra.mxu0 0
    %3230 = vmatprep.subr.bf16.mxu0 0
    %3231 = vmatpush2.bf16.msra.mxu0 0
    %3232 = vmatprep.subr.bf16.mxu0 0
    %3233 = vmatpush2.bf16.msra.mxu0 0
    %3234 = vmatprep.subr.bf16.mxu0 0
    %3235 = vmatpush2.bf16.msra.mxu0 0
    %3236 = vmatprep.mubr.bf16.mxu0 0
    %3237 = vmatmul.mubr.bf16.gmra.mxu0 %v3004
    %v3238 = vpop.f32.mrf.mxu0
    %v3239 = vadd.f32 0.0, %v3238
    %v3240 = vpop.f32.mrf.mxu0
    %v3241 = vadd.f32 0.0, %v3240
    %v3242 = vpop.f32.mrf.mxu0
    %v3243 = vadd.f32 0.0, %v3242
    %v3244 = vpop.f32.mrf.mxu0
    %v3245 = vadd.f32 0.0, %v3244
    %3246 = vdwg.mxu0
    %v3247 = vld [vmem:[#allocation2 + $0x140] sm:$0xff]
    %v3248 = vld [vmem:[#allocation2 + $0x148] sm:$0xff]
    %v3249 = vld [vmem:[#allocation2 + $0x150] sm:$0xff]
    %v3250 = vld [vmem:[#allocation2 + $0x158] sm:$0xff]
    %v3251 = vld [vmem:[#allocation2 + $0x160] sm:$0xff]
    %v3252 = vld [vmem:[#allocation2 + $0x168] sm:$0xff]
    %v3253 = vld [vmem:[#allocation2 + $0x170] sm:$0xff]
    %v3254 = vld [vmem:[#allocation2 + $0x178] sm:$0xff]
    %v3255 = vadd.f32 %v3247, %v3196
    %v3256 = vadd.f32 %v3248, %v3198
    %v3257 = vadd.f32 %v3249, %v3239
    %v3258 = vadd.f32 %v3250, %v3241
    %v3259 = vadd.f32 %v3251, %v3200
    %v3260 = vadd.f32 %v3252, %v3202
    %v3261 = vadd.f32 %v3253, %v3243
    %v3262 = vadd.f32 %v3254, %v3245
    %v3263 = vxor.u32 %v3255, 2147483648
    %v3264 = vxor.u32 %v3256, 2147483648
    %v3265 = vxor.u32 %v3257, 2147483648
    %v3266 = vxor.u32 %v3259, 2147483648
    %v3267 = vxor.u32 %v3260, 2147483648
    %v3268 = vxor.u32 %v3261, 2147483648
    %v3269 = vmul.f32 %v3263, 1.442695
    %v3270 = vpow.pop %v3269
    %v3271 = vmul.f32 %v3264, 1.442695
    %v3272 = vpow.pop %v3271
    %v3273 = vmul.f32 %v3265, 1.442695
    %v3274 = vpow.pop %v3273
    %v3275 = vmul.f32 %v3266, 1.442695
    %v3276 = vpow.pop %v3275
    %v3277 = vmul.f32 %v3267, 1.442695
    %v3278 = vpow.pop %v3277
    %v3279 = vmul.f32 %v3268, 1.442695
    %v3280 = vpow.pop %v3279
    %v3281 = vadd.f32 %v3270, 1.0
    %v3282 = vadd.f32 %v3272, 1.0
    %v3283 = vadd.f32 %v3274, 1.0
    %v3284 = vadd.f32 %v3276, 1.0
    %v3285 = vadd.f32 %v3278, 1.0
    %v3286 = vadd.f32 %v3280, 1.0
    %v3287 = vrcp.pop %v3281
    %v3288 = vmul.f32 1.0, %v3287
    %v3289 = vrcp.pop %v3282
    %v3290 = vmul.f32 1.0, %v3289
    %v3291 = vrcp.pop %v3283
    %v3292 = vmul.f32 1.0, %v3291
    %v3293 = vrcp.pop %v3284
    %v3294 = vmul.f32 1.0, %v3293
    %v3295 = vrcp.pop %v3285
    %v3296 = vmul.f32 1.0, %v3295
    %v3297 = vrcp.pop %v3286
    %v3298 = vmul.f32 1.0, %v3297
    %v3299 = vtanh.pop %v3258
    %v3300 = vtanh.pop %v3262
    %v3301 = vmul.f32 %v3290, %v2911
    %v3302 = vmul.f32 %v3296, %v2912
    %v3303 = vmul.f32 %v3288, %v3299
    %v3304 = vmul.f32 %v3294, %v3300
    %v3305 = vadd.f32 %v3301, %v3303
    %v3306 = vadd.f32 %v3302, %v3304
    %v3307 = vtanh.pop %v3305
    %v3308 = vtanh.pop %v3306
    %v3309 = vmul.f32 %v3292, %v3307
    %v3310 = vmul.f32 %v3298, %v3308
    %v3311 = vpack.c.bf16 %v3146, %v3145
    %3312 = vmatprep.subr.bf16.mxu0 %v1093
    %3313 = vmatpush1.bf16.msra.mxu0 %v1092
    %3314 = vmatprep.subr.bf16.mxu0 %v1089
    %3315 = vmatpush1.bf16.msra.mxu0 %v1088
    %3316 = vmatprep.subr.bf16.mxu0 %v1085
    %3317 = vmatpush1.bf16.msra.mxu0 %v1084
    %3318 = vmatprep.subr.bf16.mxu0 %v1081
    %3319 = vmatpush1.bf16.msra.mxu0 %v1080
    %3320 = vmatprep.subr.bf16.mxu0 %v1077
    %3321 = vmatpush1.bf16.msra.mxu0 %v1076
    %3322 = vmatprep.subr.bf16.mxu0 %v1073
    %3323 = vmatpush1.bf16.msra.mxu0 %v1072
    %3324 = vmatprep.subr.bf16.mxu0 %v1069
    %3325 = vmatpush1.bf16.msra.mxu0 %v1068
    %3326 = vmatprep.subr.bf16.mxu0 %v1065
    %3327 = vmatpush1.bf16.msra.mxu0 %v1064
    %3328 = vmatprep.subr.bf16.mxu0 0
    %3329 = vmatpush2.bf16.msra.mxu0 0
    %3330 = vmatprep.subr.bf16.mxu0 0
    %3331 = vmatpush2.bf16.msra.mxu0 0
    %3332 = vmatprep.subr.bf16.mxu0 0
    %3333 = vmatpush2.bf16.msra.mxu0 0
    %3334 = vmatprep.subr.bf16.mxu0 0
    %3335 = vmatpush2.bf16.msra.mxu0 0
    %3336 = vmatprep.subr.bf16.mxu0 0
    %3337 = vmatpush2.bf16.msra.mxu0 0
    %3338 = vmatprep.subr.bf16.mxu0 0
    %3339 = vmatpush2.bf16.msra.mxu0 0
    %3340 = vmatprep.subr.bf16.mxu0 0
    %3341 = vmatpush2.bf16.msra.mxu0 0
    %3342 = vmatprep.subr.bf16.mxu0 0
    %3343 = vmatpush2.bf16.msra.mxu0 0
    %3344 = vmatprep.mubr.bf16.mxu0 0
    %3345 = vmatmul.mubr.bf16.gmra.mxu0 %v3311
    %v3346 = vpop.f32.mrf.mxu0
    %v3347 = vadd.f32 0.0, %v3346
    %v3348 = vpop.f32.mrf.mxu0
    %v3349 = vadd.f32 0.0, %v3348
    %v3350 = vpop.f32.mrf.mxu0
    %v3351 = vadd.f32 0.0, %v3350
    %v3352 = vpop.f32.mrf.mxu0
    %v3353 = vadd.f32 0.0, %v3352
    %3354 = vdwg.mxu0
    %3355 = vmatprep.subr.bf16.mxu0 %v1095
    %3356 = vmatpush1.bf16.msra.mxu0 %v1094
    %3357 = vmatprep.subr.bf16.mxu0 %v1091
    %3358 = vmatpush1.bf16.msra.mxu0 %v1090
    %3359 = vmatprep.subr.bf16.mxu0 %v1087
    %3360 = vmatpush1.bf16.msra.mxu0 %v1086
    %3361 = vmatprep.subr.bf16.mxu0 %v1083
    %3362 = vmatpush1.bf16.msra.mxu0 %v1082
    %3363 = vmatprep.subr.bf16.mxu0 %v1079
    %3364 = vmatpush1.bf16.msra.mxu0 %v1078
    %3365 = vmatprep.subr.bf16.mxu0 %v1075
    %3366 = vmatpush1.bf16.msra.mxu0 %v1074
    %3367 = vmatprep.subr.bf16.mxu0 %v1071
    %3368 = vmatpush1.bf16.msra.mxu0 %v1070
    %3369 = vmatprep.subr.bf16.mxu0 %v1067
    %3370 = vmatpush1.bf16.msra.mxu0 %v1066
    %3371 = vmatprep.subr.bf16.mxu0 0
    %3372 = vmatpush2.bf16.msra.mxu0 0
    %3373 = vmatprep.subr.bf16.mxu0 0
    %3374 = vmatpush2.bf16.msra.mxu0 0
    %3375 = vmatprep.subr.bf16.mxu0 0
    %3376 = vmatpush2.bf16.msra.mxu0 0
    %3377 = vmatprep.subr.bf16.mxu0 0
    %3378 = vmatpush2.bf16.msra.mxu0 0
    %3379 = vmatprep.subr.bf16.mxu0 0
    %3380 = vmatpush2.bf16.msra.mxu0 0
    %3381 = vmatprep.subr.bf16.mxu0 0
    %3382 = vmatpush2.bf16.msra.mxu0 0
    %3383 = vmatprep.subr.bf16.mxu0 0
    %3384 = vmatpush2.bf16.msra.mxu0 0
    %3385 = vmatprep.subr.bf16.mxu0 0
    %3386 = vmatpush2.bf16.msra.mxu0 0
    %3387 = vmatprep.mubr.bf16.mxu0 0
    %3388 = vmatmul.mubr.bf16.gmra.mxu0 %v3311
    %v3389 = vpop.f32.mrf.mxu0
    %v3390 = vadd.f32 0.0, %v3389
    %v3391 = vpop.f32.mrf.mxu0
    %v3392 = vadd.f32 0.0, %v3391
    %v3393 = vpop.f32.mrf.mxu0
    %v3394 = vadd.f32 0.0, %v3393
    %v3395 = vpop.f32.mrf.mxu0
    %v3396 = vadd.f32 0.0, %v3395
    %3397 = vdwg.mxu0
    %v3398 = vpack.c.bf16 %v3310, %v3309
    %3399 = vmatprep.subr.bf16.mxu0 %v1372
    %3400 = vmatpush1.bf16.msra.mxu0 %v1371
    %3401 = vmatprep.subr.bf16.mxu0 %v1368
    %3402 = vmatpush1.bf16.msra.mxu0 %v1367
    %3403 = vmatprep.subr.bf16.mxu0 %v1364
    %3404 = vmatpush1.bf16.msra.mxu0 %v1363
    %3405 = vmatprep.subr.bf16.mxu0 %v1360
    %3406 = vmatpush1.bf16.msra.mxu0 %v1359
    %3407 = vmatprep.subr.bf16.mxu0 %v1356
    %3408 = vmatpush1.bf16.msra.mxu0 %v1355
    %3409 = vmatprep.subr.bf16.mxu0 %v1352
    %3410 = vmatpush1.bf16.msra.mxu0 %v1351
    %3411 = vmatprep.subr.bf16.mxu0 %v1348
    %3412 = vmatpush1.bf16.msra.mxu0 %v1347
    %3413 = vmatprep.subr.bf16.mxu0 %v1344
    %3414 = vmatpush1.bf16.msra.mxu0 %v1343
    %3415 = vmatprep.subr.bf16.mxu0 0
    %3416 = vmatpush2.bf16.msra.mxu0 0
    %3417 = vmatprep.subr.bf16.mxu0 0
    %3418 = vmatpush2.bf16.msra.mxu0 0
    %3419 = vmatprep.subr.bf16.mxu0 0
    %3420 = vmatpush2.bf16.msra.mxu0 0
    %3421 = vmatprep.subr.bf16.mxu0 0
    %3422 = vmatpush2.bf16.msra.mxu0 0
    %3423 = vmatprep.subr.bf16.mxu0 0
    %3424 = vmatpush2.bf16.msra.mxu0 0
    %3425 = vmatprep.subr.bf16.mxu0 0
    %3426 = vmatpush2.bf16.msra.mxu0 0
    %3427 = vmatprep.subr.bf16.mxu0 0
    %3428 = vmatpush2.bf16.msra.mxu0 0
    %3429 = vmatprep.subr.bf16.mxu0 0
    %3430 = vmatpush2.bf16.msra.mxu0 0
    %3431 = vmatprep.mubr.bf16.mxu0 0
    %3432 = vmatmul.mubr.bf16.gmra.mxu0 %v3398
    %v3433 = vpop.f32.mrf.mxu0
    %v3434 = vadd.f32 %v3347, %v3433
    %v3435 = vpop.f32.mrf.mxu0
    %v3436 = vadd.f32 %v3349, %v3435
    %v3437 = vpop.f32.mrf.mxu0
    %v3438 = vadd.f32 %v3351, %v3437
    %v3439 = vpop.f32.mrf.mxu0
    %v3440 = vadd.f32 %v3353, %v3439
    %3441 = vdwg.mxu0
    %3442 = vmatprep.subr.bf16.mxu0 %v1374
    %3443 = vmatpush1.bf16.msra.mxu0 %v1373
    %3444 = vmatprep.subr.bf16.mxu0 %v1370
    %3445 = vmatpush1.bf16.msra.mxu0 %v1369
    %3446 = vmatprep.subr.bf16.mxu0 %v1366
    %3447 = vmatpush1.bf16.msra.mxu0 %v1365
    %3448 = vmatprep.subr.bf16.mxu0 %v1362
    %3449 = vmatpush1.bf16.msra.mxu0 %v1361
    %3450 = vmatprep.subr.bf16.mxu0 %v1358
    %3451 = vmatpush1.bf16.msra.mxu0 %v1357
    %3452 = vmatprep.subr.bf16.mxu0 %v1354
    %3453 = vmatpush1.bf16.msra.mxu0 %v1353
    %3454 = vmatprep.subr.bf16.mxu0 %v1350
    %3455 = vmatpush1.bf16.msra.mxu0 %v1349
    %3456 = vmatprep.subr.bf16.mxu0 %v1346
    %3457 = vmatpush1.bf16.msra.mxu0 %v1345
    %3458 = vmatprep.subr.bf16.mxu0 0
    %3459 = vmatpush2.bf16.msra.mxu0 0
    %3460 = vmatprep.subr.bf16.mxu0 0
    %3461 = vmatpush2.bf16.msra.mxu0 0
    %3462 = vmatprep.subr.bf16.mxu0 0
    %3463 = vmatpush2.bf16.msra.mxu0 0
    %3464 = vmatprep.subr.bf16.mxu0 0
    %3465 = vmatpush2.bf16.msra.mxu0 0
    %3466 = vmatprep.subr.bf16.mxu0 0
    %3467 = vmatpush2.bf16.msra.mxu0 0
    %3468 = vmatprep.subr.bf16.mxu0 0
    %3469 = vmatpush2.bf16.msra.mxu0 0
    %3470 = vmatprep.subr.bf16.mxu0 0
    %3471 = vmatpush2.bf16.msra.mxu0 0
    %3472 = vmatprep.subr.bf16.mxu0 0
    %3473 = vmatpush2.bf16.msra.mxu0 0
    %3474 = vmatprep.mubr.bf16.mxu0 0
    %3475 = vmatmul.mubr.bf16.gmra.mxu0 %v3398
    %v3476 = vpop.f32.mrf.mxu0
    %v3477 = vadd.f32 %v3390, %v3476
    %v3478 = vpop.f32.mrf.mxu0
    %v3479 = vadd.f32 %v3392, %v3478
    %v3480 = vpop.f32.mrf.mxu0
    %v3481 = vadd.f32 %v3394, %v3480
    %v3482 = vpop.f32.mrf.mxu0
    %v3483 = vadd.f32 %v3396, %v3482
    %3484 = vdwg.mxu0
    %v3485 = vadd.f32 %v3434, %v1498
    %v3486 = vadd.f32 %v3436, %v1502
    %v3487 = vadd.f32 %v3477, %v1506
    %v3488 = vadd.f32 %v3479, %v1510
    %v3489 = vadd.f32 %v3438, %v1498
    %v3490 = vadd.f32 %v3440, %v1502
    %v3491 = vadd.f32 %v3481, %v1506
    %v3492 = vadd.f32 %v3483, %v1510
    %v3493 = vxor.u32 %v3485, 2147483648
    %v3494 = vxor.u32 %v3486, 2147483648
    %v3495 = vxor.u32 %v3487, 2147483648
    %v3496 = vxor.u32 %v3489, 2147483648
    %v3497 = vxor.u32 %v3490, 2147483648
    %v3498 = vxor.u32 %v3491, 2147483648
    %v3499 = vmul.f32 %v3493, 1.442695
    %v3500 = vpow.pop %v3499
    %v3501 = vmul.f32 %v3494, 1.442695
    %v3502 = vpow.pop %v3501
    %v3503 = vmul.f32 %v3495, 1.442695
    %v3504 = vpow.pop %v3503
    %v3505 = vmul.f32 %v3496, 1.442695
    %v3506 = vpow.pop %v3505
    %v3507 = vmul.f32 %v3497, 1.442695
    %v3508 = vpow.pop %v3507
    %v3509 = vmul.f32 %v3498, 1.442695
    %v3510 = vpow.pop %v3509
    %v3511 = vadd.f32 %v3500, 1.0
    %v3512 = vadd.f32 %v3502, 1.0
    %v3513 = vadd.f32 %v3504, 1.0
    %v3514 = vadd.f32 %v3506, 1.0
    %v3515 = vadd.f32 %v3508, 1.0
    %v3516 = vadd.f32 %v3510, 1.0
    %v3517 = vrcp.pop %v3511
    %v3518 = vmul.f32 1.0, %v3517
    %v3519 = vrcp.pop %v3512
    %v3520 = vmul.f32 1.0, %v3519
    %v3521 = vrcp.pop %v3513
    %v3522 = vmul.f32 1.0, %v3521
    %v3523 = vrcp.pop %v3514
    %v3524 = vmul.f32 1.0, %v3523
    %v3525 = vrcp.pop %v3515
    %v3526 = vmul.f32 1.0, %v3525
    %v3527 = vrcp.pop %v3516
    %v3528 = vmul.f32 1.0, %v3527
    %v3529 = vtanh.pop %v3488
    %v3530 = vtanh.pop %v3492
    %v3531 = vmul.f32 %v3520, %v3141
    %v3532 = vmul.f32 %v3526, %v3142
    %v3533 = vmul.f32 %v3518, %v3529
    %v3534 = vmul.f32 %v3524, %v3530
    %v3535 = vadd.f32 %v3531, %v3533
    %v3536 = vadd.f32 %v3532, %v3534
    %v3537 = vtanh.pop %v3535
    %v3538 = vtanh.pop %v3536
    %v3539 = vmul.f32 %v3522, %v3537
    %v3540 = vmul.f32 %v3528, %v3538
    %vm3541 = vcmp.eq.s32.totalorder %v151, 5
    %vm3542 = vcmp.eq.s32.totalorder %v152, 5
    %v3543 = vsel %vm3541, 1, 0
    %v3544 = vsel %vm3542, 1, 0
    %3545 = vset.pattern.permute.xlu0 0
    %3546 = vperm.xlu0 %3545, %v3543
    %v3547 = vpop.permute.xlu0 %3546
    %3548 = vset.pattern.permute.xlu0 0
    %3549 = vperm.xlu0 %3548, %v3544
    %v3550 = vpop.permute.xlu0 %3549
    %vm3551 = vcmp.eq.s32.totalorder %v3547, 1
    %vm3552 = vcmp.eq.s32.totalorder %v3550, 1
    %v3553 = vsel %vm3551, %v3539, %v3159
    %v3554 = vsel %vm3552, %v3540, %v3160
    %3555 = vmatprep.subr.bf16.mxu0 %v751
    %3556 = vmatpush1.bf16.msra.mxu0 %v750
    %3557 = vmatprep.subr.bf16.mxu0 %v747
    %3558 = vmatpush1.bf16.msra.mxu0 %v746
    %3559 = vmatprep.subr.bf16.mxu0 %v743
    %3560 = vmatpush1.bf16.msra.mxu0 %v742
    %3561 = vmatprep.subr.bf16.mxu0 %v739
    %3562 = vmatpush1.bf16.msra.mxu0 %v738
    %3563 = vmatprep.subr.bf16.mxu0 %v735
    %3564 = vmatpush1.bf16.msra.mxu0 %v734
    %3565 = vmatprep.subr.bf16.mxu0 %v731
    %3566 = vmatpush1.bf16.msra.mxu0 %v730
    %3567 = vmatprep.subr.bf16.mxu0 %v727
    %3568 = vmatpush1.bf16.msra.mxu0 %v726
    %3569 = vmatprep.subr.bf16.mxu0 %v723
    %3570 = vmatpush1.bf16.msra.mxu0 %v722
    %3571 = vmatprep.subr.bf16.mxu0 0
    %3572 = vmatpush2.bf16.msra.mxu0 0
    %3573 = vmatprep.subr.bf16.mxu0 0
    %3574 = vmatpush2.bf16.msra.mxu0 0
    %3575 = vmatprep.subr.bf16.mxu0 0
    %3576 = vmatpush2.bf16.msra.mxu0 0
    %3577 = vmatprep.subr.bf16.mxu0 0
    %3578 = vmatpush2.bf16.msra.mxu0 0
    %3579 = vmatprep.subr.bf16.mxu0 0
    %3580 = vmatpush2.bf16.msra.mxu0 0
    %3581 = vmatprep.subr.bf16.mxu0 0
    %3582 = vmatpush2.bf16.msra.mxu0 0
    %3583 = vmatprep.subr.bf16.mxu0 0
    %3584 = vmatpush2.bf16.msra.mxu0 0
    %3585 = vmatprep.subr.bf16.mxu0 0
    %3586 = vmatpush2.bf16.msra.mxu0 0
    %3587 = vmatprep.mubr.bf16.mxu0 0
    %3588 = vmatmul.mubr.bf16.gmra.mxu0 %v3398
    %v3589 = vpop.f32.mrf.mxu0
    %v3590 = vadd.f32 0.0, %v3589
    %v3591 = vpop.f32.mrf.mxu0
    %v3592 = vadd.f32 0.0, %v3591
    %v3593 = vpop.f32.mrf.mxu0
    %v3594 = vadd.f32 0.0, %v3593
    %v3595 = vpop.f32.mrf.mxu0
    %v3596 = vadd.f32 0.0, %v3595
    %3597 = vdwg.mxu0
    %3598 = vmatprep.subr.bf16.mxu0 %v753
    %3599 = vmatpush1.bf16.msra.mxu0 %v752
    %3600 = vmatprep.subr.bf16.mxu0 %v749
    %3601 = vmatpush1.bf16.msra.mxu0 %v748
    %3602 = vmatprep.subr.bf16.mxu0 %v745
    %3603 = vmatpush1.bf16.msra.mxu0 %v744
    %3604 = vmatprep.subr.bf16.mxu0 %v741
    %3605 = vmatpush1.bf16.msra.mxu0 %v740
    %3606 = vmatprep.subr.bf16.mxu0 %v737
    %3607 = vmatpush1.bf16.msra.mxu0 %v736
    %3608 = vmatprep.subr.bf16.mxu0 %v733
    %3609 = vmatpush1.bf16.msra.mxu0 %v732
    %3610 = vmatprep.subr.bf16.mxu0 %v729
    %3611 = vmatpush1.bf16.msra.mxu0 %v728
    %3612 = vmatprep.subr.bf16.mxu0 %v725
    %3613 = vmatpush1.bf16.msra.mxu0 %v724
    %3614 = vmatprep.subr.bf16.mxu0 0
    %3615 = vmatpush2.bf16.msra.mxu0 0
    %3616 = vmatprep.subr.bf16.mxu0 0
    %3617 = vmatpush2.bf16.msra.mxu0 0
    %3618 = vmatprep.subr.bf16.mxu0 0
    %3619 = vmatpush2.bf16.msra.mxu0 0
    %3620 = vmatprep.subr.bf16.mxu0 0
    %3621 = vmatpush2.bf16.msra.mxu0 0
    %3622 = vmatprep.subr.bf16.mxu0 0
    %3623 = vmatpush2.bf16.msra.mxu0 0
    %3624 = vmatprep.subr.bf16.mxu0 0
    %3625 = vmatpush2.bf16.msra.mxu0 0
    %3626 = vmatprep.subr.bf16.mxu0 0
    %3627 = vmatpush2.bf16.msra.mxu0 0
    %3628 = vmatprep.subr.bf16.mxu0 0
    %3629 = vmatpush2.bf16.msra.mxu0 0
    %3630 = vmatprep.mubr.bf16.mxu0 0
    %3631 = vmatmul.mubr.bf16.gmra.mxu0 %v3398
    %v3632 = vpop.f32.mrf.mxu0
    %v3633 = vadd.f32 0.0, %v3632
    %v3634 = vpop.f32.mrf.mxu0
    %v3635 = vadd.f32 0.0, %v3634
    %v3636 = vpop.f32.mrf.mxu0
    %v3637 = vadd.f32 0.0, %v3636
    %v3638 = vpop.f32.mrf.mxu0
    %v3639 = vadd.f32 0.0, %v3638
    %3640 = vdwg.mxu0
    %v3641 = vld [vmem:[#allocation2 + $0x180] sm:$0xff]
    %v3642 = vld [vmem:[#allocation2 + $0x188] sm:$0xff]
    %v3643 = vld [vmem:[#allocation2 + $0x190] sm:$0xff]
    %v3644 = vld [vmem:[#allocation2 + $0x198] sm:$0xff]
    %v3645 = vld [vmem:[#allocation2 + $0x1a0] sm:$0xff]
    %v3646 = vld [vmem:[#allocation2 + $0x1a8] sm:$0xff]
    %v3647 = vld [vmem:[#allocation2 + $0x1b0] sm:$0xff]
    %v3648 = vld [vmem:[#allocation2 + $0x1b8] sm:$0xff]
    %v3649 = vadd.f32 %v3641, %v3590
    %v3650 = vadd.f32 %v3642, %v3592
    %v3651 = vadd.f32 %v3643, %v3633
    %v3652 = vadd.f32 %v3644, %v3635
    %v3653 = vadd.f32 %v3645, %v3594
    %v3654 = vadd.f32 %v3646, %v3596
    %v3655 = vadd.f32 %v3647, %v3637
    %v3656 = vadd.f32 %v3648, %v3639
    %v3657 = vxor.u32 %v3649, 2147483648
    %v3658 = vxor.u32 %v3650, 2147483648
    %v3659 = vxor.u32 %v3651, 2147483648
    %v3660 = vxor.u32 %v3653, 2147483648
    %v3661 = vxor.u32 %v3654, 2147483648
    %v3662 = vxor.u32 %v3655, 2147483648
    %v3663 = vmul.f32 %v3657, 1.442695
    %v3664 = vpow.pop %v3663
    %v3665 = vmul.f32 %v3658, 1.442695
    %v3666 = vpow.pop %v3665
    %v3667 = vmul.f32 %v3659, 1.442695
    %v3668 = vpow.pop %v3667
    %v3669 = vmul.f32 %v3660, 1.442695
    %v3670 = vpow.pop %v3669
    %v3671 = vmul.f32 %v3661, 1.442695
    %v3672 = vpow.pop %v3671
    %v3673 = vmul.f32 %v3662, 1.442695
    %v3674 = vpow.pop %v3673
    %v3675 = vadd.f32 %v3664, 1.0
    %v3676 = vadd.f32 %v3666, 1.0
    %v3677 = vadd.f32 %v3668, 1.0
    %v3678 = vadd.f32 %v3670, 1.0
    %v3679 = vadd.f32 %v3672, 1.0
    %v3680 = vadd.f32 %v3674, 1.0
    %v3681 = vrcp.pop %v3675
    %v3682 = vmul.f32 1.0, %v3681
    %v3683 = vrcp.pop %v3676
    %v3684 = vmul.f32 1.0, %v3683
    %v3685 = vrcp.pop %v3677
    %v3686 = vmul.f32 1.0, %v3685
    %v3687 = vrcp.pop %v3678
    %v3688 = vmul.f32 1.0, %v3687
    %v3689 = vrcp.pop %v3679
    %v3690 = vmul.f32 1.0, %v3689
    %v3691 = vrcp.pop %v3680
    %v3692 = vmul.f32 1.0, %v3691
    %v3693 = vtanh.pop %v3652
    %v3694 = vtanh.pop %v3656
    %v3695 = vmul.f32 %v3684, %v3305
    %v3696 = vmul.f32 %v3690, %v3306
    %v3697 = vmul.f32 %v3682, %v3693
    %v3698 = vmul.f32 %v3688, %v3694
    %v3699 = vadd.f32 %v3695, %v3697
    %v3700 = vadd.f32 %v3696, %v3698
    %v3701 = vtanh.pop %v3699
    %v3702 = vtanh.pop %v3700
    %v3703 = vmul.f32 %v3686, %v3701
    %v3704 = vmul.f32 %v3692, %v3702
    %v3705 = vpack.c.bf16 %v3540, %v3539
    %3706 = vmatprep.subr.bf16.mxu0 %v1093
    %3707 = vmatpush1.bf16.msra.mxu0 %v1092
    %3708 = vmatprep.subr.bf16.mxu0 %v1089
    %3709 = vmatpush1.bf16.msra.mxu0 %v1088
    %3710 = vmatprep.subr.bf16.mxu0 %v1085
    %3711 = vmatpush1.bf16.msra.mxu0 %v1084
    %3712 = vmatprep.subr.bf16.mxu0 %v1081
    %3713 = vmatpush1.bf16.msra.mxu0 %v1080
    %3714 = vmatprep.subr.bf16.mxu0 %v1077
    %3715 = vmatpush1.bf16.msra.mxu0 %v1076
    %3716 = vmatprep.subr.bf16.mxu0 %v1073
    %3717 = vmatpush1.bf16.msra.mxu0 %v1072
    %3718 = vmatprep.subr.bf16.mxu0 %v1069
    %3719 = vmatpush1.bf16.msra.mxu0 %v1068
    %3720 = vmatprep.subr.bf16.mxu0 %v1065
    %3721 = vmatpush1.bf16.msra.mxu0 %v1064
    %3722 = vmatprep.subr.bf16.mxu0 0
    %3723 = vmatpush2.bf16.msra.mxu0 0
    %3724 = vmatprep.subr.bf16.mxu0 0
    %3725 = vmatpush2.bf16.msra.mxu0 0
    %3726 = vmatprep.subr.bf16.mxu0 0
    %3727 = vmatpush2.bf16.msra.mxu0 0
    %3728 = vmatprep.subr.bf16.mxu0 0
    %3729 = vmatpush2.bf16.msra.mxu0 0
    %3730 = vmatprep.subr.bf16.mxu0 0
    %3731 = vmatpush2.bf16.msra.mxu0 0
    %3732 = vmatprep.subr.bf16.mxu0 0
    %3733 = vmatpush2.bf16.msra.mxu0 0
    %3734 = vmatprep.subr.bf16.mxu0 0
    %3735 = vmatpush2.bf16.msra.mxu0 0
    %3736 = vmatprep.subr.bf16.mxu0 0
    %3737 = vmatpush2.bf16.msra.mxu0 0
    %3738 = vmatprep.mubr.bf16.mxu0 0
    %3739 = vmatmul.mubr.bf16.gmra.mxu0 %v3705
    %v3740 = vpop.f32.mrf.mxu0
    %v3741 = vadd.f32 0.0, %v3740
    %v3742 = vpop.f32.mrf.mxu0
    %v3743 = vadd.f32 0.0, %v3742
    %v3744 = vpop.f32.mrf.mxu0
    %v3745 = vadd.f32 0.0, %v3744
    %v3746 = vpop.f32.mrf.mxu0
    %v3747 = vadd.f32 0.0, %v3746
    %3748 = vdwg.mxu0
    %3749 = vmatprep.subr.bf16.mxu0 %v1095
    %3750 = vmatpush1.bf16.msra.mxu0 %v1094
    %3751 = vmatprep.subr.bf16.mxu0 %v1091
    %3752 = vmatpush1.bf16.msra.mxu0 %v1090
    %3753 = vmatprep.subr.bf16.mxu0 %v1087
    %3754 = vmatpush1.bf16.msra.mxu0 %v1086
    %3755 = vmatprep.subr.bf16.mxu0 %v1083
    %3756 = vmatpush1.bf16.msra.mxu0 %v1082
    %3757 = vmatprep.subr.bf16.mxu0 %v1079
    %3758 = vmatpush1.bf16.msra.mxu0 %v1078
    %3759 = vmatprep.subr.bf16.mxu0 %v1075
    %3760 = vmatpush1.bf16.msra.mxu0 %v1074
    %3761 = vmatprep.subr.bf16.mxu0 %v1071
    %3762 = vmatpush1.bf16.msra.mxu0 %v1070
    %3763 = vmatprep.subr.bf16.mxu0 %v1067
    %3764 = vmatpush1.bf16.msra.mxu0 %v1066
    %3765 = vmatprep.subr.bf16.mxu0 0
    %3766 = vmatpush2.bf16.msra.mxu0 0
    %3767 = vmatprep.subr.bf16.mxu0 0
    %3768 = vmatpush2.bf16.msra.mxu0 0
    %3769 = vmatprep.subr.bf16.mxu0 0
    %3770 = vmatpush2.bf16.msra.mxu0 0
    %3771 = vmatprep.subr.bf16.mxu0 0
    %3772 = vmatpush2.bf16.msra.mxu0 0
    %3773 = vmatprep.subr.bf16.mxu0 0
    %3774 = vmatpush2.bf16.msra.mxu0 0
    %3775 = vmatprep.subr.bf16.mxu0 0
    %3776 = vmatpush2.bf16.msra.mxu0 0
    %3777 = vmatprep.subr.bf16.mxu0 0
    %3778 = vmatpush2.bf16.msra.mxu0 0
    %3779 = vmatprep.subr.bf16.mxu0 0
    %3780 = vmatpush2.bf16.msra.mxu0 0
    %3781 = vmatprep.mubr.bf16.mxu0 0
    %3782 = vmatmul.mubr.bf16.gmra.mxu0 %v3705
    %v3783 = vpop.f32.mrf.mxu0
    %v3784 = vadd.f32 0.0, %v3783
    %v3785 = vpop.f32.mrf.mxu0
    %v3786 = vadd.f32 0.0, %v3785
    %v3787 = vpop.f32.mrf.mxu0
    %v3788 = vadd.f32 0.0, %v3787
    %v3789 = vpop.f32.mrf.mxu0
    %v3790 = vadd.f32 0.0, %v3789
    %3791 = vdwg.mxu0
    %v3792 = vpack.c.bf16 %v3704, %v3703
    %3793 = vmatprep.subr.bf16.mxu0 %v1372
    %3794 = vmatpush1.bf16.msra.mxu0 %v1371
    %3795 = vmatprep.subr.bf16.mxu0 %v1368
    %3796 = vmatpush1.bf16.msra.mxu0 %v1367
    %3797 = vmatprep.subr.bf16.mxu0 %v1364
    %3798 = vmatpush1.bf16.msra.mxu0 %v1363
    %3799 = vmatprep.subr.bf16.mxu0 %v1360
    %3800 = vmatpush1.bf16.msra.mxu0 %v1359
    %3801 = vmatprep.subr.bf16.mxu0 %v1356
    %3802 = vmatpush1.bf16.msra.mxu0 %v1355
    %3803 = vmatprep.subr.bf16.mxu0 %v1352
    %3804 = vmatpush1.bf16.msra.mxu0 %v1351
    %3805 = vmatprep.subr.bf16.mxu0 %v1348
    %3806 = vmatpush1.bf16.msra.mxu0 %v1347
    %3807 = vmatprep.subr.bf16.mxu0 %v1344
    %3808 = vmatpush1.bf16.msra.mxu0 %v1343
    %3809 = vmatprep.subr.bf16.mxu0 0
    %3810 = vmatpush2.bf16.msra.mxu0 0
    %3811 = vmatprep.subr.bf16.mxu0 0
    %3812 = vmatpush2.bf16.msra.mxu0 0
    %3813 = vmatprep.subr.bf16.mxu0 0
    %3814 = vmatpush2.bf16.msra.mxu0 0
    %3815 = vmatprep.subr.bf16.mxu0 0
    %3816 = vmatpush2.bf16.msra.mxu0 0
    %3817 = vmatprep.subr.bf16.mxu0 0
    %3818 = vmatpush2.bf16.msra.mxu0 0
    %3819 = vmatprep.subr.bf16.mxu0 0
    %3820 = vmatpush2.bf16.msra.mxu0 0
    %3821 = vmatprep.subr.bf16.mxu0 0
    %3822 = vmatpush2.bf16.msra.mxu0 0
    %3823 = vmatprep.subr.bf16.mxu0 0
    %3824 = vmatpush2.bf16.msra.mxu0 0
    %3825 = vmatprep.mubr.bf16.mxu0 0
    %3826 = vmatmul.mubr.bf16.gmra.mxu0 %v3792
    %v3827 = vpop.f32.mrf.mxu0
    %v3828 = vadd.f32 %v3741, %v3827
    %v3829 = vpop.f32.mrf.mxu0
    %v3830 = vadd.f32 %v3743, %v3829
    %v3831 = vpop.f32.mrf.mxu0
    %v3832 = vadd.f32 %v3745, %v3831
    %v3833 = vpop.f32.mrf.mxu0
    %v3834 = vadd.f32 %v3747, %v3833
    %3835 = vdwg.mxu0
    %3836 = vmatprep.subr.bf16.mxu0 %v1374
    %3837 = vmatpush1.bf16.msra.mxu0 %v1373
    %3838 = vmatprep.subr.bf16.mxu0 %v1370
    %3839 = vmatpush1.bf16.msra.mxu0 %v1369
    %3840 = vmatprep.subr.bf16.mxu0 %v1366
    %3841 = vmatpush1.bf16.msra.mxu0 %v1365
    %3842 = vmatprep.subr.bf16.mxu0 %v1362
    %3843 = vmatpush1.bf16.msra.mxu0 %v1361
    %3844 = vmatprep.subr.bf16.mxu0 %v1358
    %3845 = vmatpush1.bf16.msra.mxu0 %v1357
    %3846 = vmatprep.subr.bf16.mxu0 %v1354
    %3847 = vmatpush1.bf16.msra.mxu0 %v1353
    %3848 = vmatprep.subr.bf16.mxu0 %v1350
    %3849 = vmatpush1.bf16.msra.mxu0 %v1349
    %3850 = vmatprep.subr.bf16.mxu0 %v1346
    %3851 = vmatpush1.bf16.msra.mxu0 %v1345
    %3852 = vmatprep.subr.bf16.mxu0 0
    %3853 = vmatpush2.bf16.msra.mxu0 0
    %3854 = vmatprep.subr.bf16.mxu0 0
    %3855 = vmatpush2.bf16.msra.mxu0 0
    %3856 = vmatprep.subr.bf16.mxu0 0
    %3857 = vmatpush2.bf16.msra.mxu0 0
    %3858 = vmatprep.subr.bf16.mxu0 0
    %3859 = vmatpush2.bf16.msra.mxu0 0
    %3860 = vmatprep.subr.bf16.mxu0 0
    %3861 = vmatpush2.bf16.msra.mxu0 0
    %3862 = vmatprep.subr.bf16.mxu0 0
    %3863 = vmatpush2.bf16.msra.mxu0 0
    %3864 = vmatprep.subr.bf16.mxu0 0
    %3865 = vmatpush2.bf16.msra.mxu0 0
    %3866 = vmatprep.subr.bf16.mxu0 0
    %3867 = vmatpush2.bf16.msra.mxu0 0
    %3868 = vmatprep.mubr.bf16.mxu0 0
    %3869 = vmatmul.mubr.bf16.gmra.mxu0 %v3792
    %v3870 = vpop.f32.mrf.mxu0
    %v3871 = vadd.f32 %v3784, %v3870
    %v3872 = vpop.f32.mrf.mxu0
    %v3873 = vadd.f32 %v3786, %v3872
    %v3874 = vpop.f32.mrf.mxu0
    %v3875 = vadd.f32 %v3788, %v3874
    %v3876 = vpop.f32.mrf.mxu0
    %v3877 = vadd.f32 %v3790, %v3876
    %3878 = vdwg.mxu0
    %v3879 = vadd.f32 %v3828, %v1498
    %v3880 = vadd.f32 %v3830, %v1502
    %v3881 = vadd.f32 %v3871, %v1506
    %v3882 = vadd.f32 %v3873, %v1510
    %v3883 = vadd.f32 %v3832, %v1498
    %v3884 = vadd.f32 %v3834, %v1502
    %v3885 = vadd.f32 %v3875, %v1506
    %v3886 = vadd.f32 %v3877, %v1510
    %v3887 = vxor.u32 %v3879, 2147483648
    %v3888 = vxor.u32 %v3880, 2147483648
    %v3889 = vxor.u32 %v3881, 2147483648
    %v3890 = vxor.u32 %v3883, 2147483648
    %v3891 = vxor.u32 %v3884, 2147483648
    %v3892 = vxor.u32 %v3885, 2147483648
    %v3893 = vmul.f32 %v3887, 1.442695
    %v3894 = vpow.pop %v3893
    %v3895 = vmul.f32 %v3888, 1.442695
    %v3896 = vpow.pop %v3895
    %v3897 = vmul.f32 %v3889, 1.442695
    %v3898 = vpow.pop %v3897
    %v3899 = vmul.f32 %v3890, 1.442695
    %v3900 = vpow.pop %v3899
    %v3901 = vmul.f32 %v3891, 1.442695
    %v3902 = vpow.pop %v3901
    %v3903 = vmul.f32 %v3892, 1.442695
    %v3904 = vpow.pop %v3903
    %v3905 = vadd.f32 %v3894, 1.0
    %v3906 = vadd.f32 %v3896, 1.0
    %v3907 = vadd.f32 %v3898, 1.0
    %v3908 = vadd.f32 %v3900, 1.0
    %v3909 = vadd.f32 %v3902, 1.0
    %v3910 = vadd.f32 %v3904, 1.0
    %v3911 = vrcp.pop %v3905
    %v3912 = vmul.f32 1.0, %v3911
    %v3913 = vrcp.pop %v3906
    %v3914 = vmul.f32 1.0, %v3913
    %v3915 = vrcp.pop %v3907
    %v3916 = vmul.f32 1.0, %v3915
    %v3917 = vrcp.pop %v3908
    %v3918 = vmul.f32 1.0, %v3917
    %v3919 = vrcp.pop %v3909
    %v3920 = vmul.f32 1.0, %v3919
    %v3921 = vrcp.pop %v3910
    %v3922 = vmul.f32 1.0, %v3921
    %v3923 = vtanh.pop %v3882
    %v3924 = vtanh.pop %v3886
    %v3925 = vmul.f32 %v3914, %v3535
    %v3926 = vmul.f32 %v3920, %v3536
    %v3927 = vmul.f32 %v3912, %v3923
    %v3928 = vmul.f32 %v3918, %v3924
    %v3929 = vadd.f32 %v3925, %v3927
    %v3930 = vadd.f32 %v3926, %v3928
    %v3931 = vtanh.pop %v3929
    %v3932 = vtanh.pop %v3930
    %v3933 = vmul.f32 %v3916, %v3931
    %v3934 = vmul.f32 %v3922, %v3932
    %vm3935 = vcmp.eq.s32.totalorder %v151, 6
    %vm3936 = vcmp.eq.s32.totalorder %v152, 6
    %v3937 = vsel %vm3935, 1, 0
    %v3938 = vsel %vm3936, 1, 0
    %3939 = vset.pattern.permute.xlu0 0
    %3940 = vperm.xlu0 %3939, %v3937
    %v3941 = vpop.permute.xlu0 %3940
    %3942 = vset.pattern.permute.xlu0 0
    %3943 = vperm.xlu0 %3942, %v3938
    %v3944 = vpop.permute.xlu0 %3943
    %vm3945 = vcmp.eq.s32.totalorder %v3941, 1
    %vm3946 = vcmp.eq.s32.totalorder %v3944, 1
    %v3947 = vsel %vm3945, %v3933, %v3553
    %v3948 = vsel %vm3946, %v3934, %v3554
    %3949 = vmatprep.subr.bf16.mxu0 %v751
    %3950 = vmatpush1.bf16.msra.mxu0 %v750
    %3951 = vmatprep.subr.bf16.mxu0 %v747
    %3952 = vmatpush1.bf16.msra.mxu0 %v746
    %3953 = vmatprep.subr.bf16.mxu0 %v743
    %3954 = vmatpush1.bf16.msra.mxu0 %v742
    %3955 = vmatprep.subr.bf16.mxu0 %v739
    %3956 = vmatpush1.bf16.msra.mxu0 %v738
    %3957 = vmatprep.subr.bf16.mxu0 %v735
    %3958 = vmatpush1.bf16.msra.mxu0 %v734
    %3959 = vmatprep.subr.bf16.mxu0 %v731
    %3960 = vmatpush1.bf16.msra.mxu0 %v730
    %3961 = vmatprep.subr.bf16.mxu0 %v727
    %3962 = vmatpush1.bf16.msra.mxu0 %v726
    %3963 = vmatprep.subr.bf16.mxu0 %v723
    %3964 = vmatpush1.bf16.msra.mxu0 %v722
    %3965 = vmatprep.subr.bf16.mxu0 0
    %3966 = vmatpush2.bf16.msra.mxu0 0
    %3967 = vmatprep.subr.bf16.mxu0 0
    %3968 = vmatpush2.bf16.msra.mxu0 0
    %3969 = vmatprep.subr.bf16.mxu0 0
    %3970 = vmatpush2.bf16.msra.mxu0 0
    %3971 = vmatprep.subr.bf16.mxu0 0
    %3972 = vmatpush2.bf16.msra.mxu0 0
    %3973 = vmatprep.subr.bf16.mxu0 0
    %3974 = vmatpush2.bf16.msra.mxu0 0
    %3975 = vmatprep.subr.bf16.mxu0 0
    %3976 = vmatpush2.bf16.msra.mxu0 0
    %3977 = vmatprep.subr.bf16.mxu0 0
    %3978 = vmatpush2.bf16.msra.mxu0 0
    %3979 = vmatprep.subr.bf16.mxu0 0
    %3980 = vmatpush2.bf16.msra.mxu0 0
    %3981 = vmatprep.mubr.bf16.mxu0 0
    %3982 = vmatmul.mubr.bf16.gmra.mxu0 %v3792
    %v3983 = vpop.f32.mrf.mxu0
    %v3984 = vadd.f32 0.0, %v3983
    %v3985 = vpop.f32.mrf.mxu0
    %v3986 = vadd.f32 0.0, %v3985
    %v3987 = vpop.f32.mrf.mxu0
    %v3988 = vadd.f32 0.0, %v3987
    %v3989 = vpop.f32.mrf.mxu0
    %v3990 = vadd.f32 0.0, %v3989
    %3991 = vdwg.mxu0
    %3992 = vmatprep.subr.bf16.mxu0 %v753
    %3993 = vmatpush1.bf16.msra.mxu0 %v752
    %3994 = vmatprep.subr.bf16.mxu0 %v749
    %3995 = vmatpush1.bf16.msra.mxu0 %v748
    %3996 = vmatprep.subr.bf16.mxu0 %v745
    %3997 = vmatpush1.bf16.msra.mxu0 %v744
    %3998 = vmatprep.subr.bf16.mxu0 %v741
    %3999 = vmatpush1.bf16.msra.mxu0 %v740
    %4000 = vmatprep.subr.bf16.mxu0 %v737
    %4001 = vmatpush1.bf16.msra.mxu0 %v736
    %4002 = vmatprep.subr.bf16.mxu0 %v733
    %4003 = vmatpush1.bf16.msra.mxu0 %v732
    %4004 = vmatprep.subr.bf16.mxu0 %v729
    %4005 = vmatpush1.bf16.msra.mxu0 %v728
    %4006 = vmatprep.subr.bf16.mxu0 %v725
    %4007 = vmatpush1.bf16.msra.mxu0 %v724
    %4008 = vmatprep.subr.bf16.mxu0 0
    %4009 = vmatpush2.bf16.msra.mxu0 0
    %4010 = vmatprep.subr.bf16.mxu0 0
    %4011 = vmatpush2.bf16.msra.mxu0 0
    %4012 = vmatprep.subr.bf16.mxu0 0
    %4013 = vmatpush2.bf16.msra.mxu0 0
    %4014 = vmatprep.subr.bf16.mxu0 0
    %4015 = vmatpush2.bf16.msra.mxu0 0
    %4016 = vmatprep.subr.bf16.mxu0 0
    %4017 = vmatpush2.bf16.msra.mxu0 0
    %4018 = vmatprep.subr.bf16.mxu0 0
    %4019 = vmatpush2.bf16.msra.mxu0 0
    %4020 = vmatprep.subr.bf16.mxu0 0
    %4021 = vmatpush2.bf16.msra.mxu0 0
    %4022 = vmatprep.subr.bf16.mxu0 0
    %4023 = vmatpush2.bf16.msra.mxu0 0
    %4024 = vmatprep.mubr.bf16.mxu0 0
    %4025 = vmatmul.mubr.bf16.gmra.mxu0 %v3792
    %v4026 = vpop.f32.mrf.mxu0
    %v4027 = vadd.f32 0.0, %v4026
    %v4028 = vpop.f32.mrf.mxu0
    %v4029 = vadd.f32 0.0, %v4028
    %v4030 = vpop.f32.mrf.mxu0
    %v4031 = vadd.f32 0.0, %v4030
    %v4032 = vpop.f32.mrf.mxu0
    %v4033 = vadd.f32 0.0, %v4032
    %4034 = vdwg.mxu0
    %v4035 = vld [vmem:[#allocation2 + $0x1c0] sm:$0xff]
    %v4036 = vld [vmem:[#allocation2 + $0x1c8] sm:$0xff]
    %v4037 = vld [vmem:[#allocation2 + $0x1d0] sm:$0xff]
    %v4038 = vld [vmem:[#allocation2 + $0x1d8] sm:$0xff]
    %v4039 = vld [vmem:[#allocation2 + $0x1e0] sm:$0xff]
    %v4040 = vld [vmem:[#allocation2 + $0x1e8] sm:$0xff]
    %v4041 = vld [vmem:[#allocation2 + $0x1f0] sm:$0xff]
    %v4042 = vld [vmem:[#allocation2 + $0x1f8] sm:$0xff]
    %v4043 = vadd.f32 %v4035, %v3984
    %v4044 = vadd.f32 %v4036, %v3986
    %v4045 = vadd.f32 %v4037, %v4027
    %v4046 = vadd.f32 %v4038, %v4029
    %v4047 = vadd.f32 %v4039, %v3988
    %v4048 = vadd.f32 %v4040, %v3990
    %v4049 = vadd.f32 %v4041, %v4031
    %v4050 = vadd.f32 %v4042, %v4033
    %v4051 = vxor.u32 %v4043, 2147483648
    %v4052 = vxor.u32 %v4044, 2147483648
    %v4053 = vxor.u32 %v4045, 2147483648
    %v4054 = vxor.u32 %v4047, 2147483648
    %v4055 = vxor.u32 %v4048, 2147483648
    %v4056 = vxor.u32 %v4049, 2147483648
    %v4057 = vmul.f32 %v4051, 1.442695
    %v4058 = vpow.pop %v4057
    %v4059 = vmul.f32 %v4052, 1.442695
    %v4060 = vpow.pop %v4059
    %v4061 = vmul.f32 %v4053, 1.442695
    %v4062 = vpow.pop %v4061
    %v4063 = vmul.f32 %v4054, 1.442695
    %v4064 = vpow.pop %v4063
    %v4065 = vmul.f32 %v4055, 1.442695
    %v4066 = vpow.pop %v4065
    %v4067 = vmul.f32 %v4056, 1.442695
    %v4068 = vpow.pop %v4067
    %v4069 = vadd.f32 %v4058, 1.0
    %v4070 = vadd.f32 %v4060, 1.0
    %v4071 = vadd.f32 %v4062, 1.0
    %v4072 = vadd.f32 %v4064, 1.0
    %v4073 = vadd.f32 %v4066, 1.0
    %v4074 = vadd.f32 %v4068, 1.0
    %v4075 = vrcp.pop %v4069
    %v4076 = vmul.f32 1.0, %v4075
    %v4077 = vrcp.pop %v4070
    %v4078 = vmul.f32 1.0, %v4077
    %v4079 = vrcp.pop %v4071
    %v4080 = vmul.f32 1.0, %v4079
    %v4081 = vrcp.pop %v4072
    %v4082 = vmul.f32 1.0, %v4081
    %v4083 = vrcp.pop %v4073
    %v4084 = vmul.f32 1.0, %v4083
    %v4085 = vrcp.pop %v4074
    %v4086 = vmul.f32 1.0, %v4085
    %v4087 = vtanh.pop %v4046
    %v4088 = vtanh.pop %v4050
    %v4089 = vmul.f32 %v4078, %v3699
    %v4090 = vmul.f32 %v4084, %v3700
    %v4091 = vmul.f32 %v4076, %v4087
    %v4092 = vmul.f32 %v4082, %v4088
    %v4093 = vadd.f32 %v4089, %v4091
    %v4094 = vadd.f32 %v4090, %v4092
    %v4095 = vtanh.pop %v4093
    %v4096 = vtanh.pop %v4094
    %v4097 = vmul.f32 %v4080, %v4095
    %v4098 = vmul.f32 %v4086, %v4096
    %v4099 = vpack.c.bf16 %v3934, %v3933
    %4100 = vmatprep.subr.bf16.mxu0 %v1093
    %4101 = vmatpush1.bf16.msra.mxu0 %v1092
    %4102 = vmatprep.subr.bf16.mxu0 %v1089
    %4103 = vmatpush1.bf16.msra.mxu0 %v1088
    %4104 = vmatprep.subr.bf16.mxu0 %v1085
    %4105 = vmatpush1.bf16.msra.mxu0 %v1084
    %4106 = vmatprep.subr.bf16.mxu0 %v1081
    %4107 = vmatpush1.bf16.msra.mxu0 %v1080
    %4108 = vmatprep.subr.bf16.mxu0 %v1077
    %4109 = vmatpush1.bf16.msra.mxu0 %v1076
    %4110 = vmatprep.subr.bf16.mxu0 %v1073
    %4111 = vmatpush1.bf16.msra.mxu0 %v1072
    %4112 = vmatprep.subr.bf16.mxu0 %v1069
    %4113 = vmatpush1.bf16.msra.mxu0 %v1068
    %4114 = vmatprep.subr.bf16.mxu0 %v1065
    %4115 = vmatpush1.bf16.msra.mxu0 %v1064
    %4116 = vmatprep.subr.bf16.mxu0 0
    %4117 = vmatpush2.bf16.msra.mxu0 0
    %4118 = vmatprep.subr.bf16.mxu0 0
    %4119 = vmatpush2.bf16.msra.mxu0 0
    %4120 = vmatprep.subr.bf16.mxu0 0
    %4121 = vmatpush2.bf16.msra.mxu0 0
    %4122 = vmatprep.subr.bf16.mxu0 0
    %4123 = vmatpush2.bf16.msra.mxu0 0
    %4124 = vmatprep.subr.bf16.mxu0 0
    %4125 = vmatpush2.bf16.msra.mxu0 0
    %4126 = vmatprep.subr.bf16.mxu0 0
    %4127 = vmatpush2.bf16.msra.mxu0 0
    %4128 = vmatprep.subr.bf16.mxu0 0
    %4129 = vmatpush2.bf16.msra.mxu0 0
    %4130 = vmatprep.subr.bf16.mxu0 0
    %4131 = vmatpush2.bf16.msra.mxu0 0
    %4132 = vmatprep.mubr.bf16.mxu0 0
    %4133 = vmatmul.mubr.bf16.gmra.mxu0 %v4099
    %v4134 = vpop.f32.mrf.mxu0
    %v4135 = vadd.f32 0.0, %v4134
    %v4136 = vpop.f32.mrf.mxu0
    %v4137 = vadd.f32 0.0, %v4136
    %v4138 = vpop.f32.mrf.mxu0
    %v4139 = vadd.f32 0.0, %v4138
    %v4140 = vpop.f32.mrf.mxu0
    %v4141 = vadd.f32 0.0, %v4140
    %4142 = vdwg.mxu0
    %4143 = vmatprep.subr.bf16.mxu0 %v1095
    %4144 = vmatpush1.bf16.msra.mxu0 %v1094
    %4145 = vmatprep.subr.bf16.mxu0 %v1091
    %4146 = vmatpush1.bf16.msra.mxu0 %v1090
    %4147 = vmatprep.subr.bf16.mxu0 %v1087
    %4148 = vmatpush1.bf16.msra.mxu0 %v1086
    %4149 = vmatprep.subr.bf16.mxu0 %v1083
    %4150 = vmatpush1.bf16.msra.mxu0 %v1082
    %4151 = vmatprep.subr.bf16.mxu0 %v1079
    %4152 = vmatpush1.bf16.msra.mxu0 %v1078
    %4153 = vmatprep.subr.bf16.mxu0 %v1075
    %4154 = vmatpush1.bf16.msra.mxu0 %v1074
    %4155 = vmatprep.subr.bf16.mxu0 %v1071
    %4156 = vmatpush1.bf16.msra.mxu0 %v1070
    %4157 = vmatprep.subr.bf16.mxu0 %v1067
    %4158 = vmatpush1.bf16.msra.mxu0 %v1066
    %4159 = vmatprep.subr.bf16.mxu0 0
    %4160 = vmatpush2.bf16.msra.mxu0 0
    %4161 = vmatprep.subr.bf16.mxu0 0
    %4162 = vmatpush2.bf16.msra.mxu0 0
    %4163 = vmatprep.subr.bf16.mxu0 0
    %4164 = vmatpush2.bf16.msra.mxu0 0
    %4165 = vmatprep.subr.bf16.mxu0 0
    %4166 = vmatpush2.bf16.msra.mxu0 0
    %4167 = vmatprep.subr.bf16.mxu0 0
    %4168 = vmatpush2.bf16.msra.mxu0 0
    %4169 = vmatprep.subr.bf16.mxu0 0
    %4170 = vmatpush2.bf16.msra.mxu0 0
    %4171 = vmatprep.subr.bf16.mxu0 0
    %4172 = vmatpush2.bf16.msra.mxu0 0
    %4173 = vmatprep.subr.bf16.mxu0 0
    %4174 = vmatpush2.bf16.msra.mxu0 0
    %4175 = vmatprep.mubr.bf16.mxu0 0
    %4176 = vmatmul.mubr.bf16.gmra.mxu0 %v4099
    %v4177 = vpop.f32.mrf.mxu0
    %v4178 = vadd.f32 0.0, %v4177
    %v4179 = vpop.f32.mrf.mxu0
    %v4180 = vadd.f32 0.0, %v4179
    %v4181 = vpop.f32.mrf.mxu0
    %v4182 = vadd.f32 0.0, %v4181
    %v4183 = vpop.f32.mrf.mxu0
    %v4184 = vadd.f32 0.0, %v4183
    %4185 = vdwg.mxu0
    %v4186 = vpack.c.bf16 %v4098, %v4097
    %4187 = vmatprep.subr.bf16.mxu0 %v1372
    %4188 = vmatpush1.bf16.msra.mxu0 %v1371
    %4189 = vmatprep.subr.bf16.mxu0 %v1368
    %4190 = vmatpush1.bf16.msra.mxu0 %v1367
    %4191 = vmatprep.subr.bf16.mxu0 %v1364
    %4192 = vmatpush1.bf16.msra.mxu0 %v1363
    %4193 = vmatprep.subr.bf16.mxu0 %v1360
    %4194 = vmatpush1.bf16.msra.mxu0 %v1359
    %4195 = vmatprep.subr.bf16.mxu0 %v1356
    %4196 = vmatpush1.bf16.msra.mxu0 %v1355
    %4197 = vmatprep.subr.bf16.mxu0 %v1352
    %4198 = vmatpush1.bf16.msra.mxu0 %v1351
    %4199 = vmatprep.subr.bf16.mxu0 %v1348
    %4200 = vmatpush1.bf16.msra.mxu0 %v1347
    %4201 = vmatprep.subr.bf16.mxu0 %v1344
    %4202 = vmatpush1.bf16.msra.mxu0 %v1343
    %4203 = vmatprep.subr.bf16.mxu0 0
    %4204 = vmatpush2.bf16.msra.mxu0 0
    %4205 = vmatprep.subr.bf16.mxu0 0
    %4206 = vmatpush2.bf16.msra.mxu0 0
    %4207 = vmatprep.subr.bf16.mxu0 0
    %4208 = vmatpush2.bf16.msra.mxu0 0
    %4209 = vmatprep.subr.bf16.mxu0 0
    %4210 = vmatpush2.bf16.msra.mxu0 0
    %4211 = vmatprep.subr.bf16.mxu0 0
    %4212 = vmatpush2.bf16.msra.mxu0 0
    %4213 = vmatprep.subr.bf16.mxu0 0
    %4214 = vmatpush2.bf16.msra.mxu0 0
    %4215 = vmatprep.subr.bf16.mxu0 0
    %4216 = vmatpush2.bf16.msra.mxu0 0
    %4217 = vmatprep.subr.bf16.mxu0 0
    %4218 = vmatpush2.bf16.msra.mxu0 0
    %4219 = vmatprep.mubr.bf16.mxu0 0
    %4220 = vmatmul.mubr.bf16.gmra.mxu0 %v4186
    %v4221 = vpop.f32.mrf.mxu0
    %v4222 = vadd.f32 %v4135, %v4221
    %v4223 = vpop.f32.mrf.mxu0
    %v4224 = vadd.f32 %v4137, %v4223
    %v4225 = vpop.f32.mrf.mxu0
    %v4226 = vadd.f32 %v4139, %v4225
    %v4227 = vpop.f32.mrf.mxu0
    %v4228 = vadd.f32 %v4141, %v4227
    %4229 = vdwg.mxu0
    %4230 = vmatprep.subr.bf16.mxu0 %v1374
    %4231 = vmatpush1.bf16.msra.mxu0 %v1373
    %4232 = vmatprep.subr.bf16.mxu0 %v1370
    %4233 = vmatpush1.bf16.msra.mxu0 %v1369
    %4234 = vmatprep.subr.bf16.mxu0 %v1366
    %4235 = vmatpush1.bf16.msra.mxu0 %v1365
    %4236 = vmatprep.subr.bf16.mxu0 %v1362
    %4237 = vmatpush1.bf16.msra.mxu0 %v1361
    %4238 = vmatprep.subr.bf16.mxu0 %v1358
    %4239 = vmatpush1.bf16.msra.mxu0 %v1357
    %4240 = vmatprep.subr.bf16.mxu0 %v1354
    %4241 = vmatpush1.bf16.msra.mxu0 %v1353
    %4242 = vmatprep.subr.bf16.mxu0 %v1350
    %4243 = vmatpush1.bf16.msra.mxu0 %v1349
    %4244 = vmatprep.subr.bf16.mxu0 %v1346
    %4245 = vmatpush1.bf16.msra.mxu0 %v1345
    %4246 = vmatprep.subr.bf16.mxu0 0
    %4247 = vmatpush2.bf16.msra.mxu0 0
    %4248 = vmatprep.subr.bf16.mxu0 0
    %4249 = vmatpush2.bf16.msra.mxu0 0
    %4250 = vmatprep.subr.bf16.mxu0 0
    %4251 = vmatpush2.bf16.msra.mxu0 0
    %4252 = vmatprep.subr.bf16.mxu0 0
    %4253 = vmatpush2.bf16.msra.mxu0 0
    %4254 = vmatprep.subr.bf16.mxu0 0
    %4255 = vmatpush2.bf16.msra.mxu0 0
    %4256 = vmatprep.subr.bf16.mxu0 0
    %4257 = vmatpush2.bf16.msra.mxu0 0
    %4258 = vmatprep.subr.bf16.mxu0 0
    %4259 = vmatpush2.bf16.msra.mxu0 0
    %4260 = vmatprep.subr.bf16.mxu0 0
    %4261 = vmatpush2.bf16.msra.mxu0 0
    %4262 = vmatprep.mubr.bf16.mxu0 0
    %4263 = vmatmul.mubr.bf16.gmra.mxu0 %v4186
    %v4264 = vpop.f32.mrf.mxu0
    %v4265 = vadd.f32 %v4178, %v4264
    %v4266 = vpop.f32.mrf.mxu0
    %v4267 = vadd.f32 %v4180, %v4266
    %v4268 = vpop.f32.mrf.mxu0
    %v4269 = vadd.f32 %v4182, %v4268
    %v4270 = vpop.f32.mrf.mxu0
    %v4271 = vadd.f32 %v4184, %v4270
    %4272 = vdwg.mxu0
    %v4273 = vadd.f32 %v4222, %v1498
    %v4274 = vadd.f32 %v4224, %v1502
    %v4275 = vadd.f32 %v4265, %v1506
    %v4276 = vadd.f32 %v4267, %v1510
    %v4277 = vadd.f32 %v4226, %v1498
    %v4278 = vadd.f32 %v4228, %v1502
    %v4279 = vadd.f32 %v4269, %v1506
    %v4280 = vadd.f32 %v4271, %v1510
    %v4281 = vxor.u32 %v4273, 2147483648
    %v4282 = vxor.u32 %v4274, 2147483648
    %v4283 = vxor.u32 %v4275, 2147483648
    %v4284 = vxor.u32 %v4277, 2147483648
    %v4285 = vxor.u32 %v4278, 2147483648
    %v4286 = vxor.u32 %v4279, 2147483648
    %v4287 = vmul.f32 %v4281, 1.442695
    %v4288 = vpow.pop %v4287
    %v4289 = vmul.f32 %v4282, 1.442695
    %v4290 = vpow.pop %v4289
    %v4291 = vmul.f32 %v4283, 1.442695
    %v4292 = vpow.pop %v4291
    %v4293 = vmul.f32 %v4284, 1.442695
    %v4294 = vpow.pop %v4293
    %v4295 = vmul.f32 %v4285, 1.442695
    %v4296 = vpow.pop %v4295
    %v4297 = vmul.f32 %v4286, 1.442695
    %v4298 = vpow.pop %v4297
    %v4299 = vadd.f32 %v4288, 1.0
    %v4300 = vadd.f32 %v4290, 1.0
    %v4301 = vadd.f32 %v4292, 1.0
    %v4302 = vadd.f32 %v4294, 1.0
    %v4303 = vadd.f32 %v4296, 1.0
    %v4304 = vadd.f32 %v4298, 1.0
    %v4305 = vrcp.pop %v4299
    %v4306 = vmul.f32 1.0, %v4305
    %v4307 = vrcp.pop %v4300
    %v4308 = vmul.f32 1.0, %v4307
    %v4309 = vrcp.pop %v4301
    %v4310 = vmul.f32 1.0, %v4309
    %v4311 = vrcp.pop %v4302
    %v4312 = vmul.f32 1.0, %v4311
    %v4313 = vrcp.pop %v4303
    %v4314 = vmul.f32 1.0, %v4313
    %v4315 = vrcp.pop %v4304
    %v4316 = vmul.f32 1.0, %v4315
    %v4317 = vtanh.pop %v4276
    %v4318 = vtanh.pop %v4280
    %v4319 = vmul.f32 %v4308, %v3929
    %v4320 = vmul.f32 %v4314, %v3930
    %v4321 = vmul.f32 %v4306, %v4317
    %v4322 = vmul.f32 %v4312, %v4318
    %v4323 = vadd.f32 %v4319, %v4321
    %v4324 = vadd.f32 %v4320, %v4322
    %v4325 = vtanh.pop %v4323
    %v4326 = vtanh.pop %v4324
    %v4327 = vmul.f32 %v4310, %v4325
    %v4328 = vmul.f32 %v4316, %v4326
    %vm4329 = vcmp.eq.s32.totalorder %v151, 7
    %vm4330 = vcmp.eq.s32.totalorder %v152, 7
    %v4331 = vsel %vm4329, 1, 0
    %v4332 = vsel %vm4330, 1, 0
    %4333 = vset.pattern.permute.xlu0 0
    %4334 = vperm.xlu0 %4333, %v4331
    %v4335 = vpop.permute.xlu0 %4334
    %4336 = vset.pattern.permute.xlu0 0
    %4337 = vperm.xlu0 %4336, %v4332
    %v4338 = vpop.permute.xlu0 %4337
    %vm4339 = vcmp.eq.s32.totalorder %v4335, 1
    %vm4340 = vcmp.eq.s32.totalorder %v4338, 1
    %v4341 = vsel %vm4339, %v4327, %v3947
    %v4342 = vsel %vm4340, %v4328, %v3948
    %v4343 = vld [vmem:[#allocation6] sm:$0xff]
    %v4344 = vld [vmem:[#allocation6 + $0x8] sm:$0xff]
    %v4345 = vld [vmem:[%s9] sm:$0xff]
    %v4346 = vld [vmem:[%s9 + $0x8] sm:$0xff]
    %v4347 = vld [vmem:[%s9 + $0x10] sm:$0xff]
    %v4348 = vld [vmem:[%s9 + $0x18] sm:$0xff]
    %v4349 = vld [vmem:[%s9 + $0x20] sm:$0xff]
    %v4350 = vld [vmem:[%s9 + $0x28] sm:$0xff]
    %v4351 = vld [vmem:[%s9 + $0x30] sm:$0xff]
    %v4352 = vld [vmem:[%s9 + $0x38] sm:$0xff]
    %v4353 = vld [vmem:[%s9 + $0x40] sm:$0xff]
    %v4354 = vld [vmem:[%s9 + $0x48] sm:$0xff]
    %v4355 = vld [vmem:[%s9 + $0x50] sm:$0xff]
    %v4356 = vld [vmem:[%s9 + $0x58] sm:$0xff]
    %v4357 = vld [vmem:[%s9 + $0x60] sm:$0xff]
    %v4358 = vld [vmem:[%s9 + $0x68] sm:$0xff]
    %v4359 = vld [vmem:[%s9 + $0x70] sm:$0xff]
    %v4360 = vld [vmem:[%s9 + $0x78] sm:$0xff]
    %v4361 = vld [vmem:[%s9 + $0x80] sm:$0xff]
    %v4362 = vld [vmem:[%s9 + $0x88] sm:$0xff]
    %v4363 = vld [vmem:[%s9 + $0x90] sm:$0xff]
    %v4364 = vld [vmem:[%s9 + $0x98] sm:$0xff]
    %4365 = vmatprep.subr.mxu0 0.0
    %4366 = vmatpush1.msra.mxu0 %v4364
    %4367 = vmatprep.subr.mxu0 0.0
    %4368 = vmatpush1.msra.mxu0 %v4363
    %4369 = vmatprep.subr.mxu0 0.0
    %4370 = vmatpush1.msra.mxu0 %v4362
    %4371 = vmatprep.subr.mxu0 0.0
    %4372 = vmatpush1.msra.mxu0 %v4361
    %4373 = vmatprep.subr.mxu0 0.0
    %4374 = vmatpush1.msra.mxu0 %v4360
    %4375 = vmatprep.subr.mxu0 0.0
    %4376 = vmatpush1.msra.mxu0 %v4359
    %4377 = vmatprep.subr.mxu0 0.0
    %4378 = vmatpush1.msra.mxu0 %v4358
    %4379 = vmatprep.subr.mxu0 0.0
    %4380 = vmatpush1.msra.mxu0 %v4357
    %4381 = vmatprep.subr.mxu0 0.0
    %4382 = vmatpush1.msra.mxu0 %v4356
    %4383 = vmatprep.subr.mxu0 0.0
    %4384 = vmatpush1.msra.mxu0 %v4355
    %4385 = vmatprep.subr.mxu0 0.0
    %4386 = vmatpush1.msra.mxu0 %v4354
    %4387 = vmatprep.subr.mxu0 0.0
    %4388 = vmatpush1.msra.mxu0 %v4353
    %4389 = vmatprep.subr.mxu0 0.0
    %4390 = vmatpush1.msra.mxu0 %v4352
    %4391 = vmatprep.subr.mxu0 0.0
    %4392 = vmatpush1.msra.mxu0 %v4351
    %4393 = vmatprep.subr.mxu0 0.0
    %4394 = vmatpush1.msra.mxu0 %v4350
    %4395 = vmatprep.subr.mxu0 0.0
    %4396 = vmatpush1.msra.mxu0 %v4349
    %4397 = vmatprep.subr.mxu0 0.0
    %4398 = vmatpush2.msra.mxu0 0.0
    %4399 = vmatprep.subr.mxu0 0.0
    %4400 = vmatpush2.msra.mxu0 0.0
    %4401 = vmatprep.subr.mxu0 0.0
    %4402 = vmatpush2.msra.mxu0 0.0
    %4403 = vmatprep.subr.mxu0 0.0
    %4404 = vmatpush2.msra.mxu0 0.0
    %4405 = vmatprep.subr.mxu0 0.0
    %4406 = vmatpush2.msra.mxu0 0.0
    %4407 = vmatprep.subr.mxu0 0.0
    %4408 = vmatpush2.msra.mxu0 0.0
    %4409 = vmatprep.subr.mxu0 0.0
    %4410 = vmatpush2.msra.mxu0 0.0
    %4411 = vmatprep.subr.mxu0 0.0
    %4412 = vmatpush2.msra.mxu0 0.0
    %4413 = vmatprep.subr.mxu0 0.0
    %4414 = vmatpush2.msra.mxu0 0.0
    %4415 = vmatprep.subr.mxu0 0.0
    %4416 = vmatpush2.msra.mxu0 0.0
    %4417 = vmatprep.subr.mxu0 0.0
    %4418 = vmatpush2.msra.mxu0 0.0
    %4419 = vmatprep.subr.mxu0 0.0
    %4420 = vmatpush2.msra.mxu0 0.0
    %4421 = vmatprep.subr.mxu0 0.0
    %4422 = vmatpush2.msra.mxu0 0.0
    %4423 = vmatprep.subr.mxu0 0.0
    %4424 = vmatpush2.msra.mxu0 0.0
    %4425 = vmatprep.subr.mxu0 0.0
    %4426 = vmatpush2.msra.mxu0 0.0
    %4427 = vmatprep.subr.mxu0 0.0
    %4428 = vmatpush2.msra.mxu0 0.0
    %4429 = vmatprep.mubr.f32.mxu0 0.0
    %4430 = vmatmul.mubr.f32.gmra.mxu0 %v4341
    %v4431 = vpop.f32.mrf.mxu0
    %v4432 = vadd.f32 0.0, %v4431
    %v4433 = vpop.f32.mrf.mxu0
    %4434 = vmatprep.mubr.f32.mxu0 0.0
    %4435 = vmatmul.mubr.f32.gmra.mxu0 %v4342
    %v4436 = vpop.f32.mrf.mxu0
    %v4437 = vadd.f32 0.0, %v4436
    %v4438 = vpop.f32.mrf.mxu0
    %4439 = vdwg.mxu0
    %v4441 = vsel %vm279, %v4343, 0
    %v4444 = vsel %vm279, %v4344, 0
    %4446 = vmatprep.subr.mxu0 0.0
    %4447 = vmatpush1.msra.mxu0 0.0
    %4448 = vmatprep.subr.mxu0 0.0
    %4449 = vmatpush1.msra.mxu0 0.0
    %4450 = vmatprep.subr.mxu0 0.0
    %4451 = vmatpush1.msra.mxu0 0.0
    %4452 = vmatprep.subr.mxu0 0.0
    %4453 = vmatpush1.msra.mxu0 0.0
    %4454 = vmatprep.subr.mxu0 0.0
    %4455 = vmatpush1.msra.mxu0 0.0
    %4456 = vmatprep.subr.mxu0 0.0
    %4457 = vmatpush1.msra.mxu0 0.0
    %4458 = vmatprep.subr.mxu0 0.0
    %4459 = vmatpush1.msra.mxu0 0.0
    %4460 = vmatprep.subr.mxu0 0.0
    %4461 = vmatpush1.msra.mxu0 0.0
    %4462 = vmatprep.subr.mxu0 0.0
    %4463 = vmatpush1.msra.mxu0 0.0
    %4464 = vmatprep.subr.mxu0 0.0
    %4465 = vmatpush1.msra.mxu0 0.0
    %4466 = vmatprep.subr.mxu0 0.0
    %4467 = vmatpush1.msra.mxu0 0.0
    %4468 = vmatprep.subr.mxu0 0.0
    %4469 = vmatpush1.msra.mxu0 0.0
    %4470 = vmatprep.subr.mxu0 0.0
    %4471 = vmatpush1.msra.mxu0 %v4348
    %4472 = vmatprep.subr.mxu0 0.0
    %4473 = vmatpush1.msra.mxu0 %v4347
    %4474 = vmatprep.subr.mxu0 0.0
    %4475 = vmatpush1.msra.mxu0 %v4346
    %4476 = vmatprep.subr.mxu0 0.0
    %4477 = vmatpush1.msra.mxu0 %v4345
    %4478 = vmatprep.subr.mxu0 0.0
    %4479 = vmatpush2.msra.mxu0 0.0
    %4480 = vmatprep.subr.mxu0 0.0
    %4481 = vmatpush2.msra.mxu0 0.0
    %4482 = vmatprep.subr.mxu0 0.0
    %4483 = vmatpush2.msra.mxu0 0.0
    %4484 = vmatprep.subr.mxu0 0.0
    %4485 = vmatpush2.msra.mxu0 0.0
    %4486 = vmatprep.subr.mxu0 0.0
    %4487 = vmatpush2.msra.mxu0 0.0
    %4488 = vmatprep.subr.mxu0 0.0
    %4489 = vmatpush2.msra.mxu0 0.0
    %4490 = vmatprep.subr.mxu0 0.0
    %4491 = vmatpush2.msra.mxu0 0.0
    %4492 = vmatprep.subr.mxu0 0.0
    %4493 = vmatpush2.msra.mxu0 0.0
    %4494 = vmatprep.subr.mxu0 0.0
    %4495 = vmatpush2.msra.mxu0 0.0
    %4496 = vmatprep.subr.mxu0 0.0
    %4497 = vmatpush2.msra.mxu0 0.0
    %4498 = vmatprep.subr.mxu0 0.0
    %4499 = vmatpush2.msra.mxu0 0.0
    %4500 = vmatprep.subr.mxu0 0.0
    %4501 = vmatpush2.msra.mxu0 0.0
    %4502 = vmatprep.subr.mxu0 0.0
    %4503 = vmatpush2.msra.mxu0 0.0
    %4504 = vmatprep.subr.mxu0 0.0
    %4505 = vmatpush2.msra.mxu0 0.0
    %4506 = vmatprep.subr.mxu0 0.0
    %4507 = vmatpush2.msra.mxu0 0.0
    %4508 = vmatprep.subr.mxu0 0.0
    %4509 = vmatpush2.msra.mxu0 0.0
    %4510 = vmatprep.mubr.f32.mxu0 0.0
    %4511 = vmatmul.mubr.f32.gmra.mxu0 %v4441
    %v4512 = vpop.f32.mrf.mxu0
    %v4513 = vadd.f32 %v4432, %v4512
    %v4514 = vpop.f32.mrf.mxu0
    %4515 = vmatprep.mubr.f32.mxu0 0.0
    %4516 = vmatmul.mubr.f32.gmra.mxu0 %v4444
    %v4517 = vpop.f32.mrf.mxu0
    %v4518 = vadd.f32 %v4437, %v4517
    %v4519 = vpop.f32.mrf.mxu0
    %4520 = vdwg.mxu0
    %v4521 = vld [vmem:[%s10] sm:$0x1]
    %v4523 = vlaneseq
    %v4524 = vshrl.u32 %v4523, 7
    %v4525 = vsub.s32 0, %v4524
    %v4526 = vrot.slane %v4521, %v4525
    %v4528 = vadd.f32 %v4513, %v4526
    %v4529 = vadd.f32 %v4518, %v4526
    %v4530 = vmax.f32 %v4528, 0.0
    %v4531 = vmax.f32 %v4529, 0.0
    %v4532 = vld [vmem:[%s11] sm:$0xff]
    %v4533 = vld [vmem:[%s11 + $0x8] sm:$0xff]
    %v4534 = vld [vmem:[%s11 + $0x10] sm:$0xff]
    %v4535 = vld [vmem:[%s11 + $0x18] sm:$0xff]
    %v4536 = vld [vmem:[%s11 + $0x20] sm:$0xff]
    %v4537 = vld [vmem:[%s11 + $0x28] sm:$0xff]
    %v4538 = vld [vmem:[%s11 + $0x30] sm:$0xff]
    %v4539 = vld [vmem:[%s11 + $0x38] sm:$0xff]
    %v4540 = vld [vmem:[%s11 + $0x40] sm:$0xff]
    %v4541 = vld [vmem:[%s11 + $0x48] sm:$0xff]
    %v4542 = vld [vmem:[%s11 + $0x50] sm:$0xff]
    %v4543 = vld [vmem:[%s11 + $0x58] sm:$0xff]
    %v4544 = vld [vmem:[%s11 + $0x60] sm:$0xff]
    %v4545 = vld [vmem:[%s11 + $0x68] sm:$0xff]
    %v4546 = vld [vmem:[%s11 + $0x70] sm:$0xff]
    %v4547 = vld [vmem:[%s11 + $0x78] sm:$0xff]
    %v4548 = vld [vmem:[%s12] sm:$0x1]
    %v4550 = vlaneseq
    %v4551 = vshrl.u32 %v4550, 7
    %v4552 = vsub.s32 0, %v4551
    %v4553 = vrot.slane %v4548, %v4552
    %4555 = vmatprep.subr.mxu0 0.0
    %4556 = vmatpush1.msra.mxu0 %v4547
    %4557 = vmatprep.subr.mxu0 0.0
    %4558 = vmatpush1.msra.mxu0 %v4546
    %4559 = vmatprep.subr.mxu0 0.0
    %4560 = vmatpush1.msra.mxu0 %v4545
    %4561 = vmatprep.subr.mxu0 0.0
    %4562 = vmatpush1.msra.mxu0 %v4544
    %4563 = vmatprep.subr.mxu0 0.0
    %4564 = vmatpush1.msra.mxu0 %v4543
    %4565 = vmatprep.subr.mxu0 0.0
    %4566 = vmatpush1.msra.mxu0 %v4542
    %4567 = vmatprep.subr.mxu0 0.0
    %4568 = vmatpush1.msra.mxu0 %v4541
    %4569 = vmatprep.subr.mxu0 0.0
    %4570 = vmatpush1.msra.mxu0 %v4540
    %4571 = vmatprep.subr.mxu0 0.0
    %4572 = vmatpush1.msra.mxu0 %v4539
    %4573 = vmatprep.subr.mxu0 0.0
    %4574 = vmatpush1.msra.mxu0 %v4538
    %4575 = vmatprep.subr.mxu0 0.0
    %4576 = vmatpush1.msra.mxu0 %v4537
    %4577 = vmatprep.subr.mxu0 0.0
    %4578 = vmatpush1.msra.mxu0 %v4536
    %4579 = vmatprep.subr.mxu0 0.0
    %4580 = vmatpush1.msra.mxu0 %v4535
    %4581 = vmatprep.subr.mxu0 0.0
    %4582 = vmatpush1.msra.mxu0 %v4534
    %4583 = vmatprep.subr.mxu0 0.0
    %4584 = vmatpush1.msra.mxu0 %v4533
    %4585 = vmatprep.subr.mxu0 0.0
    %4586 = vmatpush1.msra.mxu0 %v4532
    %4587 = vmatprep.subr.mxu0 0.0
    %4588 = vmatpush2.msra.mxu0 0.0
    %4589 = vmatprep.subr.mxu0 0.0
    %4590 = vmatpush2.msra.mxu0 0.0
    %4591 = vmatprep.subr.mxu0 0.0
    %4592 = vmatpush2.msra.mxu0 0.0
    %4593 = vmatprep.subr.mxu0 0.0
    %4594 = vmatpush2.msra.mxu0 0.0
    %4595 = vmatprep.subr.mxu0 0.0
    %4596 = vmatpush2.msra.mxu0 0.0
    %4597 = vmatprep.subr.mxu0 0.0
    %4598 = vmatpush2.msra.mxu0 0.0
    %4599 = vmatprep.subr.mxu0 0.0
    %4600 = vmatpush2.msra.mxu0 0.0
    %4601 = vmatprep.subr.mxu0 0.0
    %4602 = vmatpush2.msra.mxu0 0.0
    %4603 = vmatprep.subr.mxu0 0.0
    %4604 = vmatpush2.msra.mxu0 0.0
    %4605 = vmatprep.subr.mxu0 0.0
    %4606 = vmatpush2.msra.mxu0 0.0
    %4607 = vmatprep.subr.mxu0 0.0
    %4608 = vmatpush2.msra.mxu0 0.0
    %4609 = vmatprep.subr.mxu0 0.0
    %4610 = vmatpush2.msra.mxu0 0.0
    %4611 = vmatprep.subr.mxu0 0.0
    %4612 = vmatpush2.msra.mxu0 0.0
    %4613 = vmatprep.subr.mxu0 0.0
    %4614 = vmatpush2.msra.mxu0 0.0
    %4615 = vmatprep.subr.mxu0 0.0
    %4616 = vmatpush2.msra.mxu0 0.0
    %4617 = vmatprep.subr.mxu0 0.0
    %4618 = vmatpush2.msra.mxu0 0.0
    %4619 = vmatprep.mubr.f32.mxu0 0.0
    %4620 = vmatmul.mubr.f32.gmra.mxu0 %v4530
    %v4621 = vpop.f32.mrf.mxu0
    %v4622 = vadd.f32 %v4553, %v4621
    %v4623 = vpop.f32.mrf.mxu0
    %4624 = vmatprep.mubr.f32.mxu0 0.0
    %4625 = vmatmul.mubr.f32.gmra.mxu0 %v4531
    %v4626 = vpop.f32.mrf.mxu0
    %v4627 = vadd.f32 %v4553, %v4626
    %v4628 = vpop.f32.mrf.mxu0
    %4629 = vdwg.mxu0
    %vm4630 = vcmask 130048
    %4631 = vst.msk [vmem:[#allocation17] sm:$0xff] %vm4630, %v4622
    %4632 = vst.msk [vmem:[#allocation17 + $0x8] sm:$0xff] %vm4630, %v4627
    // Predicated region
    $region86: #{tpu_custom_call.1} parent=1 // pred_check
      _
    $region87: #{tpu_custom_call.1} parent=1 // pred_check_branch
      %4634 = sbr.rel (0) target = $region89
    $region88: #{tpu_custom_call.1} parent=1 // pred_region
      %s4636 = ssub.s32 256, 256
      %4637 = vsyncadd [#allocation5], %s4636
      %s4638 = sshll.u32 [#allocation17], 4
      %s4639 = int_to_ptr.vmem [resolvable:$true] %s4638
      %4644 = dma.vmem_to_hbm [thread:$0]  %s4639, 256, %s13, [#allocation5], 128, 128, 8
    $region89: #{tpu_custom_call.1} parent=1 // pred_fallthru
      _
    // Predicated region
    $region90: #{tpu_custom_call.1} parent=1 // pred_check
      _
    $region91: #{tpu_custom_call.1} parent=1 // pred_check_branch
      %4646 = sbr.rel (0) target = $region93
    $region92: #{tpu_custom_call.1} parent=1 // pred_region
      %4647 = dma.done [#allocation5], 256
    $region93: #{tpu_custom_call.1} parent=1 // pred_fallthru
      _
    %4648 = vsyncpa [#allocation4], 1
    %4649 = vsyncpa [#allocation7], 1
    %4650 = vsyncpa [#allocation10], 1
    %4651 = vsyncpa [#allocation13], 1
    %4652 = vsyncpa [#allocation16], 1
    %4653 = vsyncpa [#allocation5], 1

</llo_original>
